<compile_context>
chip_gen: v5e
topology: v5e:2x2
jax: 0.10.0
libtpu: 0.0.40
codegen_flags: <defaults>
</compile_context>

<pallas_src>
import jax
import jax.numpy as jnp
from jax import lax
from jax.experimental import pallas as pl
from jax.experimental.pallas import tpu as pltpu

_LANE = 128      # vreg lane width  (same on v5e / v6e / v7x)
_SUBLANE = 8     # vreg sublane count


def _round_up(n, m):
    return (n + m - 1) // m * m


# ----------------------------------------------------------------------------
# Fused Pallas kernel: all LSTM layers + final Linear
# ----------------------------------------------------------------------------
def _make_deep_lstm_kernel(num_layers, T, Bp, Hp):
    def kernel(*refs):
        x_ref = refs[0]                                     # (T*Bp, D0p)
        layer_refs = []
        idx = 1
        for _ in range(num_layers):
            layer_refs.append(tuple(refs[idx:idx + 3]))     # (wih_t, whh_t, bias)
            idx += 3
        fcw_ref, fcb_ref = refs[idx], refs[idx + 1]         # (Hp, Op), (1, Op)
        out_ref = refs[idx + 2]                             # (Bp, Op)
        proj_scr, seq_scr = refs[idx + 3], refs[idx + 4]

        h = None
        for layer_idx, (wih_ref, whh_ref, b_ref) in enumerate(layer_refs):
            is_last = layer_idx == num_layers - 1

            # Hoisted input projection for ALL timesteps: one big MXU matmul.
            inp = x_ref[...] if layer_idx == 0 else seq_scr[...]
            proj_scr[...] = (
                jnp.dot(inp, wih_ref[...], preferred_element_type=jnp.float32)
                + b_ref[...]
            )                                               # (T*Bp, 4*Hp)

            # h / c are loop-carried vreg values (1 vreg each at Bp=8, Hp=128).
            h = jnp.zeros((Bp, Hp), jnp.float32)
            c = jnp.zeros((Bp, Hp), jnp.float32)

            # Static (fully unrolled) time loop: only the small recurrent matmul and
            # elementwise gate math stay on the sequential dependence chain.
            for t in range(T):
                r0, r1 = t * Bp, (t + 1) * Bp
                gates = proj_scr[r0:r1, :]                  # (Bp, 4*Hp), lane-aligned
                if t > 0:
                    # h0 == 0, so the recurrent matmul is skipped at t == 0 (exact).
                    gates = gates + jnp.dot(
                        h, whh_ref[...], preferred_element_type=jnp.float32
                    )
                i_g = jax.nn.sigmoid(gates[:, 0 * Hp:1 * Hp])
                f_g = jax.nn.sigmoid(gates[:, 1 * Hp:2 * Hp])
                g_g = jnp.tanh(gates[:, 2 * Hp:3 * Hp])
                o_g = jax.nn.sigmoid(gates[:, 3 * Hp:4 * Hp])
                c = (i_g * g_g) if t == 0 else (f_g * c + i_g * g_g)
                h = o_g * jnp.tanh(c)
                if not is_last:
                    # Intermediate layers feed the next layer's hoisted projection.
                    seq_scr[r0:r1, :] = h
                # Last layer: skip the dead full-sequence writes entirely.

        # Fused final Linear on the last timestep's hidden state (lane-dense output).
        out_ref[...] = (
            jnp.dot(h, fcw_ref[...], preferred_element_type=jnp.float32)
            + fcb_ref[...]
        )

    return kernel


# ----------------------------------------------------------------------------
# Wrapper around pallas_call
# ----------------------------------------------------------------------------
def deep_lstm_pallas(x, prep):
    """x: (B, T, input_size) batch-first (like the PyTorch module). Returns (B, 1)."""
    B, T, D = x.shape
    Bp = _round_up(max(B, _SUBLANE), _SUBLANE)
    layers = prep["layers"]
    num_layers = len(layers)
    D0p = layers[0]["wih_t"].shape[0]
    Hp = layers[0]["whh_t"].shape[0]
    Op = prep["fc_w"].shape[1]

    # batch-first -> time-major, pad batch / feature dims, flatten to (T*Bp, D0p).
    xt = jnp.transpose(x.astype(jnp.float32), (1, 0, 2))       # (T, B, D)
    xt = jnp.pad(xt, ((0, 0), (0, Bp - B), (0, D0p - D)))      # (T, Bp, D0p)
    x_flat = xt.reshape(T * Bp, D0p)

    inputs = [x_flat]
    for lp in layers:
        inputs += [lp["wih_t"], lp["whh_t"], lp["bias"]]
    inputs += [prep["fc_w"], prep["fc_b"]]

    out_padded = pl.pallas_call(
        _make_deep_lstm_kernel(num_layers, T, Bp, Hp),
        out_shape=jax.ShapeDtypeStruct((Bp, Op), jnp.float32),
        in_specs=[pl.BlockSpec(memory_space=pltpu.MemorySpace.VMEM)] * len(inputs),
        out_specs=pl.BlockSpec(memory_space=pltpu.MemorySpace.VMEM),
        scratch_shapes=[
            pltpu.VMEM((T * Bp, 4 * Hp), jnp.float32),   # hoisted input projections
            pltpu.VMEM((T * Bp, Hp), jnp.float32),       # inter-layer hidden sequence
        ],
    )(*inputs)
    return out_padded[:B, :1]


deep_lstm_forward = jax.jit(deep_lstm_pallas)


# ----------------------------------------------------------------------------
# Parameter construction (PyTorch layout) + padded/transposed kernel params
# ----------------------------------------------------------------------------
def init_deep_lstm_params(key, input_size, hidden_sizes):
    """PyTorch-layout params: W_ih (4H, D), W_hh (4H, H), b_* (4H,), fc (1, H)/(1,)."""
    params = {"lstm": [], "fc": None}
    curr = input_size
    for h in hidden_sizes:
        bound = 1.0 / (h ** 0.5)
        key, k1, k2, k3, k4 = jax.random.split(key, 5)
        params["lstm"].append(dict(
            w_ih=jax.random.uniform(k1, (4 * h, curr), jnp.float32, -bound, bound),
            w_hh=jax.random.uniform(k2, (4 * h, h), jnp.float32, -bound, bound),
            b_ih=jax.random.uniform(k3, (4 * h,), jnp.float32, -bound, bound),
            b_hh=jax.random.uniform(k4, (4 * h,), jnp.float32, -bound, bound),
        ))
        curr = h
    bound = 1.0 / (curr ** 0.5)
    key, k1, k2 = jax.random.split(key, 3)
    params["fc"] = dict(
        w=jax.random.uniform(k1, (1, curr), jnp.float32, -bound, bound),
        b=jax.random.uniform(k2, (1,), jnp.float32, -bound, bound),
    )
    return params


def _pad_gate_cols(w, H, Hp):
    """(rows, 4H) -> (rows, 4Hp): pad each of the 4 gate blocks (i,f,g,o) to Hp lanes."""
    rows = w.shape[0]
    w4 = jnp.pad(w.reshape(rows, 4, H), ((0, 0), (0, 0), (0, Hp - H)))
    return w4.reshape(rows, 4 * Hp)


def prepare_params(raw):
    """Transpose + zero-pad PyTorch-layout params into lane/sublane-aligned kernel params."""
    hidden = [lp["w_hh"].shape[1] for lp in raw["lstm"]]
    Hp = _round_up(max(max(hidden), _LANE), _LANE)
    in_size = raw["lstm"][0]["w_ih"].shape[1]
    D0p = _round_up(max(in_size, _LANE), _LANE)

    layers = []
    for li, lp in enumerate(raw["lstm"]):
        H = lp["w_hh"].shape[1]
        Din = lp["w_ih"].shape[1]
        Dp = D0p if li == 0 else Hp
        wih_t = _pad_gate_cols(jnp.transpose(lp["w_ih"]), H, Hp)         # (Din, 4Hp)
        wih_t = jnp.pad(wih_t, ((0, Dp - Din), (0, 0)))                   # (Dp,  4Hp)
        whh_t = _pad_gate_cols(jnp.transpose(lp["w_hh"]), H, Hp)         # (H,   4Hp)
        whh_t = jnp.pad(whh_t, ((0, Hp - H), (0, 0)))                     # (Hp,  4Hp)
        bias = _pad_gate_cols((lp["b_ih"] + lp["b_hh"]).reshape(1, 4 * H), H, Hp)
        layers.append(dict(wih_t=wih_t, whh_t=whh_t, bias=bias))

    H_last = hidden[-1]
    Op = _LANE  # pad the 1-wide FC output to a full lane tile (lane-dense store)
    fc_w = jnp.pad(jnp.transpose(raw["fc"]["w"]), ((0, Hp - H_last), (0, Op - 1)))  # (Hp, Op)
    fc_b = jnp.pad(raw["fc"]["b"].reshape(1, 1), ((0, 0), (0, Op - 1)))             # (1,  Op)
    return dict(layers=layers, fc_w=fc_w, fc_b=fc_b)


# ----------------------------------------------------------------------------
# Pure-JAX reference (matches PyTorch nn.LSTM eval-mode semantics)
# ----------------------------------------------------------------------------
def deep_lstm_reference(x, raw):
    prec = lax.Precision.HIGHEST
    cur = x.astype(jnp.float32)
    for lp in raw["lstm"]:
        w_ih, w_hh = lp["w_ih"], lp["w_hh"]
        b = lp["b_ih"] + lp["b_hh"]
        H = w_hh.shape[1]
        B, T, _ = cur.shape
        h = jnp.zeros((B, H), jnp.float32)
        c = jnp.zeros((B, H), jnp.float32)
        outs = []
        for t in range(T):
            gates = (jnp.dot(cur[:, t, :], w_ih.T, precision=prec)
                     + jnp.dot(h, w_hh.T, precision=prec) + b)
            i = jax.nn.sigmoid(gates[:, 0:H])
            f = jax.nn.sigmoid(gates[:, H:2 * H])
            g = jnp.tanh(gates[:, 2 * H:3 * H])
            o = jax.nn.sigmoid(gates[:, 3 * H:4 * H])
            c = f * c + i * g
            h = o * jnp.tanh(c)
            outs.append(h)
        cur = jnp.stack(outs, axis=1)
    last = cur[:, -1, :]
    return jnp.dot(last, raw["fc"]["w"].T, precision=prec) + raw["fc"]["b"]


if __name__ == "__main__":
    INPUT_SIZE = 21
    HIDDEN_SIZES = [64, 32]
    BATCH = 2
    SEQ = 8

    key = jax.random.PRNGKey(0)
    pkey, xkey = jax.random.split(key)
    raw_params = init_deep_lstm_params(pkey, INPUT_SIZE, HIDDEN_SIZES)
    prep = prepare_params(raw_params)
    x = jax.random.normal(xkey, (BATCH, SEQ, INPUT_SIZE), jnp.float32)

    out = jax.block_until_ready(deep_lstm_forward(x, prep))
    assert out.shape == (BATCH, 1), out.shape

    ref = jax.block_until_ready(deep_lstm_reference(x, raw_params))
    assert jnp.allclose(out, ref, rtol=5e-3, atol=5e-3)

    print("KERNEL_OK")
</pallas_src>

<mosaic_0001>
module attributes {stable_mosaic.version = 11 : i64} {
  func.func @kernel(%arg0: memref<64x128xf32, #tpu.memory_space<vmem>>, %arg1: memref<128x512xf32, #tpu.memory_space<vmem>>, %arg2: memref<128x512xf32, #tpu.memory_space<vmem>>, %arg3: memref<1x512xf32, #tpu.memory_space<vmem>>, %arg4: memref<128x512xf32, #tpu.memory_space<vmem>>, %arg5: memref<128x512xf32, #tpu.memory_space<vmem>>, %arg6: memref<1x512xf32, #tpu.memory_space<vmem>>, %arg7: memref<128x128xf32, #tpu.memory_space<vmem>>, %arg8: memref<1x128xf32, #tpu.memory_space<vmem>>, %arg9: memref<8x128xf32, #tpu.memory_space<vmem>>, %arg10: memref<64x512xf32, #tpu.memory_space<vmem>>, %arg11: memref<64x128xf32, #tpu.memory_space<vmem>>) attributes {dimension_semantics = [], scalar_prefetch = 0 : i64, scratch_operands = 2 : i64, tpu.core_type = #tpu.core_type<tc>} {
    %c0 = arith.constant 0 : index
    %c0_0 = arith.constant 0 : index
    %0 = vector.load %arg0[%c0, %c0_0] : memref<64x128xf32, #tpu.memory_space<vmem>>, vector<64x128xf32>
    %c0_1 = arith.constant 0 : index
    %c0_2 = arith.constant 0 : index
    %1 = vector.load %arg1[%c0_1, %c0_2] : memref<128x512xf32, #tpu.memory_space<vmem>>, vector<128x512xf32>
    %cst = arith.constant dense<0.000000e+00> : vector<64x512xf32>
    %2 = tpu.matmul %0, %1, %cst {dimension_numbers = #tpu.dot_dimension_numbers<[1], [0], [0], [1], [0, 0, 1, 1], [], []>} : vector<64x128xf32>, vector<128x512xf32>, vector<64x512xf32> -> vector<64x512xf32>
    %c0_3 = arith.constant 0 : index
    %c0_4 = arith.constant 0 : index
    %3 = vector.load %arg3[%c0_3, %c0_4] : memref<1x512xf32, #tpu.memory_space<vmem>>, vector<1x512xf32>
    %4 = vector.broadcast %3 : vector<1x512xf32> to vector<64x512xf32>
    %5 = arith.addf %2, %4 : vector<64x512xf32>
    %c0_5 = arith.constant 0 : index
    %c0_6 = arith.constant 0 : index
    %6 = vector.load %arg10[%c0_5, %c0_6] : memref<64x512xf32, #tpu.memory_space<vmem>>, vector<64x512xf32>
    tpu.vector_store %arg10[%c0_5, %c0_6], %5 {strides = array<i32>} : memref<64x512xf32, #tpu.memory_space<vmem>>, vector<64x512xf32>,
    %c0_7 = arith.constant 0 : index
    %c0_8 = arith.constant 0 : index
    %7 = vector.load %arg10[%c0_7, %c0_8] : memref<64x512xf32, #tpu.memory_space<vmem>>, vector<8x512xf32>
    %8 = vector.extract_strided_slice %7 {offsets = [0, 0], sizes = [8, 128], strides = [1, 1]} : vector<8x512xf32> to vector<8x128xf32>
    %9 = arith.negf %8 : vector<8x128xf32>
    %10 = math.exp %9 : vector<8x128xf32>
    %cst_9 = arith.constant 1.000000e+00 : f32
    %11 = vector.broadcast %cst_9 : f32 to vector<8x128xf32>
    %12 = arith.addf %11, %10 : vector<8x128xf32>
    %13 = arith.divf %11, %12 : vector<8x128xf32>
    %14 = vector.extract_strided_slice %7 {offsets = [0, 256], sizes = [8, 128], strides = [1, 1]} : vector<8x512xf32> to vector<8x128xf32>
    %15 = math.tanh %14 : vector<8x128xf32>
    %16 = vector.extract_strided_slice %7 {offsets = [0, 384], sizes = [8, 128], strides = [1, 1]} : vector<8x512xf32> to vector<8x128xf32>
    %17 = arith.negf %16 : vector<8x128xf32>
    %18 = math.exp %17 : vector<8x128xf32>
    %cst_10 = arith.constant 1.000000e+00 : f32
    %19 = vector.broadcast %cst_10 : f32 to vector<8x128xf32>
    %20 = arith.addf %19, %18 : vector<8x128xf32>
    %21 = arith.divf %19, %20 : vector<8x128xf32>
    %22 = arith.mulf %13, %15 : vector<8x128xf32>
    %23 = math.tanh %22 : vector<8x128xf32>
    %24 = arith.mulf %21, %23 : vector<8x128xf32>
    %c0_11 = arith.constant 0 : index
    %c0_12 = arith.constant 0 : index
    %25 = vector.load %arg11[%c0_11, %c0_12] : memref<64x128xf32, #tpu.memory_space<vmem>>, vector<8x128xf32>
    tpu.vector_store %arg11[%c0_11, %c0_12], %24 {strides = array<i32>} : memref<64x128xf32, #tpu.memory_space<vmem>>, vector<8x128xf32>,
    %c8 = arith.constant 8 : index
    %c0_13 = arith.constant 0 : index
    %26 = vector.load %arg10[%c8, %c0_13] : memref<64x512xf32, #tpu.memory_space<vmem>>, vector<8x512xf32>
    %c0_14 = arith.constant 0 : index
    %c0_15 = arith.constant 0 : index
    %27 = vector.load %arg2[%c0_14, %c0_15] : memref<128x512xf32, #tpu.memory_space<vmem>>, vector<128x512xf32>
    %cst_16 = arith.constant dense<0.000000e+00> : vector<8x512xf32>
    %28 = tpu.matmul %24, %27, %cst_16 {dimension_numbers = #tpu.dot_dimension_numbers<[1], [0], [0], [1], [0, 0, 1, 1], [], []>} : vector<8x128xf32>, vector<128x512xf32>, vector<8x512xf32> -> vector<8x512xf32>
    %29 = arith.addf %26, %28 : vector<8x512xf32>
    %30 = vector.extract_strided_slice %29 {offsets = [0, 0], sizes = [8, 128], strides = [1, 1]} : vector<8x512xf32> to vector<8x128xf32>
    %31 = arith.negf %30 : vector<8x128xf32>
    %32 = math.exp %31 : vector<8x128xf32>
    %cst_17 = arith.constant 1.000000e+00 : f32
    %33 = vector.broadcast %cst_17 : f32 to vector<8x128xf32>
    %34 = arith.addf %33, %32 : vector<8x128xf32>
    %35 = arith.divf %33, %34 : vector<8x128xf32>
    %36 = vector.extract_strided_slice %29 {offsets = [0, 128], sizes = [8, 128], strides = [1, 1]} : vector<8x512xf32> to vector<8x128xf32>
    %37 = arith.negf %36 : vector<8x128xf32>
    %38 = math.exp %37 : vector<8x128xf32>
    %cst_18 = arith.constant 1.000000e+00 : f32
    %39 = vector.broadcast %cst_18 : f32 to vector<8x128xf32>
    %40 = arith.addf %39, %38 : vector<8x128xf32>
    %41 = arith.divf %39, %40 : vector<8x128xf32>
    %42 = vector.extract_strided_slice %29 {offsets = [0, 256], sizes = [8, 128], strides = [1, 1]} : vector<8x512xf32> to vector<8x128xf32>
    %43 = math.tanh %42 : vector<8x128xf32>
    %44 = vector.extract_strided_slice %29 {offsets = [0, 384], sizes = [8, 128], strides = [1, 1]} : vector<8x512xf32> to vector<8x128xf32>
    %45 = arith.negf %44 : vector<8x128xf32>
    %46 = math.exp %45 : vector<8x128xf32>
    %cst_19 = arith.constant 1.000000e+00 : f32
    %47 = vector.broadcast %cst_19 : f32 to vector<8x128xf32>
    %48 = arith.addf %47, %46 : vector<8x128xf32>
    %49 = arith.divf %47, %48 : vector<8x128xf32>
    %50 = arith.mulf %41, %22 : vector<8x128xf32>
    %51 = arith.mulf %35, %43 : vector<8x128xf32>
    %52 = arith.addf %50, %51 : vector<8x128xf32>
    %53 = math.tanh %52 : vector<8x128xf32>
    %54 = arith.mulf %49, %53 : vector<8x128xf32>
    %c8_20 = arith.constant 8 : index
    %c0_21 = arith.constant 0 : index
    %55 = vector.load %arg11[%c8_20, %c0_21] : memref<64x128xf32, #tpu.memory_space<vmem>>, vector<8x128xf32>
    tpu.vector_store %arg11[%c8_20, %c0_21], %54 {strides = array<i32>} : memref<64x128xf32, #tpu.memory_space<vmem>>, vector<8x128xf32>,
    %c16 = arith.constant 16 : index
    %c0_22 = arith.constant 0 : index
    %56 = vector.load %arg10[%c16, %c0_22] : memref<64x512xf32, #tpu.memory_space<vmem>>, vector<8x512xf32>
    %c0_23 = arith.constant 0 : index
    %c0_24 = arith.constant 0 : index
    %57 = vector.load %arg2[%c0_23, %c0_24] : memref<128x512xf32, #tpu.memory_space<vmem>>, vector<128x512xf32>
    %cst_25 = arith.constant dense<0.000000e+00> : vector<8x512xf32>
    %58 = tpu.matmul %54, %57, %cst_25 {dimension_numbers = #tpu.dot_dimension_numbers<[1], [0], [0], [1], [0, 0, 1, 1], [], []>} : vector<8x128xf32>, vector<128x512xf32>, vector<8x512xf32> -> vector<8x512xf32>
    %59 = arith.addf %56, %58 : vector<8x512xf32>
    %60 = vector.extract_strided_slice %59 {offsets = [0, 0], sizes = [8, 128], strides = [1, 1]} : vector<8x512xf32> to vector<8x128xf32>
    %61 = arith.negf %60 : vector<8x128xf32>
    %62 = math.exp %61 : vector<8x128xf32>
    %cst_26 = arith.constant 1.000000e+00 : f32
    %63 = vector.broadcast %cst_26 : f32 to vector<8x128xf32>
    %64 = arith.addf %63, %62 : vector<8x128xf32>
    %65 = arith.divf %63, %64 : vector<8x128xf32>
    %66 = vector.extract_strided_slice %59 {offsets = [0, 128], sizes = [8, 128], strides = [1, 1]} : vector<8x512xf32> to vector<8x128xf32>
    %67 = arith.negf %66 : vector<8x128xf32>
    %68 = math.exp %67 : vector<8x128xf32>
    %cst_27 = arith.constant 1.000000e+00 : f32
    %69 = vector.broadcast %cst_27 : f32 to vector<8x128xf32>
    %70 = arith.addf %69, %68 : vector<8x128xf32>
    %71 = arith.divf %69, %70 : vector<8x128xf32>
    %72 = vector.extract_strided_slice %59 {offsets = [0, 256], sizes = [8, 128], strides = [1, 1]} : vector<8x512xf32> to vector<8x128xf32>
    %73 = math.tanh %72 : vector<8x128xf32>
    %74 = vector.extract_strided_slice %59 {offsets = [0, 384], sizes = [8, 128], strides = [1, 1]} : vector<8x512xf32> to vector<8x128xf32>
    %75 = arith.negf %74 : vector<8x128xf32>
    %76 = math.exp %75 : vector<8x128xf32>
    %cst_28 = arith.constant 1.000000e+00 : f32
    %77 = vector.broadcast %cst_28 : f32 to vector<8x128xf32>
    %78 = arith.addf %77, %76 : vector<8x128xf32>
    %79 = arith.divf %77, %78 : vector<8x128xf32>
    %80 = arith.mulf %71, %52 : vector<8x128xf32>
    %81 = arith.mulf %65, %73 : vector<8x128xf32>
    %82 = arith.addf %80, %81 : vector<8x128xf32>
    %83 = math.tanh %82 : vector<8x128xf32>
    %84 = arith.mulf %79, %83 : vector<8x128xf32>
    %c16_29 = arith.constant 16 : index
    %c0_30 = arith.constant 0 : index
    %85 = vector.load %arg11[%c16_29, %c0_30] : memref<64x128xf32, #tpu.memory_space<vmem>>, vector<8x128xf32>
    tpu.vector_store %arg11[%c16_29, %c0_30], %84 {strides = array<i32>} : memref<64x128xf32, #tpu.memory_space<vmem>>, vector<8x128xf32>,
    %c24 = arith.constant 24 : index
    %c0_31 = arith.constant 0 : index
    %86 = vector.load %arg10[%c24, %c0_31] : memref<64x512xf32, #tpu.memory_space<vmem>>, vector<8x512xf32>
    %c0_32 = arith.constant 0 : index
    %c0_33 = arith.constant 0 : index
    %87 = vector.load %arg2[%c0_32, %c0_33] : memref<128x512xf32, #tpu.memory_space<vmem>>, vector<128x512xf32>
    %cst_34 = arith.constant dense<0.000000e+00> : vector<8x512xf32>
    %88 = tpu.matmul %84, %87, %cst_34 {dimension_numbers = #tpu.dot_dimension_numbers<[1], [0], [0], [1], [0, 0, 1, 1], [], []>} : vector<8x128xf32>, vector<128x512xf32>, vector<8x512xf32> -> vector<8x512xf32>
    %89 = arith.addf %86, %88 : vector<8x512xf32>
    %90 = vector.extract_strided_slice %89 {offsets = [0, 0], sizes = [8, 128], strides = [1, 1]} : vector<8x512xf32> to vector<8x128xf32>
    %91 = arith.negf %90 : vector<8x128xf32>
    %92 = math.exp %91 : vector<8x128xf32>
    %cst_35 = arith.constant 1.000000e+00 : f32
    %93 = vector.broadcast %cst_35 : f32 to vector<8x128xf32>
    %94 = arith.addf %93, %92 : vector<8x128xf32>
    %95 = arith.divf %93, %94 : vector<8x128xf32>
    %96 = vector.extract_strided_slice %89 {offsets = [0, 128], sizes = [8, 128], strides = [1, 1]} : vector<8x512xf32> to vector<8x128xf32>
    %97 = arith.negf %96 : vector<8x128xf32>
    %98 = math.exp %97 : vector<8x128xf32>
    %cst_36 = arith.constant 1.000000e+00 : f32
    %99 = vector.broadcast %cst_36 : f32 to vector<8x128xf32>
    %100 = arith.addf %99, %98 : vector<8x128xf32>
    %101 = arith.divf %99, %100 : vector<8x128xf32>
    %102 = vector.extract_strided_slice %89 {offsets = [0, 256], sizes = [8, 128], strides = [1, 1]} : vector<8x512xf32> to vector<8x128xf32>
    %103 = math.tanh %102 : vector<8x128xf32>
    %104 = vector.extract_strided_slice %89 {offsets = [0, 384], sizes = [8, 128], strides = [1, 1]} : vector<8x512xf32> to vector<8x128xf32>
    %105 = arith.negf %104 : vector<8x128xf32>
    %106 = math.exp %105 : vector<8x128xf32>
    %cst_37 = arith.constant 1.000000e+00 : f32
    %107 = vector.broadcast %cst_37 : f32 to vector<8x128xf32>
    %108 = arith.addf %107, %106 : vector<8x128xf32>
    %109 = arith.divf %107, %108 : vector<8x128xf32>
    %110 = arith.mulf %101, %82 : vector<8x128xf32>
    %111 = arith.mulf %95, %103 : vector<8x128xf32>
    %112 = arith.addf %110, %111 : vector<8x128xf32>
    %113 = math.tanh %112 : vector<8x128xf32>
    %114 = arith.mulf %109, %113 : vector<8x128xf32>
    %c24_38 = arith.constant 24 : index
    %c0_39 = arith.constant 0 : index
    %115 = vector.load %arg11[%c24_38, %c0_39] : memref<64x128xf32, #tpu.memory_space<vmem>>, vector<8x128xf32>
    tpu.vector_store %arg11[%c24_38, %c0_39], %114 {strides = array<i32>} : memref<64x128xf32, #tpu.memory_space<vmem>>, vector<8x128xf32>,
    %c32 = arith.constant 32 : index
    %c0_40 = arith.constant 0 : index
    %116 = vector.load %arg10[%c32, %c0_40] : memref<64x512xf32, #tpu.memory_space<vmem>>, vector<8x512xf32>
    %c0_41 = arith.constant 0 : index
    %c0_42 = arith.constant 0 : index
    %117 = vector.load %arg2[%c0_41, %c0_42] : memref<128x512xf32, #tpu.memory_space<vmem>>, vector<128x512xf32>
    %cst_43 = arith.constant dense<0.000000e+00> : vector<8x512xf32>
    %118 = tpu.matmul %114, %117, %cst_43 {dimension_numbers = #tpu.dot_dimension_numbers<[1], [0], [0], [1], [0, 0, 1, 1], [], []>} : vector<8x128xf32>, vector<128x512xf32>, vector<8x512xf32> -> vector<8x512xf32>
    %119 = arith.addf %116, %118 : vector<8x512xf32>
    %120 = vector.extract_strided_slice %119 {offsets = [0, 0], sizes = [8, 128], strides = [1, 1]} : vector<8x512xf32> to vector<8x128xf32>
    %121 = arith.negf %120 : vector<8x128xf32>
    %122 = math.exp %121 : vector<8x128xf32>
    %cst_44 = arith.constant 1.000000e+00 : f32
    %123 = vector.broadcast %cst_44 : f32 to vector<8x128xf32>
    %124 = arith.addf %123, %122 : vector<8x128xf32>
    %125 = arith.divf %123, %124 : vector<8x128xf32>
    %126 = vector.extract_strided_slice %119 {offsets = [0, 128], sizes = [8, 128], strides = [1, 1]} : vector<8x512xf32> to vector<8x128xf32>
    %127 = arith.negf %126 : vector<8x128xf32>
    %128 = math.exp %127 : vector<8x128xf32>
    %cst_45 = arith.constant 1.000000e+00 : f32
    %129 = vector.broadcast %cst_45 : f32 to vector<8x128xf32>
    %130 = arith.addf %129, %128 : vector<8x128xf32>
    %131 = arith.divf %129, %130 : vector<8x128xf32>
    %132 = vector.extract_strided_slice %119 {offsets = [0, 256], sizes = [8, 128], strides = [1, 1]} : vector<8x512xf32> to vector<8x128xf32>
    %133 = math.tanh %132 : vector<8x128xf32>
    %134 = vector.extract_strided_slice %119 {offsets = [0, 384], sizes = [8, 128], strides = [1, 1]} : vector<8x512xf32> to vector<8x128xf32>
    %135 = arith.negf %134 : vector<8x128xf32>
    %136 = math.exp %135 : vector<8x128xf32>
    %cst_46 = arith.constant 1.000000e+00 : f32
    %137 = vector.broadcast %cst_46 : f32 to vector<8x128xf32>
    %138 = arith.addf %137, %136 : vector<8x128xf32>
    %139 = arith.divf %137, %138 : vector<8x128xf32>
    %140 = arith.mulf %131, %112 : vector<8x128xf32>
    %141 = arith.mulf %125, %133 : vector<8x128xf32>
    %142 = arith.addf %140, %141 : vector<8x128xf32>
    %143 = math.tanh %142 : vector<8x128xf32>
    %144 = arith.mulf %139, %143 : vector<8x128xf32>
    %c32_47 = arith.constant 32 : index
    %c0_48 = arith.constant 0 : index
    %145 = vector.load %arg11[%c32_47, %c0_48] : memref<64x128xf32, #tpu.memory_space<vmem>>, vector<8x128xf32>
    tpu.vector_store %arg11[%c32_47, %c0_48], %144 {strides = array<i32>} : memref<64x128xf32, #tpu.memory_space<vmem>>, vector<8x128xf32>,
    %c40 = arith.constant 40 : index
    %c0_49 = arith.constant 0 : index
    %146 = vector.load %arg10[%c40, %c0_49] : memref<64x512xf32, #tpu.memory_space<vmem>>, vector<8x512xf32>
    %c0_50 = arith.constant 0 : index
    %c0_51 = arith.constant 0 : index
    %147 = vector.load %arg2[%c0_50, %c0_51] : memref<128x512xf32, #tpu.memory_space<vmem>>, vector<128x512xf32>
    %cst_52 = arith.constant dense<0.000000e+00> : vector<8x512xf32>
    %148 = tpu.matmul %144, %147, %cst_52 {dimension_numbers = #tpu.dot_dimension_numbers<[1], [0], [0], [1], [0, 0, 1, 1], [], []>} : vector<8x128xf32>, vector<128x512xf32>, vector<8x512xf32> -> vector<8x512xf32>
    %149 = arith.addf %146, %148 : vector<8x512xf32>
    %150 = vector.extract_strided_slice %149 {offsets = [0, 0], sizes = [8, 128], strides = [1, 1]} : vector<8x512xf32> to vector<8x128xf32>
    %151 = arith.negf %150 : vector<8x128xf32>
    %152 = math.exp %151 : vector<8x128xf32>
    %cst_53 = arith.constant 1.000000e+00 : f32
    %153 = vector.broadcast %cst_53 : f32 to vector<8x128xf32>
    %154 = arith.addf %153, %152 : vector<8x128xf32>
    %155 = arith.divf %153, %154 : vector<8x128xf32>
    %156 = vector.extract_strided_slice %149 {offsets = [0, 128], sizes = [8, 128], strides = [1, 1]} : vector<8x512xf32> to vector<8x128xf32>
    %157 = arith.negf %156 : vector<8x128xf32>
    %158 = math.exp %157 : vector<8x128xf32>
    %cst_54 = arith.constant 1.000000e+00 : f32
    %159 = vector.broadcast %cst_54 : f32 to vector<8x128xf32>
    %160 = arith.addf %159, %158 : vector<8x128xf32>
    %161 = arith.divf %159, %160 : vector<8x128xf32>
    %162 = vector.extract_strided_slice %149 {offsets = [0, 256], sizes = [8, 128], strides = [1, 1]} : vector<8x512xf32> to vector<8x128xf32>
    %163 = math.tanh %162 : vector<8x128xf32>
    %164 = vector.extract_strided_slice %149 {offsets = [0, 384], sizes = [8, 128], strides = [1, 1]} : vector<8x512xf32> to vector<8x128xf32>
    %165 = arith.negf %164 : vector<8x128xf32>
    %166 = math.exp %165 : vector<8x128xf32>
    %cst_55 = arith.constant 1.000000e+00 : f32
    %167 = vector.broadcast %cst_55 : f32 to vector<8x128xf32>
    %168 = arith.addf %167, %166 : vector<8x128xf32>
    %169 = arith.divf %167, %168 : vector<8x128xf32>
    %170 = arith.mulf %161, %142 : vector<8x128xf32>
    %171 = arith.mulf %155, %163 : vector<8x128xf32>
    %172 = arith.addf %170, %171 : vector<8x128xf32>
    %173 = math.tanh %172 : vector<8x128xf32>
    %174 = arith.mulf %169, %173 : vector<8x128xf32>
    %c40_56 = arith.constant 40 : index
    %c0_57 = arith.constant 0 : index
    %175 = vector.load %arg11[%c40_56, %c0_57] : memref<64x128xf32, #tpu.memory_space<vmem>>, vector<8x128xf32>
    tpu.vector_store %arg11[%c40_56, %c0_57], %174 {strides = array<i32>} : memref<64x128xf32, #tpu.memory_space<vmem>>, vector<8x128xf32>,
    %c48 = arith.constant 48 : index
    %c0_58 = arith.constant 0 : index
    %176 = vector.load %arg10[%c48, %c0_58] : memref<64x512xf32, #tpu.memory_space<vmem>>, vector<8x512xf32>
    %c0_59 = arith.constant 0 : index
    %c0_60 = arith.constant 0 : index
    %177 = vector.load %arg2[%c0_59, %c0_60] : memref<128x512xf32, #tpu.memory_space<vmem>>, vector<128x512xf32>
    %cst_61 = arith.constant dense<0.000000e+00> : vector<8x512xf32>
    %178 = tpu.matmul %174, %177, %cst_61 {dimension_numbers = #tpu.dot_dimension_numbers<[1], [0], [0], [1], [0, 0, 1, 1], [], []>} : vector<8x128xf32>, vector<128x512xf32>, vector<8x512xf32> -> vector<8x512xf32>
    %179 = arith.addf %176, %178 : vector<8x512xf32>
    %180 = vector.extract_strided_slice %179 {offsets = [0, 0], sizes = [8, 128], strides = [1, 1]} : vector<8x512xf32> to vector<8x128xf32>
    %181 = arith.negf %180 : vector<8x128xf32>
    %182 = math.exp %181 : vector<8x128xf32>
    %cst_62 = arith.constant 1.000000e+00 : f32
    %183 = vector.broadcast %cst_62 : f32 to vector<8x128xf32>
    %184 = arith.addf %183, %182 : vector<8x128xf32>
    %185 = arith.divf %183, %184 : vector<8x128xf32>
    %186 = vector.extract_strided_slice %179 {offsets = [0, 128], sizes = [8, 128], strides = [1, 1]} : vector<8x512xf32> to vector<8x128xf32>
    %187 = arith.negf %186 : vector<8x128xf32>
    %188 = math.exp %187 : vector<8x128xf32>
    %cst_63 = arith.constant 1.000000e+00 : f32
    %189 = vector.broadcast %cst_63 : f32 to vector<8x128xf32>
    %190 = arith.addf %189, %188 : vector<8x128xf32>
    %191 = arith.divf %189, %190 : vector<8x128xf32>
    %192 = vector.extract_strided_slice %179 {offsets = [0, 256], sizes = [8, 128], strides = [1, 1]} : vector<8x512xf32> to vector<8x128xf32>
    %193 = math.tanh %192 : vector<8x128xf32>
    %194 = vector.extract_strided_slice %179 {offsets = [0, 384], sizes = [8, 128], strides = [1, 1]} : vector<8x512xf32> to vector<8x128xf32>
    %195 = arith.negf %194 : vector<8x128xf32>
    %196 = math.exp %195 : vector<8x128xf32>
    %cst_64 = arith.constant 1.000000e+00 : f32
    %197 = vector.broadcast %cst_64 : f32 to vector<8x128xf32>
    %198 = arith.addf %197, %196 : vector<8x128xf32>
    %199 = arith.divf %197, %198 : vector<8x128xf32>
    %200 = arith.mulf %191, %172 : vector<8x128xf32>
    %201 = arith.mulf %185, %193 : vector<8x128xf32>
    %202 = arith.addf %200, %201 : vector<8x128xf32>
    %203 = math.tanh %202 : vector<8x128xf32>
    %204 = arith.mulf %199, %203 : vector<8x128xf32>
    %c48_65 = arith.constant 48 : index
    %c0_66 = arith.constant 0 : index
    %205 = vector.load %arg11[%c48_65, %c0_66] : memref<64x128xf32, #tpu.memory_space<vmem>>, vector<8x128xf32>
    tpu.vector_store %arg11[%c48_65, %c0_66], %204 {strides = array<i32>} : memref<64x128xf32, #tpu.memory_space<vmem>>, vector<8x128xf32>,
    %c56 = arith.constant 56 : index
    %c0_67 = arith.constant 0 : index
    %206 = vector.load %arg10[%c56, %c0_67] : memref<64x512xf32, #tpu.memory_space<vmem>>, vector<8x512xf32>
    %c0_68 = arith.constant 0 : index
    %c0_69 = arith.constant 0 : index
    %207 = vector.load %arg2[%c0_68, %c0_69] : memref<128x512xf32, #tpu.memory_space<vmem>>, vector<128x512xf32>
    %cst_70 = arith.constant dense<0.000000e+00> : vector<8x512xf32>
    %208 = tpu.matmul %204, %207, %cst_70 {dimension_numbers = #tpu.dot_dimension_numbers<[1], [0], [0], [1], [0, 0, 1, 1], [], []>} : vector<8x128xf32>, vector<128x512xf32>, vector<8x512xf32> -> vector<8x512xf32>
    %209 = arith.addf %206, %208 : vector<8x512xf32>
    %210 = vector.extract_strided_slice %209 {offsets = [0, 0], sizes = [8, 128], strides = [1, 1]} : vector<8x512xf32> to vector<8x128xf32>
    %211 = arith.negf %210 : vector<8x128xf32>
    %212 = math.exp %211 : vector<8x128xf32>
    %cst_71 = arith.constant 1.000000e+00 : f32
    %213 = vector.broadcast %cst_71 : f32 to vector<8x128xf32>
    %214 = arith.addf %213, %212 : vector<8x128xf32>
    %215 = arith.divf %213, %214 : vector<8x128xf32>
    %216 = vector.extract_strided_slice %209 {offsets = [0, 128], sizes = [8, 128], strides = [1, 1]} : vector<8x512xf32> to vector<8x128xf32>
    %217 = arith.negf %216 : vector<8x128xf32>
    %218 = math.exp %217 : vector<8x128xf32>
    %cst_72 = arith.constant 1.000000e+00 : f32
    %219 = vector.broadcast %cst_72 : f32 to vector<8x128xf32>
    %220 = arith.addf %219, %218 : vector<8x128xf32>
    %221 = arith.divf %219, %220 : vector<8x128xf32>
    %222 = vector.extract_strided_slice %209 {offsets = [0, 256], sizes = [8, 128], strides = [1, 1]} : vector<8x512xf32> to vector<8x128xf32>
    %223 = math.tanh %222 : vector<8x128xf32>
    %224 = vector.extract_strided_slice %209 {offsets = [0, 384], sizes = [8, 128], strides = [1, 1]} : vector<8x512xf32> to vector<8x128xf32>
    %225 = arith.negf %224 : vector<8x128xf32>
    %226 = math.exp %225 : vector<8x128xf32>
    %cst_73 = arith.constant 1.000000e+00 : f32
    %227 = vector.broadcast %cst_73 : f32 to vector<8x128xf32>
    %228 = arith.addf %227, %226 : vector<8x128xf32>
    %229 = arith.divf %227, %228 : vector<8x128xf32>
    %230 = arith.mulf %221, %202 : vector<8x128xf32>
    %231 = arith.mulf %215, %223 : vector<8x128xf32>
    %232 = arith.addf %230, %231 : vector<8x128xf32>
    %233 = math.tanh %232 : vector<8x128xf32>
    %234 = arith.mulf %229, %233 : vector<8x128xf32>
    %c56_74 = arith.constant 56 : index
    %c0_75 = arith.constant 0 : index
    %235 = vector.load %arg11[%c56_74, %c0_75] : memref<64x128xf32, #tpu.memory_space<vmem>>, vector<8x128xf32>
    tpu.vector_store %arg11[%c56_74, %c0_75], %234 {strides = array<i32>} : memref<64x128xf32, #tpu.memory_space<vmem>>, vector<8x128xf32>,
    %c0_76 = arith.constant 0 : index
    %c0_77 = arith.constant 0 : index
    %236 = vector.load %arg11[%c0_76, %c0_77] : memref<64x128xf32, #tpu.memory_space<vmem>>, vector<64x128xf32>
    %c0_78 = arith.constant 0 : index
    %c0_79 = arith.constant 0 : index
    %237 = vector.load %arg4[%c0_78, %c0_79] : memref<128x512xf32, #tpu.memory_space<vmem>>, vector<128x512xf32>
    %cst_80 = arith.constant dense<0.000000e+00> : vector<64x512xf32>
    %238 = tpu.matmul %236, %237, %cst_80 {dimension_numbers = #tpu.dot_dimension_numbers<[1], [0], [0], [1], [0, 0, 1, 1], [], []>} : vector<64x128xf32>, vector<128x512xf32>, vector<64x512xf32> -> vector<64x512xf32>
    %c0_81 = arith.constant 0 : index
    %c0_82 = arith.constant 0 : index
    %239 = vector.load %arg6[%c0_81, %c0_82] : memref<1x512xf32, #tpu.memory_space<vmem>>, vector<1x512xf32>
    %240 = vector.broadcast %239 : vector<1x512xf32> to vector<64x512xf32>
    %241 = arith.addf %238, %240 : vector<64x512xf32>
    %c0_83 = arith.constant 0 : index
    %c0_84 = arith.constant 0 : index
    %242 = vector.load %arg10[%c0_83, %c0_84] : memref<64x512xf32, #tpu.memory_space<vmem>>, vector<64x512xf32>
    tpu.vector_store %arg10[%c0_83, %c0_84], %241 {strides = array<i32>} : memref<64x512xf32, #tpu.memory_space<vmem>>, vector<64x512xf32>,
    %c0_85 = arith.constant 0 : index
    %c0_86 = arith.constant 0 : index
    %243 = vector.load %arg10[%c0_85, %c0_86] : memref<64x512xf32, #tpu.memory_space<vmem>>, vector<8x512xf32>
    %244 = vector.extract_strided_slice %243 {offsets = [0, 0], sizes = [8, 128], strides = [1, 1]} : vector<8x512xf32> to vector<8x128xf32>
    %245 = arith.negf %244 : vector<8x128xf32>
    %246 = math.exp %245 : vector<8x128xf32>
    %cst_87 = arith.constant 1.000000e+00 : f32
    %247 = vector.broadcast %cst_87 : f32 to vector<8x128xf32>
    %248 = arith.addf %247, %246 : vector<8x128xf32>
    %249 = arith.divf %247, %248 : vector<8x128xf32>
    %250 = vector.extract_strided_slice %243 {offsets = [0, 256], sizes = [8, 128], strides = [1, 1]} : vector<8x512xf32> to vector<8x128xf32>
    %251 = math.tanh %250 : vector<8x128xf32>
    %252 = vector.extract_strided_slice %243 {offsets = [0, 384], sizes = [8, 128], strides = [1, 1]} : vector<8x512xf32> to vector<8x128xf32>
    %253 = arith.negf %252 : vector<8x128xf32>
    %254 = math.exp %253 : vector<8x128xf32>
    %cst_88 = arith.constant 1.000000e+00 : f32
    %255 = vector.broadcast %cst_88 : f32 to vector<8x128xf32>
    %256 = arith.addf %255, %254 : vector<8x128xf32>
    %257 = arith.divf %255, %256 : vector<8x128xf32>
    %258 = arith.mulf %249, %251 : vector<8x128xf32>
    %259 = math.tanh %258 : vector<8x128xf32>
    %260 = arith.mulf %257, %259 : vector<8x128xf32>
    %c8_89 = arith.constant 8 : index
    %c0_90 = arith.constant 0 : index
    %261 = vector.load %arg10[%c8_89, %c0_90] : memref<64x512xf32, #tpu.memory_space<vmem>>, vector<8x512xf32>
    %c0_91 = arith.constant 0 : index
    %c0_92 = arith.constant 0 : index
    %262 = vector.load %arg5[%c0_91, %c0_92] : memref<128x512xf32, #tpu.memory_space<vmem>>, vector<128x512xf32>
    %cst_93 = arith.constant dense<0.000000e+00> : vector<8x512xf32>
    %263 = tpu.matmul %260, %262, %cst_93 {dimension_numbers = #tpu.dot_dimension_numbers<[1], [0], [0], [1], [0, 0, 1, 1], [], []>} : vector<8x128xf32>, vector<128x512xf32>, vector<8x512xf32> -> vector<8x512xf32>
    %264 = arith.addf %261, %263 : vector<8x512xf32>
    %265 = vector.extract_strided_slice %264 {offsets = [0, 0], sizes = [8, 128], strides = [1, 1]} : vector<8x512xf32> to vector<8x128xf32>
    %266 = arith.negf %265 : vector<8x128xf32>
    %267 = math.exp %266 : vector<8x128xf32>
    %cst_94 = arith.constant 1.000000e+00 : f32
    %268 = vector.broadcast %cst_94 : f32 to vector<8x128xf32>
    %269 = arith.addf %268, %267 : vector<8x128xf32>
    %270 = arith.divf %268, %269 : vector<8x128xf32>
    %271 = vector.extract_strided_slice %264 {offsets = [0, 128], sizes = [8, 128], strides = [1, 1]} : vector<8x512xf32> to vector<8x128xf32>
    %272 = arith.negf %271 : vector<8x128xf32>
    %273 = math.exp %272 : vector<8x128xf32>
    %cst_95 = arith.constant 1.000000e+00 : f32
    %274 = vector.broadcast %cst_95 : f32 to vector<8x128xf32>
    %275 = arith.addf %274, %273 : vector<8x128xf32>
    %276 = arith.divf %274, %275 : vector<8x128xf32>
    %277 = vector.extract_strided_slice %264 {offsets = [0, 256], sizes = [8, 128], strides = [1, 1]} : vector<8x512xf32> to vector<8x128xf32>
    %278 = math.tanh %277 : vector<8x128xf32>
    %279 = vector.extract_strided_slice %264 {offsets = [0, 384], sizes = [8, 128], strides = [1, 1]} : vector<8x512xf32> to vector<8x128xf32>
    %280 = arith.negf %279 : vector<8x128xf32>
    %281 = math.exp %280 : vector<8x128xf32>
    %cst_96 = arith.constant 1.000000e+00 : f32
    %282 = vector.broadcast %cst_96 : f32 to vector<8x128xf32>
    %283 = arith.addf %282, %281 : vector<8x128xf32>
    %284 = arith.divf %282, %283 : vector<8x128xf32>
    %285 = arith.mulf %276, %258 : vector<8x128xf32>
    %286 = arith.mulf %270, %278 : vector<8x128xf32>
    %287 = arith.addf %285, %286 : vector<8x128xf32>
    %288 = math.tanh %287 : vector<8x128xf32>
    %289 = arith.mulf %284, %288 : vector<8x128xf32>
    %c16_97 = arith.constant 16 : index
    %c0_98 = arith.constant 0 : index
    %290 = vector.load %arg10[%c16_97, %c0_98] : memref<64x512xf32, #tpu.memory_space<vmem>>, vector<8x512xf32>
    %c0_99 = arith.constant 0 : index
    %c0_100 = arith.constant 0 : index
    %291 = vector.load %arg5[%c0_99, %c0_100] : memref<128x512xf32, #tpu.memory_space<vmem>>, vector<128x512xf32>
    %cst_101 = arith.constant dense<0.000000e+00> : vector<8x512xf32>
    %292 = tpu.matmul %289, %291, %cst_101 {dimension_numbers = #tpu.dot_dimension_numbers<[1], [0], [0], [1], [0, 0, 1, 1], [], []>} : vector<8x128xf32>, vector<128x512xf32>, vector<8x512xf32> -> vector<8x512xf32>
    %293 = arith.addf %290, %292 : vector<8x512xf32>
    %294 = vector.extract_strided_slice %293 {offsets = [0, 0], sizes = [8, 128], strides = [1, 1]} : vector<8x512xf32> to vector<8x128xf32>
    %295 = arith.negf %294 : vector<8x128xf32>
    %296 = math.exp %295 : vector<8x128xf32>
    %cst_102 = arith.constant 1.000000e+00 : f32
    %297 = vector.broadcast %cst_102 : f32 to vector<8x128xf32>
    %298 = arith.addf %297, %296 : vector<8x128xf32>
    %299 = arith.divf %297, %298 : vector<8x128xf32>
    %300 = vector.extract_strided_slice %293 {offsets = [0, 128], sizes = [8, 128], strides = [1, 1]} : vector<8x512xf32> to vector<8x128xf32>
    %301 = arith.negf %300 : vector<8x128xf32>
    %302 = math.exp %301 : vector<8x128xf32>
    %cst_103 = arith.constant 1.000000e+00 : f32
    %303 = vector.broadcast %cst_103 : f32 to vector<8x128xf32>
    %304 = arith.addf %303, %302 : vector<8x128xf32>
    %305 = arith.divf %303, %304 : vector<8x128xf32>
    %306 = vector.extract_strided_slice %293 {offsets = [0, 256], sizes = [8, 128], strides = [1, 1]} : vector<8x512xf32> to vector<8x128xf32>
    %307 = math.tanh %306 : vector<8x128xf32>
    %308 = vector.extract_strided_slice %293 {offsets = [0, 384], sizes = [8, 128], strides = [1, 1]} : vector<8x512xf32> to vector<8x128xf32>
    %309 = arith.negf %308 : vector<8x128xf32>
    %310 = math.exp %309 : vector<8x128xf32>
    %cst_104 = arith.constant 1.000000e+00 : f32
    %311 = vector.broadcast %cst_104 : f32 to vector<8x128xf32>
    %312 = arith.addf %311, %310 : vector<8x128xf32>
    %313 = arith.divf %311, %312 : vector<8x128xf32>
    %314 = arith.mulf %305, %287 : vector<8x128xf32>
    %315 = arith.mulf %299, %307 : vector<8x128xf32>
    %316 = arith.addf %314, %315 : vector<8x128xf32>
    %317 = math.tanh %316 : vector<8x128xf32>
    %318 = arith.mulf %313, %317 : vector<8x128xf32>
    %c24_105 = arith.constant 24 : index
    %c0_106 = arith.constant 0 : index
    %319 = vector.load %arg10[%c24_105, %c0_106] : memref<64x512xf32, #tpu.memory_space<vmem>>, vector<8x512xf32>
    %c0_107 = arith.constant 0 : index
    %c0_108 = arith.constant 0 : index
    %320 = vector.load %arg5[%c0_107, %c0_108] : memref<128x512xf32, #tpu.memory_space<vmem>>, vector<128x512xf32>
    %cst_109 = arith.constant dense<0.000000e+00> : vector<8x512xf32>
    %321 = tpu.matmul %318, %320, %cst_109 {dimension_numbers = #tpu.dot_dimension_numbers<[1], [0], [0], [1], [0, 0, 1, 1], [], []>} : vector<8x128xf32>, vector<128x512xf32>, vector<8x512xf32> -> vector<8x512xf32>
    %322 = arith.addf %319, %321 : vector<8x512xf32>
    %323 = vector.extract_strided_slice %322 {offsets = [0, 0], sizes = [8, 128], strides = [1, 1]} : vector<8x512xf32> to vector<8x128xf32>
    %324 = arith.negf %323 : vector<8x128xf32>
    %325 = math.exp %324 : vector<8x128xf32>
    %cst_110 = arith.constant 1.000000e+00 : f32
    %326 = vector.broadcast %cst_110 : f32 to vector<8x128xf32>
    %327 = arith.addf %326, %325 : vector<8x128xf32>
    %328 = arith.divf %326, %327 : vector<8x128xf32>
    %329 = vector.extract_strided_slice %322 {offsets = [0, 128], sizes = [8, 128], strides = [1, 1]} : vector<8x512xf32> to vector<8x128xf32>
    %330 = arith.negf %329 : vector<8x128xf32>
    %331 = math.exp %330 : vector<8x128xf32>
    %cst_111 = arith.constant 1.000000e+00 : f32
    %332 = vector.broadcast %cst_111 : f32 to vector<8x128xf32>
    %333 = arith.addf %332, %331 : vector<8x128xf32>
    %334 = arith.divf %332, %333 : vector<8x128xf32>
    %335 = vector.extract_strided_slice %322 {offsets = [0, 256], sizes = [8, 128], strides = [1, 1]} : vector<8x512xf32> to vector<8x128xf32>
    %336 = math.tanh %335 : vector<8x128xf32>
    %337 = vector.extract_strided_slice %322 {offsets = [0, 384], sizes = [8, 128], strides = [1, 1]} : vector<8x512xf32> to vector<8x128xf32>
    %338 = arith.negf %337 : vector<8x128xf32>
    %339 = math.exp %338 : vector<8x128xf32>
    %cst_112 = arith.constant 1.000000e+00 : f32
    %340 = vector.broadcast %cst_112 : f32 to vector<8x128xf32>
    %341 = arith.addf %340, %339 : vector<8x128xf32>
    %342 = arith.divf %340, %341 : vector<8x128xf32>
    %343 = arith.mulf %334, %316 : vector<8x128xf32>
    %344 = arith.mulf %328, %336 : vector<8x128xf32>
    %345 = arith.addf %343, %344 : vector<8x128xf32>
    %346 = math.tanh %345 : vector<8x128xf32>
    %347 = arith.mulf %342, %346 : vector<8x128xf32>
    %c32_113 = arith.constant 32 : index
    %c0_114 = arith.constant 0 : index
    %348 = vector.load %arg10[%c32_113, %c0_114] : memref<64x512xf32, #tpu.memory_space<vmem>>, vector<8x512xf32>
    %c0_115 = arith.constant 0 : index
    %c0_116 = arith.constant 0 : index
    %349 = vector.load %arg5[%c0_115, %c0_116] : memref<128x512xf32, #tpu.memory_space<vmem>>, vector<128x512xf32>
    %cst_117 = arith.constant dense<0.000000e+00> : vector<8x512xf32>
    %350 = tpu.matmul %347, %349, %cst_117 {dimension_numbers = #tpu.dot_dimension_numbers<[1], [0], [0], [1], [0, 0, 1, 1], [], []>} : vector<8x128xf32>, vector<128x512xf32>, vector<8x512xf32> -> vector<8x512xf32>
    %351 = arith.addf %348, %350 : vector<8x512xf32>
    %352 = vector.extract_strided_slice %351 {offsets = [0, 0], sizes = [8, 128], strides = [1, 1]} : vector<8x512xf32> to vector<8x128xf32>
    %353 = arith.negf %352 : vector<8x128xf32>
    %354 = math.exp %353 : vector<8x128xf32>
    %cst_118 = arith.constant 1.000000e+00 : f32
    %355 = vector.broadcast %cst_118 : f32 to vector<8x128xf32>
    %356 = arith.addf %355, %354 : vector<8x128xf32>
    %357 = arith.divf %355, %356 : vector<8x128xf32>
    %358 = vector.extract_strided_slice %351 {offsets = [0, 128], sizes = [8, 128], strides = [1, 1]} : vector<8x512xf32> to vector<8x128xf32>
    %359 = arith.negf %358 : vector<8x128xf32>
    %360 = math.exp %359 : vector<8x128xf32>
    %cst_119 = arith.constant 1.000000e+00 : f32
    %361 = vector.broadcast %cst_119 : f32 to vector<8x128xf32>
    %362 = arith.addf %361, %360 : vector<8x128xf32>
    %363 = arith.divf %361, %362 : vector<8x128xf32>
    %364 = vector.extract_strided_slice %351 {offsets = [0, 256], sizes = [8, 128], strides = [1, 1]} : vector<8x512xf32> to vector<8x128xf32>
    %365 = math.tanh %364 : vector<8x128xf32>
    %366 = vector.extract_strided_slice %351 {offsets = [0, 384], sizes = [8, 128], strides = [1, 1]} : vector<8x512xf32> to vector<8x128xf32>
    %367 = arith.negf %366 : vector<8x128xf32>
    %368 = math.exp %367 : vector<8x128xf32>
    %cst_120 = arith.constant 1.000000e+00 : f32
    %369 = vector.broadcast %cst_120 : f32 to vector<8x128xf32>
    %370 = arith.addf %369, %368 : vector<8x128xf32>
    %371 = arith.divf %369, %370 : vector<8x128xf32>
    %372 = arith.mulf %363, %345 : vector<8x128xf32>
    %373 = arith.mulf %357, %365 : vector<8x128xf32>
    %374 = arith.addf %372, %373 : vector<8x128xf32>
    %375 = math.tanh %374 : vector<8x128xf32>
    %376 = arith.mulf %371, %375 : vector<8x128xf32>
    %c40_121 = arith.constant 40 : index
    %c0_122 = arith.constant 0 : index
    %377 = vector.load %arg10[%c40_121, %c0_122] : memref<64x512xf32, #tpu.memory_space<vmem>>, vector<8x512xf32>
    %c0_123 = arith.constant 0 : index
    %c0_124 = arith.constant 0 : index
    %378 = vector.load %arg5[%c0_123, %c0_124] : memref<128x512xf32, #tpu.memory_space<vmem>>, vector<128x512xf32>
    %cst_125 = arith.constant dense<0.000000e+00> : vector<8x512xf32>
    %379 = tpu.matmul %376, %378, %cst_125 {dimension_numbers = #tpu.dot_dimension_numbers<[1], [0], [0], [1], [0, 0, 1, 1], [], []>} : vector<8x128xf32>, vector<128x512xf32>, vector<8x512xf32> -> vector<8x512xf32>
    %380 = arith.addf %377, %379 : vector<8x512xf32>
    %381 = vector.extract_strided_slice %380 {offsets = [0, 0], sizes = [8, 128], strides = [1, 1]} : vector<8x512xf32> to vector<8x128xf32>
    %382 = arith.negf %381 : vector<8x128xf32>
    %383 = math.exp %382 : vector<8x128xf32>
    %cst_126 = arith.constant 1.000000e+00 : f32
    %384 = vector.broadcast %cst_126 : f32 to vector<8x128xf32>
    %385 = arith.addf %384, %383 : vector<8x128xf32>
    %386 = arith.divf %384, %385 : vector<8x128xf32>
    %387 = vector.extract_strided_slice %380 {offsets = [0, 128], sizes = [8, 128], strides = [1, 1]} : vector<8x512xf32> to vector<8x128xf32>
    %388 = arith.negf %387 : vector<8x128xf32>
    %389 = math.exp %388 : vector<8x128xf32>
    %cst_127 = arith.constant 1.000000e+00 : f32
    %390 = vector.broadcast %cst_127 : f32 to vector<8x128xf32>
    %391 = arith.addf %390, %389 : vector<8x128xf32>
    %392 = arith.divf %390, %391 : vector<8x128xf32>
    %393 = vector.extract_strided_slice %380 {offsets = [0, 256], sizes = [8, 128], strides = [1, 1]} : vector<8x512xf32> to vector<8x128xf32>
    %394 = math.tanh %393 : vector<8x128xf32>
    %395 = vector.extract_strided_slice %380 {offsets = [0, 384], sizes = [8, 128], strides = [1, 1]} : vector<8x512xf32> to vector<8x128xf32>
    %396 = arith.negf %395 : vector<8x128xf32>
    %397 = math.exp %396 : vector<8x128xf32>
    %cst_128 = arith.constant 1.000000e+00 : f32
    %398 = vector.broadcast %cst_128 : f32 to vector<8x128xf32>
    %399 = arith.addf %398, %397 : vector<8x128xf32>
    %400 = arith.divf %398, %399 : vector<8x128xf32>
    %401 = arith.mulf %392, %374 : vector<8x128xf32>
    %402 = arith.mulf %386, %394 : vector<8x128xf32>
    %403 = arith.addf %401, %402 : vector<8x128xf32>
    %404 = math.tanh %403 : vector<8x128xf32>
    %405 = arith.mulf %400, %404 : vector<8x128xf32>
    %c48_129 = arith.constant 48 : index
    %c0_130 = arith.constant 0 : index
    %406 = vector.load %arg10[%c48_129, %c0_130] : memref<64x512xf32, #tpu.memory_space<vmem>>, vector<8x512xf32>
    %c0_131 = arith.constant 0 : index
    %c0_132 = arith.constant 0 : index
    %407 = vector.load %arg5[%c0_131, %c0_132] : memref<128x512xf32, #tpu.memory_space<vmem>>, vector<128x512xf32>
    %cst_133 = arith.constant dense<0.000000e+00> : vector<8x512xf32>
    %408 = tpu.matmul %405, %407, %cst_133 {dimension_numbers = #tpu.dot_dimension_numbers<[1], [0], [0], [1], [0, 0, 1, 1], [], []>} : vector<8x128xf32>, vector<128x512xf32>, vector<8x512xf32> -> vector<8x512xf32>
    %409 = arith.addf %406, %408 : vector<8x512xf32>
    %410 = vector.extract_strided_slice %409 {offsets = [0, 0], sizes = [8, 128], strides = [1, 1]} : vector<8x512xf32> to vector<8x128xf32>
    %411 = arith.negf %410 : vector<8x128xf32>
    %412 = math.exp %411 : vector<8x128xf32>
    %cst_134 = arith.constant 1.000000e+00 : f32
    %413 = vector.broadcast %cst_134 : f32 to vector<8x128xf32>
    %414 = arith.addf %413, %412 : vector<8x128xf32>
    %415 = arith.divf %413, %414 : vector<8x128xf32>
    %416 = vector.extract_strided_slice %409 {offsets = [0, 128], sizes = [8, 128], strides = [1, 1]} : vector<8x512xf32> to vector<8x128xf32>
    %417 = arith.negf %416 : vector<8x128xf32>
    %418 = math.exp %417 : vector<8x128xf32>
    %cst_135 = arith.constant 1.000000e+00 : f32
    %419 = vector.broadcast %cst_135 : f32 to vector<8x128xf32>
    %420 = arith.addf %419, %418 : vector<8x128xf32>
    %421 = arith.divf %419, %420 : vector<8x128xf32>
    %422 = vector.extract_strided_slice %409 {offsets = [0, 256], sizes = [8, 128], strides = [1, 1]} : vector<8x512xf32> to vector<8x128xf32>
    %423 = math.tanh %422 : vector<8x128xf32>
    %424 = vector.extract_strided_slice %409 {offsets = [0, 384], sizes = [8, 128], strides = [1, 1]} : vector<8x512xf32> to vector<8x128xf32>
    %425 = arith.negf %424 : vector<8x128xf32>
    %426 = math.exp %425 : vector<8x128xf32>
    %cst_136 = arith.constant 1.000000e+00 : f32
    %427 = vector.broadcast %cst_136 : f32 to vector<8x128xf32>
    %428 = arith.addf %427, %426 : vector<8x128xf32>
    %429 = arith.divf %427, %428 : vector<8x128xf32>
    %430 = arith.mulf %421, %403 : vector<8x128xf32>
    %431 = arith.mulf %415, %423 : vector<8x128xf32>
    %432 = arith.addf %430, %431 : vector<8x128xf32>
    %433 = math.tanh %432 : vector<8x128xf32>
    %434 = arith.mulf %429, %433 : vector<8x128xf32>
    %c56_137 = arith.constant 56 : index
    %c0_138 = arith.constant 0 : index
    %435 = vector.load %arg10[%c56_137, %c0_138] : memref<64x512xf32, #tpu.memory_space<vmem>>, vector<8x512xf32>
    %c0_139 = arith.constant 0 : index
    %c0_140 = arith.constant 0 : index
    %436 = vector.load %arg5[%c0_139, %c0_140] : memref<128x512xf32, #tpu.memory_space<vmem>>, vector<128x512xf32>
    %cst_141 = arith.constant dense<0.000000e+00> : vector<8x512xf32>
    %437 = tpu.matmul %434, %436, %cst_141 {dimension_numbers = #tpu.dot_dimension_numbers<[1], [0], [0], [1], [0, 0, 1, 1], [], []>} : vector<8x128xf32>, vector<128x512xf32>, vector<8x512xf32> -> vector<8x512xf32>
    %438 = arith.addf %435, %437 : vector<8x512xf32>
    %439 = vector.extract_strided_slice %438 {offsets = [0, 0], sizes = [8, 128], strides = [1, 1]} : vector<8x512xf32> to vector<8x128xf32>
    %440 = arith.negf %439 : vector<8x128xf32>
    %441 = math.exp %440 : vector<8x128xf32>
    %cst_142 = arith.constant 1.000000e+00 : f32
    %442 = vector.broadcast %cst_142 : f32 to vector<8x128xf32>
    %443 = arith.addf %442, %441 : vector<8x128xf32>
    %444 = arith.divf %442, %443 : vector<8x128xf32>
    %445 = vector.extract_strided_slice %438 {offsets = [0, 128], sizes = [8, 128], strides = [1, 1]} : vector<8x512xf32> to vector<8x128xf32>
    %446 = arith.negf %445 : vector<8x128xf32>
    %447 = math.exp %446 : vector<8x128xf32>
    %cst_143 = arith.constant 1.000000e+00 : f32
    %448 = vector.broadcast %cst_143 : f32 to vector<8x128xf32>
    %449 = arith.addf %448, %447 : vector<8x128xf32>
    %450 = arith.divf %448, %449 : vector<8x128xf32>
    %451 = vector.extract_strided_slice %438 {offsets = [0, 256], sizes = [8, 128], strides = [1, 1]} : vector<8x512xf32> to vector<8x128xf32>
    %452 = math.tanh %451 : vector<8x128xf32>
    %453 = vector.extract_strided_slice %438 {offsets = [0, 384], sizes = [8, 128], strides = [1, 1]} : vector<8x512xf32> to vector<8x128xf32>
    %454 = arith.negf %453 : vector<8x128xf32>
    %455 = math.exp %454 : vector<8x128xf32>
    %cst_144 = arith.constant 1.000000e+00 : f32
    %456 = vector.broadcast %cst_144 : f32 to vector<8x128xf32>
    %457 = arith.addf %456, %455 : vector<8x128xf32>
    %458 = arith.divf %456, %457 : vector<8x128xf32>
    %459 = arith.mulf %450, %432 : vector<8x128xf32>
    %460 = arith.mulf %444, %452 : vector<8x128xf32>
    %461 = arith.addf %459, %460 : vector<8x128xf32>
    %462 = math.tanh %461 : vector<8x128xf32>
    %463 = arith.mulf %458, %462 : vector<8x128xf32>
    %c0_145 = arith.constant 0 : index
    %c0_146 = arith.constant 0 : index
    %464 = vector.load %arg7[%c0_145, %c0_146] : memref<128x128xf32, #tpu.memory_space<vmem>>, vector<128x128xf32>
    %cst_147 = arith.constant dense<0.000000e+00> : vector<8x128xf32>
    %465 = tpu.matmul %463, %464, %cst_147 {dimension_numbers = #tpu.dot_dimension_numbers<[1], [0], [0], [1], [0, 0, 1, 1], [], []>} : vector<8x128xf32>, vector<128x128xf32>, vector<8x128xf32> -> vector<8x128xf32>
    %c0_148 = arith.constant 0 : index
    %c0_149 = arith.constant 0 : index
    %466 = vector.load %arg8[%c0_148, %c0_149] : memref<1x128xf32, #tpu.memory_space<vmem>>, vector<1x128xf32>
    %467 = vector.broadcast %466 : vector<1x128xf32> to vector<8x128xf32>
    %468 = arith.addf %465, %467 : vector<8x128xf32>
    %c0_150 = arith.constant 0 : index
    %c0_151 = arith.constant 0 : index
    %469 = vector.load %arg9[%c0_150, %c0_151] : memref<8x128xf32, #tpu.memory_space<vmem>>, vector<8x128xf32>
    tpu.vector_store %arg9[%c0_150, %c0_151], %468 {strides = array<i32>} : memref<8x128xf32, #tpu.memory_space<vmem>>, vector<8x128xf32>,
    return
  }
}

</mosaic_0001>

<llo_original>
// kernel: deep_lstm_pallas.1
$region0: #{deep_lstm_pallas.1}
  #allocation0 [shape = 'u32[]', space=smem, size = 0x4, offset = 0x4, fixed_abs, tag = 'smem constant byte address 0x4 - core index']
  #allocation1 [shape = 'u32[72,128]{1,0:T(1,128)}', space=vmem, size = 0x9000, scoped, tag = 'internal scratch']
  #allocation2 [shape = 'f32[64,512]{1,0:T(8,128)}', space=vmem, size = 0x20000, scoped, tag = 'scratch operand']
  #allocation3 [shape = 'f32[64,128]{1,0:T(8,128)}', space=vmem, size = 0x8000, scoped, tag = 'scratch operand']
  %s0 = inlined_call_operand.vmem [shape: f32[64,128], index: 0, kind: input, shape index: {}]
  %s1 = inlined_call_operand.hbm [shape: f32[128,512], index: 1, kind: input, shape index: {}]
  %s2 = inlined_call_operand.hbm [shape: f32[128,512], index: 2, kind: input, shape index: {}]
  %s3 = inlined_call_operand.vmem [shape: f32[1,512], index: 3, kind: input, shape index: {}]
  %s4 = inlined_call_operand.hbm [shape: f32[128,512], index: 4, kind: input, shape index: {}]
  %s5 = inlined_call_operand.hbm [shape: f32[128,512], index: 5, kind: input, shape index: {}]
  %s6 = inlined_call_operand.vmem [shape: f32[1,512], index: 6, kind: input, shape index: {}]
  %s7 = inlined_call_operand.hbm [shape: f32[128,128], index: 7, kind: input, shape index: {}]
  %s8 = inlined_call_operand.vmem [shape: f32[1,128], index: 8, kind: input, shape index: {}]
  %s9 = inlined_call_operand.vmem [shape: f32[8,128], index: 9, kind: output, shape index: {}]
  %s10 = sld [smem:[#allocation0]]
  $region66: #{deep_lstm_pallas.1} parent=0
    _
  %s12 = ssub.s32 1, %s10
  %s13 = scalar_select 0, %s12, %s10
  $region1: #{deep_lstm_pallas.1} parent=0
    #allocation4 [shape = 'u8[262144]{0}', space=vmem, size = 0x40000, scoped, tag = 'input window, operand 1, single buffered']
    #allocation5 [shape = 's32[1]{0}', space=sflag, size = 0x4, scoped, tag = 'scoped memory for deep_lstm_pallas.1']
    #allocation6 [shape = 'u8[262144]{0}', space=vmem, size = 0x40000, scoped, tag = 'input window, operand 2, single buffered']
    #allocation7 [shape = 's32[1]{0}', space=sflag, size = 0x4, scoped, tag = 'scoped memory for deep_lstm_pallas.1']
    #allocation8 [shape = 'u8[262144]{0}', space=vmem, size = 0x40000, scoped, tag = 'input window, operand 4, single buffered']
    #allocation9 [shape = 'u8[262144]{0}', space=vmem, size = 0x40000, scoped, tag = 'input window, operand 5, single buffered']
    #allocation10 [shape = 's32[1]{0}', space=sflag, size = 0x4, scoped, tag = 'scoped memory for deep_lstm_pallas.1']
    #allocation11 [shape = 'u8[65536]{0}', space=vmem, size = 0x10000, scoped, tag = 'input window, operand 7, single buffered']
    %14 = vsyncpa [#allocation5], 0
    %15 = vsyncpa [#allocation7], 0
    %16 = vsyncpa [#allocation10], 0
    // Predicated region
    $region2: #{deep_lstm_pallas.1} parent=1 // pred_check
      _
    $region3: #{deep_lstm_pallas.1} parent=1 // pred_check_branch
      %18 = sbr.rel (0) target = $region5
    $region4: #{deep_lstm_pallas.1} parent=1 // pred_region
      _
    $region5: #{deep_lstm_pallas.1} parent=1 // pred_fallthru
      _
    // Predicated region
    $region6: #{deep_lstm_pallas.1} parent=1 // pred_check
      _
    $region7: #{deep_lstm_pallas.1} parent=1 // pred_check_branch
      %20 = sbr.rel (0) target = $region9
    $region8: #{deep_lstm_pallas.1} parent=1 // pred_region
      %22 = vsyncadd [#allocation5], 0
      %s23 = sshll.u32 %s1, 4
      %s24 = int_to_ptr.hbm [resolvable:$true] %s23
      %s25 = sshll.u32 [#allocation4], 4
      %s26 = int_to_ptr.vmem [resolvable:$true] %s25
      %31 = dma.hbm_to_vmem [thread:$0]  %s24, 8192, %s26, [#allocation5], 512, 512, 32
    $region9: #{deep_lstm_pallas.1} parent=1 // pred_fallthru
      _
    // Predicated region
    $region10: #{deep_lstm_pallas.1} parent=1 // pred_check
      _
    $region11: #{deep_lstm_pallas.1} parent=1 // pred_check_branch
      %33 = sbr.rel (0) target = $region13
    $region12: #{deep_lstm_pallas.1} parent=1 // pred_region
      %35 = vsyncadd [#allocation7], 0
      %s36 = sshll.u32 %s2, 4
      %s37 = int_to_ptr.hbm [resolvable:$true] %s36
      %s38 = sshll.u32 [#allocation6], 4
      %s39 = int_to_ptr.vmem [resolvable:$true] %s38
      %44 = dma.hbm_to_vmem [thread:$0]  %s37, 8192, %s39, [#allocation7], 512, 512, 32
    $region13: #{deep_lstm_pallas.1} parent=1 // pred_fallthru
      _
    // Predicated region
    $region14: #{deep_lstm_pallas.1} parent=1 // pred_check
      _
    $region15: #{deep_lstm_pallas.1} parent=1 // pred_check_branch
      %46 = sbr.rel (0) target = $region17
    $region16: #{deep_lstm_pallas.1} parent=1 // pred_region
      _
    $region17: #{deep_lstm_pallas.1} parent=1 // pred_fallthru
      _
    // Predicated region
    $region18: #{deep_lstm_pallas.1} parent=1 // pred_check
      _
    $region19: #{deep_lstm_pallas.1} parent=1 // pred_check_branch
      %48 = sbr.rel (0) target = $region21
    $region20: #{deep_lstm_pallas.1} parent=1 // pred_region
      %50 = vsyncadd [#allocation7], 0
      %s51 = sshll.u32 %s4, 4
      %s52 = int_to_ptr.hbm [resolvable:$true] %s51
      %s53 = sshll.u32 [#allocation8], 4
      %s54 = int_to_ptr.vmem [resolvable:$true] %s53
      %59 = dma.hbm_to_vmem [thread:$0]  %s52, 8192, %s54, [#allocation7], 512, 512, 32
    $region21: #{deep_lstm_pallas.1} parent=1 // pred_fallthru
      _
    // Predicated region
    $region22: #{deep_lstm_pallas.1} parent=1 // pred_check
      _
    $region23: #{deep_lstm_pallas.1} parent=1 // pred_check_branch
      %61 = sbr.rel (0) target = $region25
    $region24: #{deep_lstm_pallas.1} parent=1 // pred_region
      %63 = vsyncadd [#allocation10], 0
      %s64 = sshll.u32 %s5, 4
      %s65 = int_to_ptr.hbm [resolvable:$true] %s64
      %s66 = sshll.u32 [#allocation9], 4
      %s67 = int_to_ptr.vmem [resolvable:$true] %s66
      %72 = dma.hbm_to_vmem [thread:$0]  %s65, 8192, %s67, [#allocation10], 512, 512, 32
    $region25: #{deep_lstm_pallas.1} parent=1 // pred_fallthru
      _
    // Predicated region
    $region26: #{deep_lstm_pallas.1} parent=1 // pred_check
      _
    $region27: #{deep_lstm_pallas.1} parent=1 // pred_check_branch
      %74 = sbr.rel (0) target = $region29
    $region28: #{deep_lstm_pallas.1} parent=1 // pred_region
      _
    $region29: #{deep_lstm_pallas.1} parent=1 // pred_fallthru
      _
    // Predicated region
    $region30: #{deep_lstm_pallas.1} parent=1 // pred_check
      _
    $region31: #{deep_lstm_pallas.1} parent=1 // pred_check_branch
      %76 = sbr.rel (0) target = $region33
    $region32: #{deep_lstm_pallas.1} parent=1 // pred_region
      %78 = vsyncadd [#allocation10], 0
      %s79 = sshll.u32 %s7, 4
      %s80 = int_to_ptr.hbm [resolvable:$true] %s79
      %s81 = sshll.u32 [#allocation11], 4
      %s82 = int_to_ptr.vmem [resolvable:$true] %s81
      %87 = dma.hbm_to_vmem [thread:$0]  %s80, 2048, %s82, [#allocation10], 128, 128, 8
    $region33: #{deep_lstm_pallas.1} parent=1 // pred_fallthru
      _
    // Predicated region
    $region34: #{deep_lstm_pallas.1} parent=1 // pred_check
      _
    $region35: #{deep_lstm_pallas.1} parent=1 // pred_check_branch
      %89 = sbr.rel (0) target = $region37
    $region36: #{deep_lstm_pallas.1} parent=1 // pred_region
      _
    $region37: #{deep_lstm_pallas.1} parent=1 // pred_fallthru
      _
    // Predicated region
    $region38: #{deep_lstm_pallas.1} parent=1 // pred_check
      _
    $region39: #{deep_lstm_pallas.1} parent=1 // pred_check_branch
      %91 = sbr.rel (0) target = $region41
    $region40: #{deep_lstm_pallas.1} parent=1 // pred_region
      %93 = dma.done [#allocation5], 8192
    $region41: #{deep_lstm_pallas.1} parent=1 // pred_fallthru
      _
    // Predicated region
    $region42: #{deep_lstm_pallas.1} parent=1 // pred_check
      _
    $region43: #{deep_lstm_pallas.1} parent=1 // pred_check_branch
      %95 = sbr.rel (0) target = $region45
    $region44: #{deep_lstm_pallas.1} parent=1 // pred_region
      %97 = dma.done [#allocation7], 8192
    $region45: #{deep_lstm_pallas.1} parent=1 // pred_fallthru
      _
    // Predicated region
    $region46: #{deep_lstm_pallas.1} parent=1 // pred_check
      _
    $region47: #{deep_lstm_pallas.1} parent=1 // pred_check_branch
      %99 = sbr.rel (0) target = $region49
    $region48: #{deep_lstm_pallas.1} parent=1 // pred_region
      %101 = dma.done [#allocation7], 8192
    $region49: #{deep_lstm_pallas.1} parent=1 // pred_fallthru
      _
    // Predicated region
    $region50: #{deep_lstm_pallas.1} parent=1 // pred_check
      _
    $region51: #{deep_lstm_pallas.1} parent=1 // pred_check_branch
      %103 = sbr.rel (0) target = $region53
    $region52: #{deep_lstm_pallas.1} parent=1 // pred_region
      %105 = dma.done [#allocation10], 8192
    $region53: #{deep_lstm_pallas.1} parent=1 // pred_fallthru
      _
    // Predicated region
    $region54: #{deep_lstm_pallas.1} parent=1 // pred_check
      _
    $region55: #{deep_lstm_pallas.1} parent=1 // pred_check_branch
      %107 = sbr.rel (0) target = $region57
    $region56: #{deep_lstm_pallas.1} parent=1 // pred_region
      %109 = dma.done [#allocation10], 2048
    $region57: #{deep_lstm_pallas.1} parent=1 // pred_fallthru
      _
    %v110 = vld [vmem:[%s0] sm:$0xff]
    %v111 = vld [vmem:[%s0 + $0x8] sm:$0xff]
    %v112 = vld [vmem:[%s0 + $0x10] sm:$0xff]
    %v113 = vld [vmem:[%s0 + $0x18] sm:$0xff]
    %v114 = vld [vmem:[%s0 + $0x20] sm:$0xff]
    %v115 = vld [vmem:[%s0 + $0x28] sm:$0xff]
    %v116 = vld [vmem:[%s0 + $0x30] sm:$0xff]
    %v117 = vld [vmem:[%s0 + $0x38] sm:$0xff]
    %v118 = vld [vmem:[#allocation4] sm:$0xff]
    %v119 = vld [vmem:[#allocation4 + $0x8] sm:$0xff]
    %v120 = vld [vmem:[#allocation4 + $0x10] sm:$0xff]
    %v121 = vld [vmem:[#allocation4 + $0x18] sm:$0xff]
    %v122 = vld [vmem:[#allocation4 + $0x20] sm:$0xff]
    %v123 = vld [vmem:[#allocation4 + $0x28] sm:$0xff]
    %v124 = vld [vmem:[#allocation4 + $0x30] sm:$0xff]
    %v125 = vld [vmem:[#allocation4 + $0x38] sm:$0xff]
    %v126 = vld [vmem:[#allocation4 + $0x40] sm:$0xff]
    %v127 = vld [vmem:[#allocation4 + $0x48] sm:$0xff]
    %v128 = vld [vmem:[#allocation4 + $0x50] sm:$0xff]
    %v129 = vld [vmem:[#allocation4 + $0x58] sm:$0xff]
    %v130 = vld [vmem:[#allocation4 + $0x60] sm:$0xff]
    %v131 = vld [vmem:[#allocation4 + $0x68] sm:$0xff]
    %v132 = vld [vmem:[#allocation4 + $0x70] sm:$0xff]
    %v133 = vld [vmem:[#allocation4 + $0x78] sm:$0xff]
    %v134 = vld [vmem:[#allocation4 + $0x80] sm:$0xff]
    %v135 = vld [vmem:[#allocation4 + $0x88] sm:$0xff]
    %v136 = vld [vmem:[#allocation4 + $0x90] sm:$0xff]
    %v137 = vld [vmem:[#allocation4 + $0x98] sm:$0xff]
    %v138 = vld [vmem:[#allocation4 + $0xa0] sm:$0xff]
    %v139 = vld [vmem:[#allocation4 + $0xa8] sm:$0xff]
    %v140 = vld [vmem:[#allocation4 + $0xb0] sm:$0xff]
    %v141 = vld [vmem:[#allocation4 + $0xb8] sm:$0xff]
    %v142 = vld [vmem:[#allocation4 + $0xc0] sm:$0xff]
    %v143 = vld [vmem:[#allocation4 + $0xc8] sm:$0xff]
    %v144 = vld [vmem:[#allocation4 + $0xd0] sm:$0xff]
    %v145 = vld [vmem:[#allocation4 + $0xd8] sm:$0xff]
    %v146 = vld [vmem:[#allocation4 + $0xe0] sm:$0xff]
    %v147 = vld [vmem:[#allocation4 + $0xe8] sm:$0xff]
    %v148 = vld [vmem:[#allocation4 + $0xf0] sm:$0xff]
    %v149 = vld [vmem:[#allocation4 + $0xf8] sm:$0xff]
    %v150 = vld [vmem:[#allocation4 + $0x100] sm:$0xff]
    %v151 = vld [vmem:[#allocation4 + $0x108] sm:$0xff]
    %v152 = vld [vmem:[#allocation4 + $0x110] sm:$0xff]
    %v153 = vld [vmem:[#allocation4 + $0x118] sm:$0xff]
    %v154 = vld [vmem:[#allocation4 + $0x120] sm:$0xff]
    %v155 = vld [vmem:[#allocation4 + $0x128] sm:$0xff]
    %v156 = vld [vmem:[#allocation4 + $0x130] sm:$0xff]
    %v157 = vld [vmem:[#allocation4 + $0x138] sm:$0xff]
    %v158 = vld [vmem:[#allocation4 + $0x140] sm:$0xff]
    %v159 = vld [vmem:[#allocation4 + $0x148] sm:$0xff]
    %v160 = vld [vmem:[#allocation4 + $0x150] sm:$0xff]
    %v161 = vld [vmem:[#allocation4 + $0x158] sm:$0xff]
    %v162 = vld [vmem:[#allocation4 + $0x160] sm:$0xff]
    %v163 = vld [vmem:[#allocation4 + $0x168] sm:$0xff]
    %v164 = vld [vmem:[#allocation4 + $0x170] sm:$0xff]
    %v165 = vld [vmem:[#allocation4 + $0x178] sm:$0xff]
    %v166 = vld [vmem:[#allocation4 + $0x180] sm:$0xff]
    %v167 = vld [vmem:[#allocation4 + $0x188] sm:$0xff]
    %v168 = vld [vmem:[#allocation4 + $0x190] sm:$0xff]
    %v169 = vld [vmem:[#allocation4 + $0x198] sm:$0xff]
    %v170 = vld [vmem:[#allocation4 + $0x1a0] sm:$0xff]
    %v171 = vld [vmem:[#allocation4 + $0x1a8] sm:$0xff]
    %v172 = vld [vmem:[#allocation4 + $0x1b0] sm:$0xff]
    %v173 = vld [vmem:[#allocation4 + $0x1b8] sm:$0xff]
    %v174 = vld [vmem:[#allocation4 + $0x1c0] sm:$0xff]
    %v175 = vld [vmem:[#allocation4 + $0x1c8] sm:$0xff]
    %v176 = vld [vmem:[#allocation4 + $0x1d0] sm:$0xff]
    %v177 = vld [vmem:[#allocation4 + $0x1d8] sm:$0xff]
    %v178 = vld [vmem:[#allocation4 + $0x1e0] sm:$0xff]
    %v179 = vld [vmem:[#allocation4 + $0x1e8] sm:$0xff]
    %v180 = vld [vmem:[#allocation4 + $0x1f0] sm:$0xff]
    %v181 = vld [vmem:[#allocation4 + $0x1f8] sm:$0xff]
    %v182 = vld [vmem:[%s3] sm:$0xf]
    %v184 = vperm.slane %v182, 0
    %v185 = vperm.slane %v182, 1
    %v186 = vperm.slane %v182, 2
    %v187 = vperm.slane %v182, 3
    %192 = vmatpush.msra.mxu0 %v178
    %193 = vmatpush.msra.mxu0 %v174
    %194 = vmatpush.msra.mxu0 %v170
    %195 = vmatpush.msra.mxu0 %v166
    %196 = vmatpush.msra.mxu0 %v162
    %197 = vmatpush.msra.mxu0 %v158
    %198 = vmatpush.msra.mxu0 %v154
    %199 = vmatpush.msra.mxu0 %v150
    %200 = vmatpush.msra.mxu0 %v146
    %201 = vmatpush.msra.mxu0 %v142
    %202 = vmatpush.msra.mxu0 %v138
    %203 = vmatpush.msra.mxu0 %v134
    %204 = vmatpush.msra.mxu0 %v130
    %205 = vmatpush.msra.mxu0 %v126
    %206 = vmatpush.msra.mxu0 %v122
    %207 = vmatpush.msra.mxu0 %v118
    %208 = vmatmul.f32.gmra.mxu0 %v110
    %v209 = vpop.f32.mrf.mxu0
    %v210 = vadd.f32 %v184, %v209
    %211 = vmatmul.f32.gmra.mxu0 %v111
    %v212 = vpop.f32.mrf.mxu0
    %v213 = vadd.f32 %v184, %v212
    %214 = vmatmul.f32.gmra.mxu0 %v112
    %v215 = vpop.f32.mrf.mxu0
    %v216 = vadd.f32 %v184, %v215
    %217 = vmatmul.f32.gmra.mxu0 %v113
    %v218 = vpop.f32.mrf.mxu0
    %v219 = vadd.f32 %v184, %v218
    %220 = vmatmul.f32.gmra.mxu0 %v114
    %v221 = vpop.f32.mrf.mxu0
    %v222 = vadd.f32 %v184, %v221
    %223 = vmatmul.f32.gmra.mxu0 %v115
    %v224 = vpop.f32.mrf.mxu0
    %v225 = vadd.f32 %v184, %v224
    %226 = vmatmul.f32.gmra.mxu0 %v116
    %v227 = vpop.f32.mrf.mxu0
    %v228 = vadd.f32 %v184, %v227
    %229 = vmatmul.f32.gmra.mxu0 %v117
    %v230 = vpop.f32.mrf.mxu0
    %v231 = vadd.f32 %v184, %v230
    %232 = vdwg.mxu0
    %233 = vmatpush.msra.mxu0 %v179
    %234 = vmatpush.msra.mxu0 %v175
    %235 = vmatpush.msra.mxu0 %v171
    %236 = vmatpush.msra.mxu0 %v167
    %237 = vmatpush.msra.mxu0 %v163
    %238 = vmatpush.msra.mxu0 %v159
    %239 = vmatpush.msra.mxu0 %v155
    %240 = vmatpush.msra.mxu0 %v151
    %241 = vmatpush.msra.mxu0 %v147
    %242 = vmatpush.msra.mxu0 %v143
    %243 = vmatpush.msra.mxu0 %v139
    %244 = vmatpush.msra.mxu0 %v135
    %245 = vmatpush.msra.mxu0 %v131
    %246 = vmatpush.msra.mxu0 %v127
    %247 = vmatpush.msra.mxu0 %v123
    %248 = vmatpush.msra.mxu0 %v119
    %249 = vmatmul.f32.gmra.mxu0 %v110
    %v250 = vpop.f32.mrf.mxu0
    %v251 = vadd.f32 %v185, %v250
    %252 = vmatmul.f32.gmra.mxu0 %v111
    %v253 = vpop.f32.mrf.mxu0
    %v254 = vadd.f32 %v185, %v253
    %255 = vmatmul.f32.gmra.mxu0 %v112
    %v256 = vpop.f32.mrf.mxu0
    %v257 = vadd.f32 %v185, %v256
    %258 = vmatmul.f32.gmra.mxu0 %v113
    %v259 = vpop.f32.mrf.mxu0
    %v260 = vadd.f32 %v185, %v259
    %261 = vmatmul.f32.gmra.mxu0 %v114
    %v262 = vpop.f32.mrf.mxu0
    %v263 = vadd.f32 %v185, %v262
    %264 = vmatmul.f32.gmra.mxu0 %v115
    %v265 = vpop.f32.mrf.mxu0
    %v266 = vadd.f32 %v185, %v265
    %267 = vmatmul.f32.gmra.mxu0 %v116
    %v268 = vpop.f32.mrf.mxu0
    %v269 = vadd.f32 %v185, %v268
    %270 = vmatmul.f32.gmra.mxu0 %v117
    %v271 = vpop.f32.mrf.mxu0
    %v272 = vadd.f32 %v185, %v271
    %273 = vdwg.mxu0
    %274 = vmatpush.msra.mxu0 %v180
    %275 = vmatpush.msra.mxu0 %v176
    %276 = vmatpush.msra.mxu0 %v172
    %277 = vmatpush.msra.mxu0 %v168
    %278 = vmatpush.msra.mxu0 %v164
    %279 = vmatpush.msra.mxu0 %v160
    %280 = vmatpush.msra.mxu0 %v156
    %281 = vmatpush.msra.mxu0 %v152
    %282 = vmatpush.msra.mxu0 %v148
    %283 = vmatpush.msra.mxu0 %v144
    %284 = vmatpush.msra.mxu0 %v140
    %285 = vmatpush.msra.mxu0 %v136
    %286 = vmatpush.msra.mxu0 %v132
    %287 = vmatpush.msra.mxu0 %v128
    %288 = vmatpush.msra.mxu0 %v124
    %289 = vmatpush.msra.mxu0 %v120
    %290 = vmatmul.f32.gmra.mxu0 %v110
    %v291 = vpop.f32.mrf.mxu0
    %v292 = vadd.f32 %v186, %v291
    %293 = vmatmul.f32.gmra.mxu0 %v111
    %v294 = vpop.f32.mrf.mxu0
    %v295 = vadd.f32 %v186, %v294
    %296 = vmatmul.f32.gmra.mxu0 %v112
    %v297 = vpop.f32.mrf.mxu0
    %v298 = vadd.f32 %v186, %v297
    %299 = vmatmul.f32.gmra.mxu0 %v113
    %v300 = vpop.f32.mrf.mxu0
    %v301 = vadd.f32 %v186, %v300
    %302 = vmatmul.f32.gmra.mxu0 %v114
    %v303 = vpop.f32.mrf.mxu0
    %v304 = vadd.f32 %v186, %v303
    %305 = vmatmul.f32.gmra.mxu0 %v115
    %v306 = vpop.f32.mrf.mxu0
    %v307 = vadd.f32 %v186, %v306
    %308 = vmatmul.f32.gmra.mxu0 %v116
    %v309 = vpop.f32.mrf.mxu0
    %v310 = vadd.f32 %v186, %v309
    %311 = vmatmul.f32.gmra.mxu0 %v117
    %v312 = vpop.f32.mrf.mxu0
    %v313 = vadd.f32 %v186, %v312
    %314 = vdwg.mxu0
    %315 = vmatpush.msra.mxu0 %v181
    %316 = vmatpush.msra.mxu0 %v177
    %317 = vmatpush.msra.mxu0 %v173
    %318 = vmatpush.msra.mxu0 %v169
    %319 = vmatpush.msra.mxu0 %v165
    %320 = vmatpush.msra.mxu0 %v161
    %321 = vmatpush.msra.mxu0 %v157
    %322 = vmatpush.msra.mxu0 %v153
    %323 = vmatpush.msra.mxu0 %v149
    %324 = vmatpush.msra.mxu0 %v145
    %325 = vmatpush.msra.mxu0 %v141
    %326 = vmatpush.msra.mxu0 %v137
    %327 = vmatpush.msra.mxu0 %v133
    %328 = vmatpush.msra.mxu0 %v129
    %329 = vmatpush.msra.mxu0 %v125
    %330 = vmatpush.msra.mxu0 %v121
    %331 = vmatmul.f32.gmra.mxu0 %v110
    %v332 = vpop.f32.mrf.mxu0
    %v333 = vadd.f32 %v187, %v332
    %334 = vmatmul.f32.gmra.mxu0 %v111
    %v335 = vpop.f32.mrf.mxu0
    %v336 = vadd.f32 %v187, %v335
    %337 = vmatmul.f32.gmra.mxu0 %v112
    %v338 = vpop.f32.mrf.mxu0
    %v339 = vadd.f32 %v187, %v338
    %340 = vmatmul.f32.gmra.mxu0 %v113
    %v341 = vpop.f32.mrf.mxu0
    %v342 = vadd.f32 %v187, %v341
    %343 = vmatmul.f32.gmra.mxu0 %v114
    %v344 = vpop.f32.mrf.mxu0
    %v345 = vadd.f32 %v187, %v344
    %346 = vmatmul.f32.gmra.mxu0 %v115
    %v347 = vpop.f32.mrf.mxu0
    %v348 = vadd.f32 %v187, %v347
    %349 = vmatmul.f32.gmra.mxu0 %v116
    %v350 = vpop.f32.mrf.mxu0
    %v351 = vadd.f32 %v187, %v350
    %352 = vmatmul.f32.gmra.mxu0 %v117
    %v353 = vpop.f32.mrf.mxu0
    %v354 = vadd.f32 %v187, %v353
    %355 = vdwg.mxu0
    %356 = vst [vmem:[#allocation2] sm:$0xff] %v210
    %357 = vst [vmem:[#allocation2 + $0x8] sm:$0xff] %v251
    %358 = vst [vmem:[#allocation2 + $0x10] sm:$0xff] %v292
    %359 = vst [vmem:[#allocation2 + $0x18] sm:$0xff] %v333
    %360 = vst [vmem:[#allocation2 + $0x20] sm:$0xff] %v213
    %361 = vst [vmem:[#allocation2 + $0x28] sm:$0xff] %v254
    %362 = vst [vmem:[#allocation2 + $0x30] sm:$0xff] %v295
    %363 = vst [vmem:[#allocation2 + $0x38] sm:$0xff] %v336
    %364 = vst [vmem:[#allocation2 + $0x40] sm:$0xff] %v216
    %365 = vst [vmem:[#allocation2 + $0x48] sm:$0xff] %v257
    %366 = vst [vmem:[#allocation2 + $0x50] sm:$0xff] %v298
    %367 = vst [vmem:[#allocation2 + $0x58] sm:$0xff] %v339
    %368 = vst [vmem:[#allocation2 + $0x60] sm:$0xff] %v219
    %369 = vst [vmem:[#allocation2 + $0x68] sm:$0xff] %v260
    %370 = vst [vmem:[#allocation2 + $0x70] sm:$0xff] %v301
    %371 = vst [vmem:[#allocation2 + $0x78] sm:$0xff] %v342
    %372 = vst [vmem:[#allocation2 + $0x80] sm:$0xff] %v222
    %373 = vst [vmem:[#allocation2 + $0x88] sm:$0xff] %v263
    %374 = vst [vmem:[#allocation2 + $0x90] sm:$0xff] %v304
    %375 = vst [vmem:[#allocation2 + $0x98] sm:$0xff] %v345
    %376 = vst [vmem:[#allocation2 + $0xa0] sm:$0xff] %v225
    %377 = vst [vmem:[#allocation2 + $0xa8] sm:$0xff] %v266
    %378 = vst [vmem:[#allocation2 + $0xb0] sm:$0xff] %v307
    %379 = vst [vmem:[#allocation2 + $0xb8] sm:$0xff] %v348
    %380 = vst [vmem:[#allocation2 + $0xc0] sm:$0xff] %v228
    %381 = vst [vmem:[#allocation2 + $0xc8] sm:$0xff] %v269
    %382 = vst [vmem:[#allocation2 + $0xd0] sm:$0xff] %v310
    %383 = vst [vmem:[#allocation2 + $0xd8] sm:$0xff] %v351
    %384 = vst [vmem:[#allocation2 + $0xe0] sm:$0xff] %v231
    %385 = vst [vmem:[#allocation2 + $0xe8] sm:$0xff] %v272
    %386 = vst [vmem:[#allocation2 + $0xf0] sm:$0xff] %v313
    %387 = vst [vmem:[#allocation2 + $0xf8] sm:$0xff] %v354
    %v388 = vld [vmem:[#allocation2] sm:$0xff]
    %v389 = vld [vmem:[#allocation2 + $0x10] sm:$0xff]
    %v390 = vld [vmem:[#allocation2 + $0x18] sm:$0xff]
    %v391 = vxor.u32 %v388, 2147483648
    %v392 = vmul.f32 %v391, 1.442695
    %v393 = vpow.pop %v392
    %v394 = vadd.f32 %v393, 1.0
    %v395 = vrcp.pop %v394
    %v396 = vmul.f32 %v394, %v395
    %v397 = vsub.f32 1.0, %v396
    %v398 = vmul.f32 %v395, %v397
    %v399 = vadd.f32 %v395, %v398
    %vm400 = vweird.f32 %v394
    %vm401 = vweird.f32 %v395
    %vm402 = vmor %vm400, %vm401
    %v403 = vsel %vm402, %v395, %v399
    %v404 = vand.u32 2147483647, %v394
    %vm405 = vcmp.eq.f32.partialorder %v404, 8.507059e+37
    %v406 = vand.u32 %v394, 2147483648
    %v407 = vor.u32 1.1754944e-38, %v406
    %v408 = vsel %vm405, %v407, %v403
    %v409 = vmul.f32 1.0, %v408
    %v410 = vtanh.pop %v389
    %v411 = vxor.u32 %v390, 2147483648
    %v412 = vmul.f32 %v411, 1.442695
    %v413 = vpow.pop %v412
    %v414 = vadd.f32 %v413, 1.0
    %v415 = vrcp.pop %v414
    %v416 = vmul.f32 %v414, %v415
    %v417 = vsub.f32 1.0, %v416
    %v418 = vmul.f32 %v415, %v417
    %v419 = vadd.f32 %v415, %v418
    %vm420 = vweird.f32 %v414
    %vm421 = vweird.f32 %v415
    %vm422 = vmor %vm420, %vm421
    %v423 = vsel %vm422, %v415, %v419
    %v424 = vand.u32 2147483647, %v414
    %vm425 = vcmp.eq.f32.partialorder %v424, 8.507059e+37
    %v426 = vand.u32 %v414, 2147483648
    %v427 = vor.u32 1.1754944e-38, %v426
    %v428 = vsel %vm425, %v427, %v423
    %v429 = vmul.f32 1.0, %v428
    %v430 = vmul.f32 %v409, %v410
    %v431 = vtanh.pop %v430
    %v432 = vmul.f32 %v429, %v431
    %433 = vst [vmem:[#allocation3] sm:$0xff] %v432
    %v434 = vld [vmem:[#allocation2 + $0x20] sm:$0xff]
    %v435 = vld [vmem:[#allocation2 + $0x28] sm:$0xff]
    %v436 = vld [vmem:[#allocation2 + $0x30] sm:$0xff]
    %v437 = vld [vmem:[#allocation2 + $0x38] sm:$0xff]
    %v438 = vld [vmem:[#allocation6] sm:$0xff]
    %v439 = vld [vmem:[#allocation6 + $0x8] sm:$0xff]
    %v440 = vld [vmem:[#allocation6 + $0x10] sm:$0xff]
    %v441 = vld [vmem:[#allocation6 + $0x18] sm:$0xff]
    %v442 = vld [vmem:[#allocation6 + $0x20] sm:$0xff]
    %v443 = vld [vmem:[#allocation6 + $0x28] sm:$0xff]
    %v444 = vld [vmem:[#allocation6 + $0x30] sm:$0xff]
    %v445 = vld [vmem:[#allocation6 + $0x38] sm:$0xff]
    %v446 = vld [vmem:[#allocation6 + $0x40] sm:$0xff]
    %v447 = vld [vmem:[#allocation6 + $0x48] sm:$0xff]
    %v448 = vld [vmem:[#allocation6 + $0x50] sm:$0xff]
    %v449 = vld [vmem:[#allocation6 + $0x58] sm:$0xff]
    %v450 = vld [vmem:[#allocation6 + $0x60] sm:$0xff]
    %v451 = vld [vmem:[#allocation6 + $0x68] sm:$0xff]
    %v452 = vld [vmem:[#allocation6 + $0x70] sm:$0xff]
    %v453 = vld [vmem:[#allocation6 + $0x78] sm:$0xff]
    %v454 = vld [vmem:[#allocation6 + $0x80] sm:$0xff]
    %v455 = vld [vmem:[#allocation6 + $0x88] sm:$0xff]
    %v456 = vld [vmem:[#allocation6 + $0x90] sm:$0xff]
    %v457 = vld [vmem:[#allocation6 + $0x98] sm:$0xff]
    %v458 = vld [vmem:[#allocation6 + $0xa0] sm:$0xff]
    %v459 = vld [vmem:[#allocation6 + $0xa8] sm:$0xff]
    %v460 = vld [vmem:[#allocation6 + $0xb0] sm:$0xff]
    %v461 = vld [vmem:[#allocation6 + $0xb8] sm:$0xff]
    %v462 = vld [vmem:[#allocation6 + $0xc0] sm:$0xff]
    %v463 = vld [vmem:[#allocation6 + $0xc8] sm:$0xff]
    %v464 = vld [vmem:[#allocation6 + $0xd0] sm:$0xff]
    %v465 = vld [vmem:[#allocation6 + $0xd8] sm:$0xff]
    %v466 = vld [vmem:[#allocation6 + $0xe0] sm:$0xff]
    %v467 = vld [vmem:[#allocation6 + $0xe8] sm:$0xff]
    %v468 = vld [vmem:[#allocation6 + $0xf0] sm:$0xff]
    %v469 = vld [vmem:[#allocation6 + $0xf8] sm:$0xff]
    %v470 = vld [vmem:[#allocation6 + $0x100] sm:$0xff]
    %v471 = vld [vmem:[#allocation6 + $0x108] sm:$0xff]
    %v472 = vld [vmem:[#allocation6 + $0x110] sm:$0xff]
    %v473 = vld [vmem:[#allocation6 + $0x118] sm:$0xff]
    %v474 = vld [vmem:[#allocation6 + $0x120] sm:$0xff]
    %v475 = vld [vmem:[#allocation6 + $0x128] sm:$0xff]
    %v476 = vld [vmem:[#allocation6 + $0x130] sm:$0xff]
    %v477 = vld [vmem:[#allocation6 + $0x138] sm:$0xff]
    %v478 = vld [vmem:[#allocation6 + $0x140] sm:$0xff]
    %v479 = vld [vmem:[#allocation6 + $0x148] sm:$0xff]
    %v480 = vld [vmem:[#allocation6 + $0x150] sm:$0xff]
    %v481 = vld [vmem:[#allocation6 + $0x158] sm:$0xff]
    %v482 = vld [vmem:[#allocation6 + $0x160] sm:$0xff]
    %v483 = vld [vmem:[#allocation6 + $0x168] sm:$0xff]
    %v484 = vld [vmem:[#allocation6 + $0x170] sm:$0xff]
    %v485 = vld [vmem:[#allocation6 + $0x178] sm:$0xff]
    %v486 = vld [vmem:[#allocation6 + $0x180] sm:$0xff]
    %v487 = vld [vmem:[#allocation6 + $0x188] sm:$0xff]
    %v488 = vld [vmem:[#allocation6 + $0x190] sm:$0xff]
    %v489 = vld [vmem:[#allocation6 + $0x198] sm:$0xff]
    %v490 = vld [vmem:[#allocation6 + $0x1a0] sm:$0xff]
    %v491 = vld [vmem:[#allocation6 + $0x1a8] sm:$0xff]
    %v492 = vld [vmem:[#allocation6 + $0x1b0] sm:$0xff]
    %v493 = vld [vmem:[#allocation6 + $0x1b8] sm:$0xff]
    %v494 = vld [vmem:[#allocation6 + $0x1c0] sm:$0xff]
    %v495 = vld [vmem:[#allocation6 + $0x1c8] sm:$0xff]
    %v496 = vld [vmem:[#allocation6 + $0x1d0] sm:$0xff]
    %v497 = vld [vmem:[#allocation6 + $0x1d8] sm:$0xff]
    %v498 = vld [vmem:[#allocation6 + $0x1e0] sm:$0xff]
    %v499 = vld [vmem:[#allocation6 + $0x1e8] sm:$0xff]
    %v500 = vld [vmem:[#allocation6 + $0x1f0] sm:$0xff]
    %v501 = vld [vmem:[#allocation6 + $0x1f8] sm:$0xff]
    %502 = vmatpush.msra.mxu0 %v498
    %503 = vmatpush.msra.mxu0 %v494
    %504 = vmatpush.msra.mxu0 %v490
    %505 = vmatpush.msra.mxu0 %v486
    %506 = vmatpush.msra.mxu0 %v482
    %507 = vmatpush.msra.mxu0 %v478
    %508 = vmatpush.msra.mxu0 %v474
    %509 = vmatpush.msra.mxu0 %v470
    %510 = vmatpush.msra.mxu0 %v466
    %511 = vmatpush.msra.mxu0 %v462
    %512 = vmatpush.msra.mxu0 %v458
    %513 = vmatpush.msra.mxu0 %v454
    %514 = vmatpush.msra.mxu0 %v450
    %515 = vmatpush.msra.mxu0 %v446
    %516 = vmatpush.msra.mxu0 %v442
    %517 = vmatpush.msra.mxu0 %v438
    %518 = vmatmul.f32.gmra.mxu0 %v432
    %v519 = vpop.f32.mrf.mxu0
    %v520 = vadd.f32 0.0, %v519
    %521 = vdwg.mxu0
    %522 = vmatpush.msra.mxu0 %v499
    %523 = vmatpush.msra.mxu0 %v495
    %524 = vmatpush.msra.mxu0 %v491
    %525 = vmatpush.msra.mxu0 %v487
    %526 = vmatpush.msra.mxu0 %v483
    %527 = vmatpush.msra.mxu0 %v479
    %528 = vmatpush.msra.mxu0 %v475
    %529 = vmatpush.msra.mxu0 %v471
    %530 = vmatpush.msra.mxu0 %v467
    %531 = vmatpush.msra.mxu0 %v463
    %532 = vmatpush.msra.mxu0 %v459
    %533 = vmatpush.msra.mxu0 %v455
    %534 = vmatpush.msra.mxu0 %v451
    %535 = vmatpush.msra.mxu0 %v447
    %536 = vmatpush.msra.mxu0 %v443
    %537 = vmatpush.msra.mxu0 %v439
    %538 = vmatmul.f32.gmra.mxu0 %v432
    %v539 = vpop.f32.mrf.mxu0
    %v540 = vadd.f32 0.0, %v539
    %541 = vdwg.mxu0
    %542 = vmatpush.msra.mxu0 %v500
    %543 = vmatpush.msra.mxu0 %v496
    %544 = vmatpush.msra.mxu0 %v492
    %545 = vmatpush.msra.mxu0 %v488
    %546 = vmatpush.msra.mxu0 %v484
    %547 = vmatpush.msra.mxu0 %v480
    %548 = vmatpush.msra.mxu0 %v476
    %549 = vmatpush.msra.mxu0 %v472
    %550 = vmatpush.msra.mxu0 %v468
    %551 = vmatpush.msra.mxu0 %v464
    %552 = vmatpush.msra.mxu0 %v460
    %553 = vmatpush.msra.mxu0 %v456
    %554 = vmatpush.msra.mxu0 %v452
    %555 = vmatpush.msra.mxu0 %v448
    %556 = vmatpush.msra.mxu0 %v444
    %557 = vmatpush.msra.mxu0 %v440
    %558 = vmatmul.f32.gmra.mxu0 %v432
    %v559 = vpop.f32.mrf.mxu0
    %v560 = vadd.f32 0.0, %v559
    %561 = vdwg.mxu0
    %562 = vmatpush.msra.mxu0 %v501
    %563 = vmatpush.msra.mxu0 %v497
    %564 = vmatpush.msra.mxu0 %v493
    %565 = vmatpush.msra.mxu0 %v489
    %566 = vmatpush.msra.mxu0 %v485
    %567 = vmatpush.msra.mxu0 %v481
    %568 = vmatpush.msra.mxu0 %v477
    %569 = vmatpush.msra.mxu0 %v473
    %570 = vmatpush.msra.mxu0 %v469
    %571 = vmatpush.msra.mxu0 %v465
    %572 = vmatpush.msra.mxu0 %v461
    %573 = vmatpush.msra.mxu0 %v457
    %574 = vmatpush.msra.mxu0 %v453
    %575 = vmatpush.msra.mxu0 %v449
    %576 = vmatpush.msra.mxu0 %v445
    %577 = vmatpush.msra.mxu0 %v441
    %578 = vmatmul.f32.gmra.mxu0 %v432
    %v579 = vpop.f32.mrf.mxu0
    %v580 = vadd.f32 0.0, %v579
    %581 = vdwg.mxu0
    %v582 = vadd.f32 %v434, %v520
    %v583 = vadd.f32 %v435, %v540
    %v584 = vadd.f32 %v436, %v560
    %v585 = vadd.f32 %v437, %v580
    %v586 = vxor.u32 %v582, 2147483648
    %v587 = vmul.f32 %v586, 1.442695
    %v588 = vpow.pop %v587
    %v589 = vadd.f32 %v588, 1.0
    %v590 = vrcp.pop %v589
    %v591 = vmul.f32 %v589, %v590
    %v592 = vsub.f32 1.0, %v591
    %v593 = vmul.f32 %v590, %v592
    %v594 = vadd.f32 %v590, %v593
    %vm595 = vweird.f32 %v589
    %vm596 = vweird.f32 %v590
    %vm597 = vmor %vm595, %vm596
    %v598 = vsel %vm597, %v590, %v594
    %v599 = vand.u32 2147483647, %v589
    %vm600 = vcmp.eq.f32.partialorder %v599, 8.507059e+37
    %v601 = vand.u32 %v589, 2147483648
    %v602 = vor.u32 1.1754944e-38, %v601
    %v603 = vsel %vm600, %v602, %v598
    %v604 = vmul.f32 1.0, %v603
    %v605 = vxor.u32 %v583, 2147483648
    %v606 = vmul.f32 %v605, 1.442695
    %v607 = vpow.pop %v606
    %v608 = vadd.f32 %v607, 1.0
    %v609 = vrcp.pop %v608
    %v610 = vmul.f32 %v608, %v609
    %v611 = vsub.f32 1.0, %v610
    %v612 = vmul.f32 %v609, %v611
    %v613 = vadd.f32 %v609, %v612
    %vm614 = vweird.f32 %v608
    %vm615 = vweird.f32 %v609
    %vm616 = vmor %vm614, %vm615
    %v617 = vsel %vm616, %v609, %v613
    %v618 = vand.u32 2147483647, %v608
    %vm619 = vcmp.eq.f32.partialorder %v618, 8.507059e+37
    %v620 = vand.u32 %v608, 2147483648
    %v621 = vor.u32 1.1754944e-38, %v620
    %v622 = vsel %vm619, %v621, %v617
    %v623 = vmul.f32 1.0, %v622
    %v624 = vtanh.pop %v584
    %v625 = vxor.u32 %v585, 2147483648
    %v626 = vmul.f32 %v625, 1.442695
    %v627 = vpow.pop %v626
    %v628 = vadd.f32 %v627, 1.0
    %v629 = vrcp.pop %v628
    %v630 = vmul.f32 %v628, %v629
    %v631 = vsub.f32 1.0, %v630
    %v632 = vmul.f32 %v629, %v631
    %v633 = vadd.f32 %v629, %v632
    %vm634 = vweird.f32 %v628
    %vm635 = vweird.f32 %v629
    %vm636 = vmor %vm634, %vm635
    %v637 = vsel %vm636, %v629, %v633
    %v638 = vand.u32 2147483647, %v628
    %vm639 = vcmp.eq.f32.partialorder %v638, 8.507059e+37
    %v640 = vand.u32 %v628, 2147483648
    %v641 = vor.u32 1.1754944e-38, %v640
    %v642 = vsel %vm639, %v641, %v637
    %v643 = vmul.f32 1.0, %v642
    %v644 = vmul.f32 %v623, %v430
    %v645 = vmul.f32 %v604, %v624
    %v646 = vadd.f32 %v644, %v645
    %v647 = vtanh.pop %v646
    %v648 = vmul.f32 %v643, %v647
    %649 = vst [vmem:[#allocation3 + $0x8] sm:$0xff] %v648
    %v650 = vld [vmem:[#allocation2 + $0x40] sm:$0xff]
    %v651 = vld [vmem:[#allocation2 + $0x48] sm:$0xff]
    %v652 = vld [vmem:[#allocation2 + $0x50] sm:$0xff]
    %v653 = vld [vmem:[#allocation2 + $0x58] sm:$0xff]
    %v654 = vld [vmem:[#allocation6] sm:$0xff]
    %v655 = vld [vmem:[#allocation6 + $0x8] sm:$0xff]
    %v656 = vld [vmem:[#allocation6 + $0x10] sm:$0xff]
    %v657 = vld [vmem:[#allocation6 + $0x18] sm:$0xff]
    %v658 = vld [vmem:[#allocation6 + $0x20] sm:$0xff]
    %v659 = vld [vmem:[#allocation6 + $0x28] sm:$0xff]
    %v660 = vld [vmem:[#allocation6 + $0x30] sm:$0xff]
    %v661 = vld [vmem:[#allocation6 + $0x38] sm:$0xff]
    %v662 = vld [vmem:[#allocation6 + $0x40] sm:$0xff]
    %v663 = vld [vmem:[#allocation6 + $0x48] sm:$0xff]
    %v664 = vld [vmem:[#allocation6 + $0x50] sm:$0xff]
    %v665 = vld [vmem:[#allocation6 + $0x58] sm:$0xff]
    %v666 = vld [vmem:[#allocation6 + $0x60] sm:$0xff]
    %v667 = vld [vmem:[#allocation6 + $0x68] sm:$0xff]
    %v668 = vld [vmem:[#allocation6 + $0x70] sm:$0xff]
    %v669 = vld [vmem:[#allocation6 + $0x78] sm:$0xff]
    %v670 = vld [vmem:[#allocation6 + $0x80] sm:$0xff]
    %v671 = vld [vmem:[#allocation6 + $0x88] sm:$0xff]
    %v672 = vld [vmem:[#allocation6 + $0x90] sm:$0xff]
    %v673 = vld [vmem:[#allocation6 + $0x98] sm:$0xff]
    %v674 = vld [vmem:[#allocation6 + $0xa0] sm:$0xff]
    %v675 = vld [vmem:[#allocation6 + $0xa8] sm:$0xff]
    %v676 = vld [vmem:[#allocation6 + $0xb0] sm:$0xff]
    %v677 = vld [vmem:[#allocation6 + $0xb8] sm:$0xff]
    %v678 = vld [vmem:[#allocation6 + $0xc0] sm:$0xff]
    %v679 = vld [vmem:[#allocation6 + $0xc8] sm:$0xff]
    %v680 = vld [vmem:[#allocation6 + $0xd0] sm:$0xff]
    %v681 = vld [vmem:[#allocation6 + $0xd8] sm:$0xff]
    %v682 = vld [vmem:[#allocation6 + $0xe0] sm:$0xff]
    %v683 = vld [vmem:[#allocation6 + $0xe8] sm:$0xff]
    %v684 = vld [vmem:[#allocation6 + $0xf0] sm:$0xff]
    %v685 = vld [vmem:[#allocation6 + $0xf8] sm:$0xff]
    %v686 = vld [vmem:[#allocation6 + $0x100] sm:$0xff]
    %v687 = vld [vmem:[#allocation6 + $0x108] sm:$0xff]
    %v688 = vld [vmem:[#allocation6 + $0x110] sm:$0xff]
    %v689 = vld [vmem:[#allocation6 + $0x118] sm:$0xff]
    %v690 = vld [vmem:[#allocation6 + $0x120] sm:$0xff]
    %v691 = vld [vmem:[#allocation6 + $0x128] sm:$0xff]
    %v692 = vld [vmem:[#allocation6 + $0x130] sm:$0xff]
    %v693 = vld [vmem:[#allocation6 + $0x138] sm:$0xff]
    %v694 = vld [vmem:[#allocation6 + $0x140] sm:$0xff]
    %v695 = vld [vmem:[#allocation6 + $0x148] sm:$0xff]
    %v696 = vld [vmem:[#allocation6 + $0x150] sm:$0xff]
    %v697 = vld [vmem:[#allocation6 + $0x158] sm:$0xff]
    %v698 = vld [vmem:[#allocation6 + $0x160] sm:$0xff]
    %v699 = vld [vmem:[#allocation6 + $0x168] sm:$0xff]
    %v700 = vld [vmem:[#allocation6 + $0x170] sm:$0xff]
    %v701 = vld [vmem:[#allocation6 + $0x178] sm:$0xff]
    %v702 = vld [vmem:[#allocation6 + $0x180] sm:$0xff]
    %v703 = vld [vmem:[#allocation6 + $0x188] sm:$0xff]
    %v704 = vld [vmem:[#allocation6 + $0x190] sm:$0xff]
    %v705 = vld [vmem:[#allocation6 + $0x198] sm:$0xff]
    %v706 = vld [vmem:[#allocation6 + $0x1a0] sm:$0xff]
    %v707 = vld [vmem:[#allocation6 + $0x1a8] sm:$0xff]
    %v708 = vld [vmem:[#allocation6 + $0x1b0] sm:$0xff]
    %v709 = vld [vmem:[#allocation6 + $0x1b8] sm:$0xff]
    %v710 = vld [vmem:[#allocation6 + $0x1c0] sm:$0xff]
    %v711 = vld [vmem:[#allocation6 + $0x1c8] sm:$0xff]
    %v712 = vld [vmem:[#allocation6 + $0x1d0] sm:$0xff]
    %v713 = vld [vmem:[#allocation6 + $0x1d8] sm:$0xff]
    %v714 = vld [vmem:[#allocation6 + $0x1e0] sm:$0xff]
    %v715 = vld [vmem:[#allocation6 + $0x1e8] sm:$0xff]
    %v716 = vld [vmem:[#allocation6 + $0x1f0] sm:$0xff]
    %v717 = vld [vmem:[#allocation6 + $0x1f8] sm:$0xff]
    %718 = vmatpush.msra.mxu0 %v714
    %719 = vmatpush.msra.mxu0 %v710
    %720 = vmatpush.msra.mxu0 %v706
    %721 = vmatpush.msra.mxu0 %v702
    %722 = vmatpush.msra.mxu0 %v698
    %723 = vmatpush.msra.mxu0 %v694
    %724 = vmatpush.msra.mxu0 %v690
    %725 = vmatpush.msra.mxu0 %v686
    %726 = vmatpush.msra.mxu0 %v682
    %727 = vmatpush.msra.mxu0 %v678
    %728 = vmatpush.msra.mxu0 %v674
    %729 = vmatpush.msra.mxu0 %v670
    %730 = vmatpush.msra.mxu0 %v666
    %731 = vmatpush.msra.mxu0 %v662
    %732 = vmatpush.msra.mxu0 %v658
    %733 = vmatpush.msra.mxu0 %v654
    %734 = vmatmul.f32.gmra.mxu0 %v648
    %v735 = vpop.f32.mrf.mxu0
    %v736 = vadd.f32 0.0, %v735
    %737 = vdwg.mxu0
    %738 = vmatpush.msra.mxu0 %v715
    %739 = vmatpush.msra.mxu0 %v711
    %740 = vmatpush.msra.mxu0 %v707
    %741 = vmatpush.msra.mxu0 %v703
    %742 = vmatpush.msra.mxu0 %v699
    %743 = vmatpush.msra.mxu0 %v695
    %744 = vmatpush.msra.mxu0 %v691
    %745 = vmatpush.msra.mxu0 %v687
    %746 = vmatpush.msra.mxu0 %v683
    %747 = vmatpush.msra.mxu0 %v679
    %748 = vmatpush.msra.mxu0 %v675
    %749 = vmatpush.msra.mxu0 %v671
    %750 = vmatpush.msra.mxu0 %v667
    %751 = vmatpush.msra.mxu0 %v663
    %752 = vmatpush.msra.mxu0 %v659
    %753 = vmatpush.msra.mxu0 %v655
    %754 = vmatmul.f32.gmra.mxu0 %v648
    %v755 = vpop.f32.mrf.mxu0
    %v756 = vadd.f32 0.0, %v755
    %757 = vdwg.mxu0
    %758 = vmatpush.msra.mxu0 %v716
    %759 = vmatpush.msra.mxu0 %v712
    %760 = vmatpush.msra.mxu0 %v708
    %761 = vmatpush.msra.mxu0 %v704
    %762 = vmatpush.msra.mxu0 %v700
    %763 = vmatpush.msra.mxu0 %v696
    %764 = vmatpush.msra.mxu0 %v692
    %765 = vmatpush.msra.mxu0 %v688
    %766 = vmatpush.msra.mxu0 %v684
    %767 = vmatpush.msra.mxu0 %v680
    %768 = vmatpush.msra.mxu0 %v676
    %769 = vmatpush.msra.mxu0 %v672
    %770 = vmatpush.msra.mxu0 %v668
    %771 = vmatpush.msra.mxu0 %v664
    %772 = vmatpush.msra.mxu0 %v660
    %773 = vmatpush.msra.mxu0 %v656
    %774 = vmatmul.f32.gmra.mxu0 %v648
    %v775 = vpop.f32.mrf.mxu0
    %v776 = vadd.f32 0.0, %v775
    %777 = vdwg.mxu0
    %778 = vmatpush.msra.mxu0 %v717
    %779 = vmatpush.msra.mxu0 %v713
    %780 = vmatpush.msra.mxu0 %v709
    %781 = vmatpush.msra.mxu0 %v705
    %782 = vmatpush.msra.mxu0 %v701
    %783 = vmatpush.msra.mxu0 %v697
    %784 = vmatpush.msra.mxu0 %v693
    %785 = vmatpush.msra.mxu0 %v689
    %786 = vmatpush.msra.mxu0 %v685
    %787 = vmatpush.msra.mxu0 %v681
    %788 = vmatpush.msra.mxu0 %v677
    %789 = vmatpush.msra.mxu0 %v673
    %790 = vmatpush.msra.mxu0 %v669
    %791 = vmatpush.msra.mxu0 %v665
    %792 = vmatpush.msra.mxu0 %v661
    %793 = vmatpush.msra.mxu0 %v657
    %794 = vmatmul.f32.gmra.mxu0 %v648
    %v795 = vpop.f32.mrf.mxu0
    %v796 = vadd.f32 0.0, %v795
    %797 = vdwg.mxu0
    %v798 = vadd.f32 %v650, %v736
    %v799 = vadd.f32 %v651, %v756
    %v800 = vadd.f32 %v652, %v776
    %v801 = vadd.f32 %v653, %v796
    %v802 = vxor.u32 %v798, 2147483648
    %v803 = vmul.f32 %v802, 1.442695
    %v804 = vpow.pop %v803
    %v805 = vadd.f32 %v804, 1.0
    %v806 = vrcp.pop %v805
    %v807 = vmul.f32 %v805, %v806
    %v808 = vsub.f32 1.0, %v807
    %v809 = vmul.f32 %v806, %v808
    %v810 = vadd.f32 %v806, %v809
    %vm811 = vweird.f32 %v805
    %vm812 = vweird.f32 %v806
    %vm813 = vmor %vm811, %vm812
    %v814 = vsel %vm813, %v806, %v810
    %v815 = vand.u32 2147483647, %v805
    %vm816 = vcmp.eq.f32.partialorder %v815, 8.507059e+37
    %v817 = vand.u32 %v805, 2147483648
    %v818 = vor.u32 1.1754944e-38, %v817
    %v819 = vsel %vm816, %v818, %v814
    %v820 = vmul.f32 1.0, %v819
    %v821 = vxor.u32 %v799, 2147483648
    %v822 = vmul.f32 %v821, 1.442695
    %v823 = vpow.pop %v822
    %v824 = vadd.f32 %v823, 1.0
    %v825 = vrcp.pop %v824
    %v826 = vmul.f32 %v824, %v825
    %v827 = vsub.f32 1.0, %v826
    %v828 = vmul.f32 %v825, %v827
    %v829 = vadd.f32 %v825, %v828
    %vm830 = vweird.f32 %v824
    %vm831 = vweird.f32 %v825
    %vm832 = vmor %vm830, %vm831
    %v833 = vsel %vm832, %v825, %v829
    %v834 = vand.u32 2147483647, %v824
    %vm835 = vcmp.eq.f32.partialorder %v834, 8.507059e+37
    %v836 = vand.u32 %v824, 2147483648
    %v837 = vor.u32 1.1754944e-38, %v836
    %v838 = vsel %vm835, %v837, %v833
    %v839 = vmul.f32 1.0, %v838
    %v840 = vtanh.pop %v800
    %v841 = vxor.u32 %v801, 2147483648
    %v842 = vmul.f32 %v841, 1.442695
    %v843 = vpow.pop %v842
    %v844 = vadd.f32 %v843, 1.0
    %v845 = vrcp.pop %v844
    %v846 = vmul.f32 %v844, %v845
    %v847 = vsub.f32 1.0, %v846
    %v848 = vmul.f32 %v845, %v847
    %v849 = vadd.f32 %v845, %v848
    %vm850 = vweird.f32 %v844
    %vm851 = vweird.f32 %v845
    %vm852 = vmor %vm850, %vm851
    %v853 = vsel %vm852, %v845, %v849
    %v854 = vand.u32 2147483647, %v844
    %vm855 = vcmp.eq.f32.partialorder %v854, 8.507059e+37
    %v856 = vand.u32 %v844, 2147483648
    %v857 = vor.u32 1.1754944e-38, %v856
    %v858 = vsel %vm855, %v857, %v853
    %v859 = vmul.f32 1.0, %v858
    %v860 = vmul.f32 %v839, %v646
    %v861 = vmul.f32 %v820, %v840
    %v862 = vadd.f32 %v860, %v861
    %v863 = vtanh.pop %v862
    %v864 = vmul.f32 %v859, %v863
    %865 = vst [vmem:[#allocation3 + $0x10] sm:$0xff] %v864
    %v866 = vld [vmem:[#allocation2 + $0x60] sm:$0xff]
    %v867 = vld [vmem:[#allocation2 + $0x68] sm:$0xff]
    %v868 = vld [vmem:[#allocation2 + $0x70] sm:$0xff]
    %v869 = vld [vmem:[#allocation2 + $0x78] sm:$0xff]
    %v870 = vld [vmem:[#allocation6] sm:$0xff]
    %v871 = vld [vmem:[#allocation6 + $0x8] sm:$0xff]
    %v872 = vld [vmem:[#allocation6 + $0x10] sm:$0xff]
    %v873 = vld [vmem:[#allocation6 + $0x18] sm:$0xff]
    %v874 = vld [vmem:[#allocation6 + $0x20] sm:$0xff]
    %v875 = vld [vmem:[#allocation6 + $0x28] sm:$0xff]
    %v876 = vld [vmem:[#allocation6 + $0x30] sm:$0xff]
    %v877 = vld [vmem:[#allocation6 + $0x38] sm:$0xff]
    %v878 = vld [vmem:[#allocation6 + $0x40] sm:$0xff]
    %v879 = vld [vmem:[#allocation6 + $0x48] sm:$0xff]
    %v880 = vld [vmem:[#allocation6 + $0x50] sm:$0xff]
    %v881 = vld [vmem:[#allocation6 + $0x58] sm:$0xff]
    %v882 = vld [vmem:[#allocation6 + $0x60] sm:$0xff]
    %v883 = vld [vmem:[#allocation6 + $0x68] sm:$0xff]
    %v884 = vld [vmem:[#allocation6 + $0x70] sm:$0xff]
    %v885 = vld [vmem:[#allocation6 + $0x78] sm:$0xff]
    %v886 = vld [vmem:[#allocation6 + $0x80] sm:$0xff]
    %v887 = vld [vmem:[#allocation6 + $0x88] sm:$0xff]
    %v888 = vld [vmem:[#allocation6 + $0x90] sm:$0xff]
    %v889 = vld [vmem:[#allocation6 + $0x98] sm:$0xff]
    %v890 = vld [vmem:[#allocation6 + $0xa0] sm:$0xff]
    %v891 = vld [vmem:[#allocation6 + $0xa8] sm:$0xff]
    %v892 = vld [vmem:[#allocation6 + $0xb0] sm:$0xff]
    %v893 = vld [vmem:[#allocation6 + $0xb8] sm:$0xff]
    %v894 = vld [vmem:[#allocation6 + $0xc0] sm:$0xff]
    %v895 = vld [vmem:[#allocation6 + $0xc8] sm:$0xff]
    %v896 = vld [vmem:[#allocation6 + $0xd0] sm:$0xff]
    %v897 = vld [vmem:[#allocation6 + $0xd8] sm:$0xff]
    %v898 = vld [vmem:[#allocation6 + $0xe0] sm:$0xff]
    %v899 = vld [vmem:[#allocation6 + $0xe8] sm:$0xff]
    %v900 = vld [vmem:[#allocation6 + $0xf0] sm:$0xff]
    %v901 = vld [vmem:[#allocation6 + $0xf8] sm:$0xff]
    %v902 = vld [vmem:[#allocation6 + $0x100] sm:$0xff]
    %v903 = vld [vmem:[#allocation6 + $0x108] sm:$0xff]
    %v904 = vld [vmem:[#allocation6 + $0x110] sm:$0xff]
    %v905 = vld [vmem:[#allocation6 + $0x118] sm:$0xff]
    %v906 = vld [vmem:[#allocation6 + $0x120] sm:$0xff]
    %v907 = vld [vmem:[#allocation6 + $0x128] sm:$0xff]
    %v908 = vld [vmem:[#allocation6 + $0x130] sm:$0xff]
    %v909 = vld [vmem:[#allocation6 + $0x138] sm:$0xff]
    %v910 = vld [vmem:[#allocation6 + $0x140] sm:$0xff]
    %v911 = vld [vmem:[#allocation6 + $0x148] sm:$0xff]
    %v912 = vld [vmem:[#allocation6 + $0x150] sm:$0xff]
    %v913 = vld [vmem:[#allocation6 + $0x158] sm:$0xff]
    %v914 = vld [vmem:[#allocation6 + $0x160] sm:$0xff]
    %v915 = vld [vmem:[#allocation6 + $0x168] sm:$0xff]
    %v916 = vld [vmem:[#allocation6 + $0x170] sm:$0xff]
    %v917 = vld [vmem:[#allocation6 + $0x178] sm:$0xff]
    %v918 = vld [vmem:[#allocation6 + $0x180] sm:$0xff]
    %v919 = vld [vmem:[#allocation6 + $0x188] sm:$0xff]
    %v920 = vld [vmem:[#allocation6 + $0x190] sm:$0xff]
    %v921 = vld [vmem:[#allocation6 + $0x198] sm:$0xff]
    %v922 = vld [vmem:[#allocation6 + $0x1a0] sm:$0xff]
    %v923 = vld [vmem:[#allocation6 + $0x1a8] sm:$0xff]
    %v924 = vld [vmem:[#allocation6 + $0x1b0] sm:$0xff]
    %v925 = vld [vmem:[#allocation6 + $0x1b8] sm:$0xff]
    %v926 = vld [vmem:[#allocation6 + $0x1c0] sm:$0xff]
    %v927 = vld [vmem:[#allocation6 + $0x1c8] sm:$0xff]
    %v928 = vld [vmem:[#allocation6 + $0x1d0] sm:$0xff]
    %v929 = vld [vmem:[#allocation6 + $0x1d8] sm:$0xff]
    %v930 = vld [vmem:[#allocation6 + $0x1e0] sm:$0xff]
    %v931 = vld [vmem:[#allocation6 + $0x1e8] sm:$0xff]
    %v932 = vld [vmem:[#allocation6 + $0x1f0] sm:$0xff]
    %v933 = vld [vmem:[#allocation6 + $0x1f8] sm:$0xff]
    %934 = vmatpush.msra.mxu0 %v930
    %935 = vmatpush.msra.mxu0 %v926
    %936 = vmatpush.msra.mxu0 %v922
    %937 = vmatpush.msra.mxu0 %v918
    %938 = vmatpush.msra.mxu0 %v914
    %939 = vmatpush.msra.mxu0 %v910
    %940 = vmatpush.msra.mxu0 %v906
    %941 = vmatpush.msra.mxu0 %v902
    %942 = vmatpush.msra.mxu0 %v898
    %943 = vmatpush.msra.mxu0 %v894
    %944 = vmatpush.msra.mxu0 %v890
    %945 = vmatpush.msra.mxu0 %v886
    %946 = vmatpush.msra.mxu0 %v882
    %947 = vmatpush.msra.mxu0 %v878
    %948 = vmatpush.msra.mxu0 %v874
    %949 = vmatpush.msra.mxu0 %v870
    %950 = vmatmul.f32.gmra.mxu0 %v864
    %v951 = vpop.f32.mrf.mxu0
    %v952 = vadd.f32 0.0, %v951
    %953 = vdwg.mxu0
    %954 = vmatpush.msra.mxu0 %v931
    %955 = vmatpush.msra.mxu0 %v927
    %956 = vmatpush.msra.mxu0 %v923
    %957 = vmatpush.msra.mxu0 %v919
    %958 = vmatpush.msra.mxu0 %v915
    %959 = vmatpush.msra.mxu0 %v911
    %960 = vmatpush.msra.mxu0 %v907
    %961 = vmatpush.msra.mxu0 %v903
    %962 = vmatpush.msra.mxu0 %v899
    %963 = vmatpush.msra.mxu0 %v895
    %964 = vmatpush.msra.mxu0 %v891
    %965 = vmatpush.msra.mxu0 %v887
    %966 = vmatpush.msra.mxu0 %v883
    %967 = vmatpush.msra.mxu0 %v879
    %968 = vmatpush.msra.mxu0 %v875
    %969 = vmatpush.msra.mxu0 %v871
    %970 = vmatmul.f32.gmra.mxu0 %v864
    %v971 = vpop.f32.mrf.mxu0
    %v972 = vadd.f32 0.0, %v971
    %973 = vdwg.mxu0
    %974 = vmatpush.msra.mxu0 %v932
    %975 = vmatpush.msra.mxu0 %v928
    %976 = vmatpush.msra.mxu0 %v924
    %977 = vmatpush.msra.mxu0 %v920
    %978 = vmatpush.msra.mxu0 %v916
    %979 = vmatpush.msra.mxu0 %v912
    %980 = vmatpush.msra.mxu0 %v908
    %981 = vmatpush.msra.mxu0 %v904
    %982 = vmatpush.msra.mxu0 %v900
    %983 = vmatpush.msra.mxu0 %v896
    %984 = vmatpush.msra.mxu0 %v892
    %985 = vmatpush.msra.mxu0 %v888
    %986 = vmatpush.msra.mxu0 %v884
    %987 = vmatpush.msra.mxu0 %v880
    %988 = vmatpush.msra.mxu0 %v876
    %989 = vmatpush.msra.mxu0 %v872
    %990 = vmatmul.f32.gmra.mxu0 %v864
    %v991 = vpop.f32.mrf.mxu0
    %v992 = vadd.f32 0.0, %v991
    %993 = vdwg.mxu0
    %994 = vmatpush.msra.mxu0 %v933
    %995 = vmatpush.msra.mxu0 %v929
    %996 = vmatpush.msra.mxu0 %v925
    %997 = vmatpush.msra.mxu0 %v921
    %998 = vmatpush.msra.mxu0 %v917
    %999 = vmatpush.msra.mxu0 %v913
    %1000 = vmatpush.msra.mxu0 %v909
    %1001 = vmatpush.msra.mxu0 %v905
    %1002 = vmatpush.msra.mxu0 %v901
    %1003 = vmatpush.msra.mxu0 %v897
    %1004 = vmatpush.msra.mxu0 %v893
    %1005 = vmatpush.msra.mxu0 %v889
    %1006 = vmatpush.msra.mxu0 %v885
    %1007 = vmatpush.msra.mxu0 %v881
    %1008 = vmatpush.msra.mxu0 %v877
    %1009 = vmatpush.msra.mxu0 %v873
    %1010 = vmatmul.f32.gmra.mxu0 %v864
    %v1011 = vpop.f32.mrf.mxu0
    %v1012 = vadd.f32 0.0, %v1011
    %1013 = vdwg.mxu0
    %v1014 = vadd.f32 %v866, %v952
    %v1015 = vadd.f32 %v867, %v972
    %v1016 = vadd.f32 %v868, %v992
    %v1017 = vadd.f32 %v869, %v1012
    %v1018 = vxor.u32 %v1014, 2147483648
    %v1019 = vmul.f32 %v1018, 1.442695
    %v1020 = vpow.pop %v1019
    %v1021 = vadd.f32 %v1020, 1.0
    %v1022 = vrcp.pop %v1021
    %v1023 = vmul.f32 %v1021, %v1022
    %v1024 = vsub.f32 1.0, %v1023
    %v1025 = vmul.f32 %v1022, %v1024
    %v1026 = vadd.f32 %v1022, %v1025
    %vm1027 = vweird.f32 %v1021
    %vm1028 = vweird.f32 %v1022
    %vm1029 = vmor %vm1027, %vm1028
    %v1030 = vsel %vm1029, %v1022, %v1026
    %v1031 = vand.u32 2147483647, %v1021
    %vm1032 = vcmp.eq.f32.partialorder %v1031, 8.507059e+37
    %v1033 = vand.u32 %v1021, 2147483648
    %v1034 = vor.u32 1.1754944e-38, %v1033
    %v1035 = vsel %vm1032, %v1034, %v1030
    %v1036 = vmul.f32 1.0, %v1035
    %v1037 = vxor.u32 %v1015, 2147483648
    %v1038 = vmul.f32 %v1037, 1.442695
    %v1039 = vpow.pop %v1038
    %v1040 = vadd.f32 %v1039, 1.0
    %v1041 = vrcp.pop %v1040
    %v1042 = vmul.f32 %v1040, %v1041
    %v1043 = vsub.f32 1.0, %v1042
    %v1044 = vmul.f32 %v1041, %v1043
    %v1045 = vadd.f32 %v1041, %v1044
    %vm1046 = vweird.f32 %v1040
    %vm1047 = vweird.f32 %v1041
    %vm1048 = vmor %vm1046, %vm1047
    %v1049 = vsel %vm1048, %v1041, %v1045
    %v1050 = vand.u32 2147483647, %v1040
    %vm1051 = vcmp.eq.f32.partialorder %v1050, 8.507059e+37
    %v1052 = vand.u32 %v1040, 2147483648
    %v1053 = vor.u32 1.1754944e-38, %v1052
    %v1054 = vsel %vm1051, %v1053, %v1049
    %v1055 = vmul.f32 1.0, %v1054
    %v1056 = vtanh.pop %v1016
    %v1057 = vxor.u32 %v1017, 2147483648
    %v1058 = vmul.f32 %v1057, 1.442695
    %v1059 = vpow.pop %v1058
    %v1060 = vadd.f32 %v1059, 1.0
    %v1061 = vrcp.pop %v1060
    %v1062 = vmul.f32 %v1060, %v1061
    %v1063 = vsub.f32 1.0, %v1062
    %v1064 = vmul.f32 %v1061, %v1063
    %v1065 = vadd.f32 %v1061, %v1064
    %vm1066 = vweird.f32 %v1060
    %vm1067 = vweird.f32 %v1061
    %vm1068 = vmor %vm1066, %vm1067
    %v1069 = vsel %vm1068, %v1061, %v1065
    %v1070 = vand.u32 2147483647, %v1060
    %vm1071 = vcmp.eq.f32.partialorder %v1070, 8.507059e+37
    %v1072 = vand.u32 %v1060, 2147483648
    %v1073 = vor.u32 1.1754944e-38, %v1072
    %v1074 = vsel %vm1071, %v1073, %v1069
    %v1075 = vmul.f32 1.0, %v1074
    %v1076 = vmul.f32 %v1055, %v862
    %v1077 = vmul.f32 %v1036, %v1056
    %v1078 = vadd.f32 %v1076, %v1077
    %v1079 = vtanh.pop %v1078
    %v1080 = vmul.f32 %v1075, %v1079
    %1081 = vst [vmem:[#allocation3 + $0x18] sm:$0xff] %v1080
    %v1082 = vld [vmem:[#allocation2 + $0x80] sm:$0xff]
    %v1083 = vld [vmem:[#allocation2 + $0x88] sm:$0xff]
    %v1084 = vld [vmem:[#allocation2 + $0x90] sm:$0xff]
    %v1085 = vld [vmem:[#allocation2 + $0x98] sm:$0xff]
    %v1086 = vld [vmem:[#allocation6] sm:$0xff]
    %v1087 = vld [vmem:[#allocation6 + $0x8] sm:$0xff]
    %v1088 = vld [vmem:[#allocation6 + $0x10] sm:$0xff]
    %v1089 = vld [vmem:[#allocation6 + $0x18] sm:$0xff]
    %v1090 = vld [vmem:[#allocation6 + $0x20] sm:$0xff]
    %v1091 = vld [vmem:[#allocation6 + $0x28] sm:$0xff]
    %v1092 = vld [vmem:[#allocation6 + $0x30] sm:$0xff]
    %v1093 = vld [vmem:[#allocation6 + $0x38] sm:$0xff]
    %v1094 = vld [vmem:[#allocation6 + $0x40] sm:$0xff]
    %v1095 = vld [vmem:[#allocation6 + $0x48] sm:$0xff]
    %v1096 = vld [vmem:[#allocation6 + $0x50] sm:$0xff]
    %v1097 = vld [vmem:[#allocation6 + $0x58] sm:$0xff]
    %v1098 = vld [vmem:[#allocation6 + $0x60] sm:$0xff]
    %v1099 = vld [vmem:[#allocation6 + $0x68] sm:$0xff]
    %v1100 = vld [vmem:[#allocation6 + $0x70] sm:$0xff]
    %v1101 = vld [vmem:[#allocation6 + $0x78] sm:$0xff]
    %v1102 = vld [vmem:[#allocation6 + $0x80] sm:$0xff]
    %v1103 = vld [vmem:[#allocation6 + $0x88] sm:$0xff]
    %v1104 = vld [vmem:[#allocation6 + $0x90] sm:$0xff]
    %v1105 = vld [vmem:[#allocation6 + $0x98] sm:$0xff]
    %v1106 = vld [vmem:[#allocation6 + $0xa0] sm:$0xff]
    %v1107 = vld [vmem:[#allocation6 + $0xa8] sm:$0xff]
    %v1108 = vld [vmem:[#allocation6 + $0xb0] sm:$0xff]
    %v1109 = vld [vmem:[#allocation6 + $0xb8] sm:$0xff]
    %v1110 = vld [vmem:[#allocation6 + $0xc0] sm:$0xff]
    %v1111 = vld [vmem:[#allocation6 + $0xc8] sm:$0xff]
    %v1112 = vld [vmem:[#allocation6 + $0xd0] sm:$0xff]
    %v1113 = vld [vmem:[#allocation6 + $0xd8] sm:$0xff]
    %v1114 = vld [vmem:[#allocation6 + $0xe0] sm:$0xff]
    %v1115 = vld [vmem:[#allocation6 + $0xe8] sm:$0xff]
    %v1116 = vld [vmem:[#allocation6 + $0xf0] sm:$0xff]
    %v1117 = vld [vmem:[#allocation6 + $0xf8] sm:$0xff]
    %v1118 = vld [vmem:[#allocation6 + $0x100] sm:$0xff]
    %v1119 = vld [vmem:[#allocation6 + $0x108] sm:$0xff]
    %v1120 = vld [vmem:[#allocation6 + $0x110] sm:$0xff]
    %v1121 = vld [vmem:[#allocation6 + $0x118] sm:$0xff]
    %v1122 = vld [vmem:[#allocation6 + $0x120] sm:$0xff]
    %v1123 = vld [vmem:[#allocation6 + $0x128] sm:$0xff]
    %v1124 = vld [vmem:[#allocation6 + $0x130] sm:$0xff]
    %v1125 = vld [vmem:[#allocation6 + $0x138] sm:$0xff]
    %v1126 = vld [vmem:[#allocation6 + $0x140] sm:$0xff]
    %v1127 = vld [vmem:[#allocation6 + $0x148] sm:$0xff]
    %v1128 = vld [vmem:[#allocation6 + $0x150] sm:$0xff]
    %v1129 = vld [vmem:[#allocation6 + $0x158] sm:$0xff]
    %v1130 = vld [vmem:[#allocation6 + $0x160] sm:$0xff]
    %v1131 = vld [vmem:[#allocation6 + $0x168] sm:$0xff]
    %v1132 = vld [vmem:[#allocation6 + $0x170] sm:$0xff]
    %v1133 = vld [vmem:[#allocation6 + $0x178] sm:$0xff]
    %v1134 = vld [vmem:[#allocation6 + $0x180] sm:$0xff]
    %v1135 = vld [vmem:[#allocation6 + $0x188] sm:$0xff]
    %v1136 = vld [vmem:[#allocation6 + $0x190] sm:$0xff]
    %v1137 = vld [vmem:[#allocation6 + $0x198] sm:$0xff]
    %v1138 = vld [vmem:[#allocation6 + $0x1a0] sm:$0xff]
    %v1139 = vld [vmem:[#allocation6 + $0x1a8] sm:$0xff]
    %v1140 = vld [vmem:[#allocation6 + $0x1b0] sm:$0xff]
    %v1141 = vld [vmem:[#allocation6 + $0x1b8] sm:$0xff]
    %v1142 = vld [vmem:[#allocation6 + $0x1c0] sm:$0xff]
    %v1143 = vld [vmem:[#allocation6 + $0x1c8] sm:$0xff]
    %v1144 = vld [vmem:[#allocation6 + $0x1d0] sm:$0xff]
    %v1145 = vld [vmem:[#allocation6 + $0x1d8] sm:$0xff]
    %v1146 = vld [vmem:[#allocation6 + $0x1e0] sm:$0xff]
    %v1147 = vld [vmem:[#allocation6 + $0x1e8] sm:$0xff]
    %v1148 = vld [vmem:[#allocation6 + $0x1f0] sm:$0xff]
    %v1149 = vld [vmem:[#allocation6 + $0x1f8] sm:$0xff]
    %1150 = vmatpush.msra.mxu0 %v1146
    %1151 = vmatpush.msra.mxu0 %v1142
    %1152 = vmatpush.msra.mxu0 %v1138
    %1153 = vmatpush.msra.mxu0 %v1134
    %1154 = vmatpush.msra.mxu0 %v1130
    %1155 = vmatpush.msra.mxu0 %v1126
    %1156 = vmatpush.msra.mxu0 %v1122
    %1157 = vmatpush.msra.mxu0 %v1118
    %1158 = vmatpush.msra.mxu0 %v1114
    %1159 = vmatpush.msra.mxu0 %v1110
    %1160 = vmatpush.msra.mxu0 %v1106
    %1161 = vmatpush.msra.mxu0 %v1102
    %1162 = vmatpush.msra.mxu0 %v1098
    %1163 = vmatpush.msra.mxu0 %v1094
    %1164 = vmatpush.msra.mxu0 %v1090
    %1165 = vmatpush.msra.mxu0 %v1086
    %1166 = vmatmul.f32.gmra.mxu0 %v1080
    %v1167 = vpop.f32.mrf.mxu0
    %v1168 = vadd.f32 0.0, %v1167
    %1169 = vdwg.mxu0
    %1170 = vmatpush.msra.mxu0 %v1147
    %1171 = vmatpush.msra.mxu0 %v1143
    %1172 = vmatpush.msra.mxu0 %v1139
    %1173 = vmatpush.msra.mxu0 %v1135
    %1174 = vmatpush.msra.mxu0 %v1131
    %1175 = vmatpush.msra.mxu0 %v1127
    %1176 = vmatpush.msra.mxu0 %v1123
    %1177 = vmatpush.msra.mxu0 %v1119
    %1178 = vmatpush.msra.mxu0 %v1115
    %1179 = vmatpush.msra.mxu0 %v1111
    %1180 = vmatpush.msra.mxu0 %v1107
    %1181 = vmatpush.msra.mxu0 %v1103
    %1182 = vmatpush.msra.mxu0 %v1099
    %1183 = vmatpush.msra.mxu0 %v1095
    %1184 = vmatpush.msra.mxu0 %v1091
    %1185 = vmatpush.msra.mxu0 %v1087
    %1186 = vmatmul.f32.gmra.mxu0 %v1080
    %v1187 = vpop.f32.mrf.mxu0
    %v1188 = vadd.f32 0.0, %v1187
    %1189 = vdwg.mxu0
    %1190 = vmatpush.msra.mxu0 %v1148
    %1191 = vmatpush.msra.mxu0 %v1144
    %1192 = vmatpush.msra.mxu0 %v1140
    %1193 = vmatpush.msra.mxu0 %v1136
    %1194 = vmatpush.msra.mxu0 %v1132
    %1195 = vmatpush.msra.mxu0 %v1128
    %1196 = vmatpush.msra.mxu0 %v1124
    %1197 = vmatpush.msra.mxu0 %v1120
    %1198 = vmatpush.msra.mxu0 %v1116
    %1199 = vmatpush.msra.mxu0 %v1112
    %1200 = vmatpush.msra.mxu0 %v1108
    %1201 = vmatpush.msra.mxu0 %v1104
    %1202 = vmatpush.msra.mxu0 %v1100
    %1203 = vmatpush.msra.mxu0 %v1096
    %1204 = vmatpush.msra.mxu0 %v1092
    %1205 = vmatpush.msra.mxu0 %v1088
    %1206 = vmatmul.f32.gmra.mxu0 %v1080
    %v1207 = vpop.f32.mrf.mxu0
    %v1208 = vadd.f32 0.0, %v1207
    %1209 = vdwg.mxu0
    %1210 = vmatpush.msra.mxu0 %v1149
    %1211 = vmatpush.msra.mxu0 %v1145
    %1212 = vmatpush.msra.mxu0 %v1141
    %1213 = vmatpush.msra.mxu0 %v1137
    %1214 = vmatpush.msra.mxu0 %v1133
    %1215 = vmatpush.msra.mxu0 %v1129
    %1216 = vmatpush.msra.mxu0 %v1125
    %1217 = vmatpush.msra.mxu0 %v1121
    %1218 = vmatpush.msra.mxu0 %v1117
    %1219 = vmatpush.msra.mxu0 %v1113
    %1220 = vmatpush.msra.mxu0 %v1109
    %1221 = vmatpush.msra.mxu0 %v1105
    %1222 = vmatpush.msra.mxu0 %v1101
    %1223 = vmatpush.msra.mxu0 %v1097
    %1224 = vmatpush.msra.mxu0 %v1093
    %1225 = vmatpush.msra.mxu0 %v1089
    %1226 = vmatmul.f32.gmra.mxu0 %v1080
    %v1227 = vpop.f32.mrf.mxu0
    %v1228 = vadd.f32 0.0, %v1227
    %1229 = vdwg.mxu0
    %v1230 = vadd.f32 %v1082, %v1168
    %v1231 = vadd.f32 %v1083, %v1188
    %v1232 = vadd.f32 %v1084, %v1208
    %v1233 = vadd.f32 %v1085, %v1228
    %v1234 = vxor.u32 %v1230, 2147483648
    %v1235 = vmul.f32 %v1234, 1.442695
    %v1236 = vpow.pop %v1235
    %v1237 = vadd.f32 %v1236, 1.0
    %v1238 = vrcp.pop %v1237
    %v1239 = vmul.f32 %v1237, %v1238
    %v1240 = vsub.f32 1.0, %v1239
    %v1241 = vmul.f32 %v1238, %v1240
    %v1242 = vadd.f32 %v1238, %v1241
    %vm1243 = vweird.f32 %v1237
    %vm1244 = vweird.f32 %v1238
    %vm1245 = vmor %vm1243, %vm1244
    %v1246 = vsel %vm1245, %v1238, %v1242
    %v1247 = vand.u32 2147483647, %v1237
    %vm1248 = vcmp.eq.f32.partialorder %v1247, 8.507059e+37
    %v1249 = vand.u32 %v1237, 2147483648
    %v1250 = vor.u32 1.1754944e-38, %v1249
    %v1251 = vsel %vm1248, %v1250, %v1246
    %v1252 = vmul.f32 1.0, %v1251
    %v1253 = vxor.u32 %v1231, 2147483648
    %v1254 = vmul.f32 %v1253, 1.442695
    %v1255 = vpow.pop %v1254
    %v1256 = vadd.f32 %v1255, 1.0
    %v1257 = vrcp.pop %v1256
    %v1258 = vmul.f32 %v1256, %v1257
    %v1259 = vsub.f32 1.0, %v1258
    %v1260 = vmul.f32 %v1257, %v1259
    %v1261 = vadd.f32 %v1257, %v1260
    %vm1262 = vweird.f32 %v1256
    %vm1263 = vweird.f32 %v1257
    %vm1264 = vmor %vm1262, %vm1263
    %v1265 = vsel %vm1264, %v1257, %v1261
    %v1266 = vand.u32 2147483647, %v1256
    %vm1267 = vcmp.eq.f32.partialorder %v1266, 8.507059e+37
    %v1268 = vand.u32 %v1256, 2147483648
    %v1269 = vor.u32 1.1754944e-38, %v1268
    %v1270 = vsel %vm1267, %v1269, %v1265
    %v1271 = vmul.f32 1.0, %v1270
    %v1272 = vtanh.pop %v1232
    %v1273 = vxor.u32 %v1233, 2147483648
    %v1274 = vmul.f32 %v1273, 1.442695
    %v1275 = vpow.pop %v1274
    %v1276 = vadd.f32 %v1275, 1.0
    %v1277 = vrcp.pop %v1276
    %v1278 = vmul.f32 %v1276, %v1277
    %v1279 = vsub.f32 1.0, %v1278
    %v1280 = vmul.f32 %v1277, %v1279
    %v1281 = vadd.f32 %v1277, %v1280
    %vm1282 = vweird.f32 %v1276
    %vm1283 = vweird.f32 %v1277
    %vm1284 = vmor %vm1282, %vm1283
    %v1285 = vsel %vm1284, %v1277, %v1281
    %v1286 = vand.u32 2147483647, %v1276
    %vm1287 = vcmp.eq.f32.partialorder %v1286, 8.507059e+37
    %v1288 = vand.u32 %v1276, 2147483648
    %v1289 = vor.u32 1.1754944e-38, %v1288
    %v1290 = vsel %vm1287, %v1289, %v1285
    %v1291 = vmul.f32 1.0, %v1290
    %v1292 = vmul.f32 %v1271, %v1078
    %v1293 = vmul.f32 %v1252, %v1272
    %v1294 = vadd.f32 %v1292, %v1293
    %v1295 = vtanh.pop %v1294
    %v1296 = vmul.f32 %v1291, %v1295
    %1297 = vst [vmem:[#allocation3 + $0x20] sm:$0xff] %v1296
    %v1298 = vld [vmem:[#allocation2 + $0xa0] sm:$0xff]
    %v1299 = vld [vmem:[#allocation2 + $0xa8] sm:$0xff]
    %v1300 = vld [vmem:[#allocation2 + $0xb0] sm:$0xff]
    %v1301 = vld [vmem:[#allocation2 + $0xb8] sm:$0xff]
    %v1302 = vld [vmem:[#allocation6] sm:$0xff]
    %v1303 = vld [vmem:[#allocation6 + $0x8] sm:$0xff]
    %v1304 = vld [vmem:[#allocation6 + $0x10] sm:$0xff]
    %v1305 = vld [vmem:[#allocation6 + $0x18] sm:$0xff]
    %v1306 = vld [vmem:[#allocation6 + $0x20] sm:$0xff]
    %v1307 = vld [vmem:[#allocation6 + $0x28] sm:$0xff]
    %v1308 = vld [vmem:[#allocation6 + $0x30] sm:$0xff]
    %v1309 = vld [vmem:[#allocation6 + $0x38] sm:$0xff]
    %v1310 = vld [vmem:[#allocation6 + $0x40] sm:$0xff]
    %v1311 = vld [vmem:[#allocation6 + $0x48] sm:$0xff]
    %v1312 = vld [vmem:[#allocation6 + $0x50] sm:$0xff]
    %v1313 = vld [vmem:[#allocation6 + $0x58] sm:$0xff]
    %v1314 = vld [vmem:[#allocation6 + $0x60] sm:$0xff]
    %v1315 = vld [vmem:[#allocation6 + $0x68] sm:$0xff]
    %v1316 = vld [vmem:[#allocation6 + $0x70] sm:$0xff]
    %v1317 = vld [vmem:[#allocation6 + $0x78] sm:$0xff]
    %v1318 = vld [vmem:[#allocation6 + $0x80] sm:$0xff]
    %v1319 = vld [vmem:[#allocation6 + $0x88] sm:$0xff]
    %v1320 = vld [vmem:[#allocation6 + $0x90] sm:$0xff]
    %v1321 = vld [vmem:[#allocation6 + $0x98] sm:$0xff]
    %v1322 = vld [vmem:[#allocation6 + $0xa0] sm:$0xff]
    %v1323 = vld [vmem:[#allocation6 + $0xa8] sm:$0xff]
    %v1324 = vld [vmem:[#allocation6 + $0xb0] sm:$0xff]
    %v1325 = vld [vmem:[#allocation6 + $0xb8] sm:$0xff]
    %v1326 = vld [vmem:[#allocation6 + $0xc0] sm:$0xff]
    %v1327 = vld [vmem:[#allocation6 + $0xc8] sm:$0xff]
    %v1328 = vld [vmem:[#allocation6 + $0xd0] sm:$0xff]
    %v1329 = vld [vmem:[#allocation6 + $0xd8] sm:$0xff]
    %v1330 = vld [vmem:[#allocation6 + $0xe0] sm:$0xff]
    %v1331 = vld [vmem:[#allocation6 + $0xe8] sm:$0xff]
    %v1332 = vld [vmem:[#allocation6 + $0xf0] sm:$0xff]
    %v1333 = vld [vmem:[#allocation6 + $0xf8] sm:$0xff]
    %v1334 = vld [vmem:[#allocation6 + $0x100] sm:$0xff]
    %v1335 = vld [vmem:[#allocation6 + $0x108] sm:$0xff]
    %v1336 = vld [vmem:[#allocation6 + $0x110] sm:$0xff]
    %v1337 = vld [vmem:[#allocation6 + $0x118] sm:$0xff]
    %v1338 = vld [vmem:[#allocation6 + $0x120] sm:$0xff]
    %v1339 = vld [vmem:[#allocation6 + $0x128] sm:$0xff]
    %v1340 = vld [vmem:[#allocation6 + $0x130] sm:$0xff]
    %v1341 = vld [vmem:[#allocation6 + $0x138] sm:$0xff]
    %v1342 = vld [vmem:[#allocation6 + $0x140] sm:$0xff]
    %v1343 = vld [vmem:[#allocation6 + $0x148] sm:$0xff]
    %v1344 = vld [vmem:[#allocation6 + $0x150] sm:$0xff]
    %v1345 = vld [vmem:[#allocation6 + $0x158] sm:$0xff]
    %v1346 = vld [vmem:[#allocation6 + $0x160] sm:$0xff]
    %v1347 = vld [vmem:[#allocation6 + $0x168] sm:$0xff]
    %v1348 = vld [vmem:[#allocation6 + $0x170] sm:$0xff]
    %v1349 = vld [vmem:[#allocation6 + $0x178] sm:$0xff]
    %v1350 = vld [vmem:[#allocation6 + $0x180] sm:$0xff]
    %v1351 = vld [vmem:[#allocation6 + $0x188] sm:$0xff]
    %v1352 = vld [vmem:[#allocation6 + $0x190] sm:$0xff]
    %v1353 = vld [vmem:[#allocation6 + $0x198] sm:$0xff]
    %v1354 = vld [vmem:[#allocation6 + $0x1a0] sm:$0xff]
    %v1355 = vld [vmem:[#allocation6 + $0x1a8] sm:$0xff]
    %v1356 = vld [vmem:[#allocation6 + $0x1b0] sm:$0xff]
    %v1357 = vld [vmem:[#allocation6 + $0x1b8] sm:$0xff]
    %v1358 = vld [vmem:[#allocation6 + $0x1c0] sm:$0xff]
    %v1359 = vld [vmem:[#allocation6 + $0x1c8] sm:$0xff]
    %v1360 = vld [vmem:[#allocation6 + $0x1d0] sm:$0xff]
    %v1361 = vld [vmem:[#allocation6 + $0x1d8] sm:$0xff]
    %v1362 = vld [vmem:[#allocation6 + $0x1e0] sm:$0xff]
    %v1363 = vld [vmem:[#allocation6 + $0x1e8] sm:$0xff]
    %v1364 = vld [vmem:[#allocation6 + $0x1f0] sm:$0xff]
    %v1365 = vld [vmem:[#allocation6 + $0x1f8] sm:$0xff]
    %1366 = vmatpush.msra.mxu0 %v1362
    %1367 = vmatpush.msra.mxu0 %v1358
    %1368 = vmatpush.msra.mxu0 %v1354
    %1369 = vmatpush.msra.mxu0 %v1350
    %1370 = vmatpush.msra.mxu0 %v1346
    %1371 = vmatpush.msra.mxu0 %v1342
    %1372 = vmatpush.msra.mxu0 %v1338
    %1373 = vmatpush.msra.mxu0 %v1334
    %1374 = vmatpush.msra.mxu0 %v1330
    %1375 = vmatpush.msra.mxu0 %v1326
    %1376 = vmatpush.msra.mxu0 %v1322
    %1377 = vmatpush.msra.mxu0 %v1318
    %1378 = vmatpush.msra.mxu0 %v1314
    %1379 = vmatpush.msra.mxu0 %v1310
    %1380 = vmatpush.msra.mxu0 %v1306
    %1381 = vmatpush.msra.mxu0 %v1302
    %1382 = vmatmul.f32.gmra.mxu0 %v1296
    %v1383 = vpop.f32.mrf.mxu0
    %v1384 = vadd.f32 0.0, %v1383
    %1385 = vdwg.mxu0
    %1386 = vmatpush.msra.mxu0 %v1363
    %1387 = vmatpush.msra.mxu0 %v1359
    %1388 = vmatpush.msra.mxu0 %v1355
    %1389 = vmatpush.msra.mxu0 %v1351
    %1390 = vmatpush.msra.mxu0 %v1347
    %1391 = vmatpush.msra.mxu0 %v1343
    %1392 = vmatpush.msra.mxu0 %v1339
    %1393 = vmatpush.msra.mxu0 %v1335
    %1394 = vmatpush.msra.mxu0 %v1331
    %1395 = vmatpush.msra.mxu0 %v1327
    %1396 = vmatpush.msra.mxu0 %v1323
    %1397 = vmatpush.msra.mxu0 %v1319
    %1398 = vmatpush.msra.mxu0 %v1315
    %1399 = vmatpush.msra.mxu0 %v1311
    %1400 = vmatpush.msra.mxu0 %v1307
    %1401 = vmatpush.msra.mxu0 %v1303
    %1402 = vmatmul.f32.gmra.mxu0 %v1296
    %v1403 = vpop.f32.mrf.mxu0
    %v1404 = vadd.f32 0.0, %v1403
    %1405 = vdwg.mxu0
    %1406 = vmatpush.msra.mxu0 %v1364
    %1407 = vmatpush.msra.mxu0 %v1360
    %1408 = vmatpush.msra.mxu0 %v1356
    %1409 = vmatpush.msra.mxu0 %v1352
    %1410 = vmatpush.msra.mxu0 %v1348
    %1411 = vmatpush.msra.mxu0 %v1344
    %1412 = vmatpush.msra.mxu0 %v1340
    %1413 = vmatpush.msra.mxu0 %v1336
    %1414 = vmatpush.msra.mxu0 %v1332
    %1415 = vmatpush.msra.mxu0 %v1328
    %1416 = vmatpush.msra.mxu0 %v1324
    %1417 = vmatpush.msra.mxu0 %v1320
    %1418 = vmatpush.msra.mxu0 %v1316
    %1419 = vmatpush.msra.mxu0 %v1312
    %1420 = vmatpush.msra.mxu0 %v1308
    %1421 = vmatpush.msra.mxu0 %v1304
    %1422 = vmatmul.f32.gmra.mxu0 %v1296
    %v1423 = vpop.f32.mrf.mxu0
    %v1424 = vadd.f32 0.0, %v1423
    %1425 = vdwg.mxu0
    %1426 = vmatpush.msra.mxu0 %v1365
    %1427 = vmatpush.msra.mxu0 %v1361
    %1428 = vmatpush.msra.mxu0 %v1357
    %1429 = vmatpush.msra.mxu0 %v1353
    %1430 = vmatpush.msra.mxu0 %v1349
    %1431 = vmatpush.msra.mxu0 %v1345
    %1432 = vmatpush.msra.mxu0 %v1341
    %1433 = vmatpush.msra.mxu0 %v1337
    %1434 = vmatpush.msra.mxu0 %v1333
    %1435 = vmatpush.msra.mxu0 %v1329
    %1436 = vmatpush.msra.mxu0 %v1325
    %1437 = vmatpush.msra.mxu0 %v1321
    %1438 = vmatpush.msra.mxu0 %v1317
    %1439 = vmatpush.msra.mxu0 %v1313
    %1440 = vmatpush.msra.mxu0 %v1309
    %1441 = vmatpush.msra.mxu0 %v1305
    %1442 = vmatmul.f32.gmra.mxu0 %v1296
    %v1443 = vpop.f32.mrf.mxu0
    %v1444 = vadd.f32 0.0, %v1443
    %1445 = vdwg.mxu0
    %v1446 = vadd.f32 %v1298, %v1384
    %v1447 = vadd.f32 %v1299, %v1404
    %v1448 = vadd.f32 %v1300, %v1424
    %v1449 = vadd.f32 %v1301, %v1444
    %v1450 = vxor.u32 %v1446, 2147483648
    %v1451 = vmul.f32 %v1450, 1.442695
    %v1452 = vpow.pop %v1451
    %v1453 = vadd.f32 %v1452, 1.0
    %v1454 = vrcp.pop %v1453
    %v1455 = vmul.f32 %v1453, %v1454
    %v1456 = vsub.f32 1.0, %v1455
    %v1457 = vmul.f32 %v1454, %v1456
    %v1458 = vadd.f32 %v1454, %v1457
    %vm1459 = vweird.f32 %v1453
    %vm1460 = vweird.f32 %v1454
    %vm1461 = vmor %vm1459, %vm1460
    %v1462 = vsel %vm1461, %v1454, %v1458
    %v1463 = vand.u32 2147483647, %v1453
    %vm1464 = vcmp.eq.f32.partialorder %v1463, 8.507059e+37
    %v1465 = vand.u32 %v1453, 2147483648
    %v1466 = vor.u32 1.1754944e-38, %v1465
    %v1467 = vsel %vm1464, %v1466, %v1462
    %v1468 = vmul.f32 1.0, %v1467
    %v1469 = vxor.u32 %v1447, 2147483648
    %v1470 = vmul.f32 %v1469, 1.442695
    %v1471 = vpow.pop %v1470
    %v1472 = vadd.f32 %v1471, 1.0
    %v1473 = vrcp.pop %v1472
    %v1474 = vmul.f32 %v1472, %v1473
    %v1475 = vsub.f32 1.0, %v1474
    %v1476 = vmul.f32 %v1473, %v1475
    %v1477 = vadd.f32 %v1473, %v1476
    %vm1478 = vweird.f32 %v1472
    %vm1479 = vweird.f32 %v1473
    %vm1480 = vmor %vm1478, %vm1479
    %v1481 = vsel %vm1480, %v1473, %v1477
    %v1482 = vand.u32 2147483647, %v1472
    %vm1483 = vcmp.eq.f32.partialorder %v1482, 8.507059e+37
    %v1484 = vand.u32 %v1472, 2147483648
    %v1485 = vor.u32 1.1754944e-38, %v1484
    %v1486 = vsel %vm1483, %v1485, %v1481
    %v1487 = vmul.f32 1.0, %v1486
    %v1488 = vtanh.pop %v1448
    %v1489 = vxor.u32 %v1449, 2147483648
    %v1490 = vmul.f32 %v1489, 1.442695
    %v1491 = vpow.pop %v1490
    %v1492 = vadd.f32 %v1491, 1.0
    %v1493 = vrcp.pop %v1492
    %v1494 = vmul.f32 %v1492, %v1493
    %v1495 = vsub.f32 1.0, %v1494
    %v1496 = vmul.f32 %v1493, %v1495
    %v1497 = vadd.f32 %v1493, %v1496
    %vm1498 = vweird.f32 %v1492
    %vm1499 = vweird.f32 %v1493
    %vm1500 = vmor %vm1498, %vm1499
    %v1501 = vsel %vm1500, %v1493, %v1497
    %v1502 = vand.u32 2147483647, %v1492
    %vm1503 = vcmp.eq.f32.partialorder %v1502, 8.507059e+37
    %v1504 = vand.u32 %v1492, 2147483648
    %v1505 = vor.u32 1.1754944e-38, %v1504
    %v1506 = vsel %vm1503, %v1505, %v1501
    %v1507 = vmul.f32 1.0, %v1506
    %v1508 = vmul.f32 %v1487, %v1294
    %v1509 = vmul.f32 %v1468, %v1488
    %v1510 = vadd.f32 %v1508, %v1509
    %v1511 = vtanh.pop %v1510
    %v1512 = vmul.f32 %v1507, %v1511
    %1513 = vst [vmem:[#allocation3 + $0x28] sm:$0xff] %v1512
    %v1514 = vld [vmem:[#allocation2 + $0xc0] sm:$0xff]
    %v1515 = vld [vmem:[#allocation2 + $0xc8] sm:$0xff]
    %v1516 = vld [vmem:[#allocation2 + $0xd0] sm:$0xff]
    %v1517 = vld [vmem:[#allocation2 + $0xd8] sm:$0xff]
    %v1518 = vld [vmem:[#allocation6] sm:$0xff]
    %v1519 = vld [vmem:[#allocation6 + $0x8] sm:$0xff]
    %v1520 = vld [vmem:[#allocation6 + $0x10] sm:$0xff]
    %v1521 = vld [vmem:[#allocation6 + $0x18] sm:$0xff]
    %v1522 = vld [vmem:[#allocation6 + $0x20] sm:$0xff]
    %v1523 = vld [vmem:[#allocation6 + $0x28] sm:$0xff]
    %v1524 = vld [vmem:[#allocation6 + $0x30] sm:$0xff]
    %v1525 = vld [vmem:[#allocation6 + $0x38] sm:$0xff]
    %v1526 = vld [vmem:[#allocation6 + $0x40] sm:$0xff]
    %v1527 = vld [vmem:[#allocation6 + $0x48] sm:$0xff]
    %v1528 = vld [vmem:[#allocation6 + $0x50] sm:$0xff]
    %v1529 = vld [vmem:[#allocation6 + $0x58] sm:$0xff]
    %v1530 = vld [vmem:[#allocation6 + $0x60] sm:$0xff]
    %v1531 = vld [vmem:[#allocation6 + $0x68] sm:$0xff]
    %v1532 = vld [vmem:[#allocation6 + $0x70] sm:$0xff]
    %v1533 = vld [vmem:[#allocation6 + $0x78] sm:$0xff]
    %v1534 = vld [vmem:[#allocation6 + $0x80] sm:$0xff]
    %v1535 = vld [vmem:[#allocation6 + $0x88] sm:$0xff]
    %v1536 = vld [vmem:[#allocation6 + $0x90] sm:$0xff]
    %v1537 = vld [vmem:[#allocation6 + $0x98] sm:$0xff]
    %v1538 = vld [vmem:[#allocation6 + $0xa0] sm:$0xff]
    %v1539 = vld [vmem:[#allocation6 + $0xa8] sm:$0xff]
    %v1540 = vld [vmem:[#allocation6 + $0xb0] sm:$0xff]
    %v1541 = vld [vmem:[#allocation6 + $0xb8] sm:$0xff]
    %v1542 = vld [vmem:[#allocation6 + $0xc0] sm:$0xff]
    %v1543 = vld [vmem:[#allocation6 + $0xc8] sm:$0xff]
    %v1544 = vld [vmem:[#allocation6 + $0xd0] sm:$0xff]
    %v1545 = vld [vmem:[#allocation6 + $0xd8] sm:$0xff]
    %v1546 = vld [vmem:[#allocation6 + $0xe0] sm:$0xff]
    %v1547 = vld [vmem:[#allocation6 + $0xe8] sm:$0xff]
    %v1548 = vld [vmem:[#allocation6 + $0xf0] sm:$0xff]
    %v1549 = vld [vmem:[#allocation6 + $0xf8] sm:$0xff]
    %v1550 = vld [vmem:[#allocation6 + $0x100] sm:$0xff]
    %v1551 = vld [vmem:[#allocation6 + $0x108] sm:$0xff]
    %v1552 = vld [vmem:[#allocation6 + $0x110] sm:$0xff]
    %v1553 = vld [vmem:[#allocation6 + $0x118] sm:$0xff]
    %v1554 = vld [vmem:[#allocation6 + $0x120] sm:$0xff]
    %v1555 = vld [vmem:[#allocation6 + $0x128] sm:$0xff]
    %v1556 = vld [vmem:[#allocation6 + $0x130] sm:$0xff]
    %v1557 = vld [vmem:[#allocation6 + $0x138] sm:$0xff]
    %v1558 = vld [vmem:[#allocation6 + $0x140] sm:$0xff]
    %v1559 = vld [vmem:[#allocation6 + $0x148] sm:$0xff]
    %v1560 = vld [vmem:[#allocation6 + $0x150] sm:$0xff]
    %v1561 = vld [vmem:[#allocation6 + $0x158] sm:$0xff]
    %v1562 = vld [vmem:[#allocation6 + $0x160] sm:$0xff]
    %v1563 = vld [vmem:[#allocation6 + $0x168] sm:$0xff]
    %v1564 = vld [vmem:[#allocation6 + $0x170] sm:$0xff]
    %v1565 = vld [vmem:[#allocation6 + $0x178] sm:$0xff]
    %v1566 = vld [vmem:[#allocation6 + $0x180] sm:$0xff]
    %v1567 = vld [vmem:[#allocation6 + $0x188] sm:$0xff]
    %v1568 = vld [vmem:[#allocation6 + $0x190] sm:$0xff]
    %v1569 = vld [vmem:[#allocation6 + $0x198] sm:$0xff]
    %v1570 = vld [vmem:[#allocation6 + $0x1a0] sm:$0xff]
    %v1571 = vld [vmem:[#allocation6 + $0x1a8] sm:$0xff]
    %v1572 = vld [vmem:[#allocation6 + $0x1b0] sm:$0xff]
    %v1573 = vld [vmem:[#allocation6 + $0x1b8] sm:$0xff]
    %v1574 = vld [vmem:[#allocation6 + $0x1c0] sm:$0xff]
    %v1575 = vld [vmem:[#allocation6 + $0x1c8] sm:$0xff]
    %v1576 = vld [vmem:[#allocation6 + $0x1d0] sm:$0xff]
    %v1577 = vld [vmem:[#allocation6 + $0x1d8] sm:$0xff]
    %v1578 = vld [vmem:[#allocation6 + $0x1e0] sm:$0xff]
    %v1579 = vld [vmem:[#allocation6 + $0x1e8] sm:$0xff]
    %v1580 = vld [vmem:[#allocation6 + $0x1f0] sm:$0xff]
    %v1581 = vld [vmem:[#allocation6 + $0x1f8] sm:$0xff]
    %1582 = vmatpush.msra.mxu0 %v1578
    %1583 = vmatpush.msra.mxu0 %v1574
    %1584 = vmatpush.msra.mxu0 %v1570
    %1585 = vmatpush.msra.mxu0 %v1566
    %1586 = vmatpush.msra.mxu0 %v1562
    %1587 = vmatpush.msra.mxu0 %v1558
    %1588 = vmatpush.msra.mxu0 %v1554
    %1589 = vmatpush.msra.mxu0 %v1550
    %1590 = vmatpush.msra.mxu0 %v1546
    %1591 = vmatpush.msra.mxu0 %v1542
    %1592 = vmatpush.msra.mxu0 %v1538
    %1593 = vmatpush.msra.mxu0 %v1534
    %1594 = vmatpush.msra.mxu0 %v1530
    %1595 = vmatpush.msra.mxu0 %v1526
    %1596 = vmatpush.msra.mxu0 %v1522
    %1597 = vmatpush.msra.mxu0 %v1518
    %1598 = vmatmul.f32.gmra.mxu0 %v1512
    %v1599 = vpop.f32.mrf.mxu0
    %v1600 = vadd.f32 0.0, %v1599
    %1601 = vdwg.mxu0
    %1602 = vmatpush.msra.mxu0 %v1579
    %1603 = vmatpush.msra.mxu0 %v1575
    %1604 = vmatpush.msra.mxu0 %v1571
    %1605 = vmatpush.msra.mxu0 %v1567
    %1606 = vmatpush.msra.mxu0 %v1563
    %1607 = vmatpush.msra.mxu0 %v1559
    %1608 = vmatpush.msra.mxu0 %v1555
    %1609 = vmatpush.msra.mxu0 %v1551
    %1610 = vmatpush.msra.mxu0 %v1547
    %1611 = vmatpush.msra.mxu0 %v1543
    %1612 = vmatpush.msra.mxu0 %v1539
    %1613 = vmatpush.msra.mxu0 %v1535
    %1614 = vmatpush.msra.mxu0 %v1531
    %1615 = vmatpush.msra.mxu0 %v1527
    %1616 = vmatpush.msra.mxu0 %v1523
    %1617 = vmatpush.msra.mxu0 %v1519
    %1618 = vmatmul.f32.gmra.mxu0 %v1512
    %v1619 = vpop.f32.mrf.mxu0
    %v1620 = vadd.f32 0.0, %v1619
    %1621 = vdwg.mxu0
    %1622 = vmatpush.msra.mxu0 %v1580
    %1623 = vmatpush.msra.mxu0 %v1576
    %1624 = vmatpush.msra.mxu0 %v1572
    %1625 = vmatpush.msra.mxu0 %v1568
    %1626 = vmatpush.msra.mxu0 %v1564
    %1627 = vmatpush.msra.mxu0 %v1560
    %1628 = vmatpush.msra.mxu0 %v1556
    %1629 = vmatpush.msra.mxu0 %v1552
    %1630 = vmatpush.msra.mxu0 %v1548
    %1631 = vmatpush.msra.mxu0 %v1544
    %1632 = vmatpush.msra.mxu0 %v1540
    %1633 = vmatpush.msra.mxu0 %v1536
    %1634 = vmatpush.msra.mxu0 %v1532
    %1635 = vmatpush.msra.mxu0 %v1528
    %1636 = vmatpush.msra.mxu0 %v1524
    %1637 = vmatpush.msra.mxu0 %v1520
    %1638 = vmatmul.f32.gmra.mxu0 %v1512
    %v1639 = vpop.f32.mrf.mxu0
    %v1640 = vadd.f32 0.0, %v1639
    %1641 = vdwg.mxu0
    %1642 = vmatpush.msra.mxu0 %v1581
    %1643 = vmatpush.msra.mxu0 %v1577
    %1644 = vmatpush.msra.mxu0 %v1573
    %1645 = vmatpush.msra.mxu0 %v1569
    %1646 = vmatpush.msra.mxu0 %v1565
    %1647 = vmatpush.msra.mxu0 %v1561
    %1648 = vmatpush.msra.mxu0 %v1557
    %1649 = vmatpush.msra.mxu0 %v1553
    %1650 = vmatpush.msra.mxu0 %v1549
    %1651 = vmatpush.msra.mxu0 %v1545
    %1652 = vmatpush.msra.mxu0 %v1541
    %1653 = vmatpush.msra.mxu0 %v1537
    %1654 = vmatpush.msra.mxu0 %v1533
    %1655 = vmatpush.msra.mxu0 %v1529
    %1656 = vmatpush.msra.mxu0 %v1525
    %1657 = vmatpush.msra.mxu0 %v1521
    %1658 = vmatmul.f32.gmra.mxu0 %v1512
    %v1659 = vpop.f32.mrf.mxu0
    %v1660 = vadd.f32 0.0, %v1659
    %1661 = vdwg.mxu0
    %v1662 = vadd.f32 %v1514, %v1600
    %v1663 = vadd.f32 %v1515, %v1620
    %v1664 = vadd.f32 %v1516, %v1640
    %v1665 = vadd.f32 %v1517, %v1660
    %v1666 = vxor.u32 %v1662, 2147483648
    %v1667 = vmul.f32 %v1666, 1.442695
    %v1668 = vpow.pop %v1667
    %v1669 = vadd.f32 %v1668, 1.0
    %v1670 = vrcp.pop %v1669
    %v1671 = vmul.f32 %v1669, %v1670
    %v1672 = vsub.f32 1.0, %v1671
    %v1673 = vmul.f32 %v1670, %v1672
    %v1674 = vadd.f32 %v1670, %v1673
    %vm1675 = vweird.f32 %v1669
    %vm1676 = vweird.f32 %v1670
    %vm1677 = vmor %vm1675, %vm1676
    %v1678 = vsel %vm1677, %v1670, %v1674
    %v1679 = vand.u32 2147483647, %v1669
    %vm1680 = vcmp.eq.f32.partialorder %v1679, 8.507059e+37
    %v1681 = vand.u32 %v1669, 2147483648
    %v1682 = vor.u32 1.1754944e-38, %v1681
    %v1683 = vsel %vm1680, %v1682, %v1678
    %v1684 = vmul.f32 1.0, %v1683
    %v1685 = vxor.u32 %v1663, 2147483648
    %v1686 = vmul.f32 %v1685, 1.442695
    %v1687 = vpow.pop %v1686
    %v1688 = vadd.f32 %v1687, 1.0
    %v1689 = vrcp.pop %v1688
    %v1690 = vmul.f32 %v1688, %v1689
    %v1691 = vsub.f32 1.0, %v1690
    %v1692 = vmul.f32 %v1689, %v1691
    %v1693 = vadd.f32 %v1689, %v1692
    %vm1694 = vweird.f32 %v1688
    %vm1695 = vweird.f32 %v1689
    %vm1696 = vmor %vm1694, %vm1695
    %v1697 = vsel %vm1696, %v1689, %v1693
    %v1698 = vand.u32 2147483647, %v1688
    %vm1699 = vcmp.eq.f32.partialorder %v1698, 8.507059e+37
    %v1700 = vand.u32 %v1688, 2147483648
    %v1701 = vor.u32 1.1754944e-38, %v1700
    %v1702 = vsel %vm1699, %v1701, %v1697
    %v1703 = vmul.f32 1.0, %v1702
    %v1704 = vtanh.pop %v1664
    %v1705 = vxor.u32 %v1665, 2147483648
    %v1706 = vmul.f32 %v1705, 1.442695
    %v1707 = vpow.pop %v1706
    %v1708 = vadd.f32 %v1707, 1.0
    %v1709 = vrcp.pop %v1708
    %v1710 = vmul.f32 %v1708, %v1709
    %v1711 = vsub.f32 1.0, %v1710
    %v1712 = vmul.f32 %v1709, %v1711
    %v1713 = vadd.f32 %v1709, %v1712
    %vm1714 = vweird.f32 %v1708
    %vm1715 = vweird.f32 %v1709
    %vm1716 = vmor %vm1714, %vm1715
    %v1717 = vsel %vm1716, %v1709, %v1713
    %v1718 = vand.u32 2147483647, %v1708
    %vm1719 = vcmp.eq.f32.partialorder %v1718, 8.507059e+37
    %v1720 = vand.u32 %v1708, 2147483648
    %v1721 = vor.u32 1.1754944e-38, %v1720
    %v1722 = vsel %vm1719, %v1721, %v1717
    %v1723 = vmul.f32 1.0, %v1722
    %v1724 = vmul.f32 %v1703, %v1510
    %v1725 = vmul.f32 %v1684, %v1704
    %v1726 = vadd.f32 %v1724, %v1725
    %v1727 = vtanh.pop %v1726
    %v1728 = vmul.f32 %v1723, %v1727
    %1729 = vst [vmem:[#allocation3 + $0x30] sm:$0xff] %v1728
    %v1730 = vld [vmem:[#allocation2 + $0xe0] sm:$0xff]
    %v1731 = vld [vmem:[#allocation2 + $0xe8] sm:$0xff]
    %v1732 = vld [vmem:[#allocation2 + $0xf0] sm:$0xff]
    %v1733 = vld [vmem:[#allocation2 + $0xf8] sm:$0xff]
    %v1734 = vld [vmem:[#allocation6] sm:$0xff]
    %v1735 = vld [vmem:[#allocation6 + $0x8] sm:$0xff]
    %v1736 = vld [vmem:[#allocation6 + $0x10] sm:$0xff]
    %v1737 = vld [vmem:[#allocation6 + $0x18] sm:$0xff]
    %v1738 = vld [vmem:[#allocation6 + $0x20] sm:$0xff]
    %v1739 = vld [vmem:[#allocation6 + $0x28] sm:$0xff]
    %v1740 = vld [vmem:[#allocation6 + $0x30] sm:$0xff]
    %v1741 = vld [vmem:[#allocation6 + $0x38] sm:$0xff]
    %v1742 = vld [vmem:[#allocation6 + $0x40] sm:$0xff]
    %v1743 = vld [vmem:[#allocation6 + $0x48] sm:$0xff]
    %v1744 = vld [vmem:[#allocation6 + $0x50] sm:$0xff]
    %v1745 = vld [vmem:[#allocation6 + $0x58] sm:$0xff]
    %v1746 = vld [vmem:[#allocation6 + $0x60] sm:$0xff]
    %v1747 = vld [vmem:[#allocation6 + $0x68] sm:$0xff]
    %v1748 = vld [vmem:[#allocation6 + $0x70] sm:$0xff]
    %v1749 = vld [vmem:[#allocation6 + $0x78] sm:$0xff]
    %v1750 = vld [vmem:[#allocation6 + $0x80] sm:$0xff]
    %v1751 = vld [vmem:[#allocation6 + $0x88] sm:$0xff]
    %v1752 = vld [vmem:[#allocation6 + $0x90] sm:$0xff]
    %v1753 = vld [vmem:[#allocation6 + $0x98] sm:$0xff]
    %v1754 = vld [vmem:[#allocation6 + $0xa0] sm:$0xff]
    %v1755 = vld [vmem:[#allocation6 + $0xa8] sm:$0xff]
    %v1756 = vld [vmem:[#allocation6 + $0xb0] sm:$0xff]
    %v1757 = vld [vmem:[#allocation6 + $0xb8] sm:$0xff]
    %v1758 = vld [vmem:[#allocation6 + $0xc0] sm:$0xff]
    %v1759 = vld [vmem:[#allocation6 + $0xc8] sm:$0xff]
    %v1760 = vld [vmem:[#allocation6 + $0xd0] sm:$0xff]
    %v1761 = vld [vmem:[#allocation6 + $0xd8] sm:$0xff]
    %v1762 = vld [vmem:[#allocation6 + $0xe0] sm:$0xff]
    %v1763 = vld [vmem:[#allocation6 + $0xe8] sm:$0xff]
    %v1764 = vld [vmem:[#allocation6 + $0xf0] sm:$0xff]
    %v1765 = vld [vmem:[#allocation6 + $0xf8] sm:$0xff]
    %v1766 = vld [vmem:[#allocation6 + $0x100] sm:$0xff]
    %v1767 = vld [vmem:[#allocation6 + $0x108] sm:$0xff]
    %v1768 = vld [vmem:[#allocation6 + $0x110] sm:$0xff]
    %v1769 = vld [vmem:[#allocation6 + $0x118] sm:$0xff]
    %v1770 = vld [vmem:[#allocation6 + $0x120] sm:$0xff]
    %v1771 = vld [vmem:[#allocation6 + $0x128] sm:$0xff]
    %v1772 = vld [vmem:[#allocation6 + $0x130] sm:$0xff]
    %v1773 = vld [vmem:[#allocation6 + $0x138] sm:$0xff]
    %v1774 = vld [vmem:[#allocation6 + $0x140] sm:$0xff]
    %v1775 = vld [vmem:[#allocation6 + $0x148] sm:$0xff]
    %v1776 = vld [vmem:[#allocation6 + $0x150] sm:$0xff]
    %v1777 = vld [vmem:[#allocation6 + $0x158] sm:$0xff]
    %v1778 = vld [vmem:[#allocation6 + $0x160] sm:$0xff]
    %v1779 = vld [vmem:[#allocation6 + $0x168] sm:$0xff]
    %v1780 = vld [vmem:[#allocation6 + $0x170] sm:$0xff]
    %v1781 = vld [vmem:[#allocation6 + $0x178] sm:$0xff]
    %v1782 = vld [vmem:[#allocation6 + $0x180] sm:$0xff]
    %v1783 = vld [vmem:[#allocation6 + $0x188] sm:$0xff]
    %v1784 = vld [vmem:[#allocation6 + $0x190] sm:$0xff]
    %v1785 = vld [vmem:[#allocation6 + $0x198] sm:$0xff]
    %v1786 = vld [vmem:[#allocation6 + $0x1a0] sm:$0xff]
    %v1787 = vld [vmem:[#allocation6 + $0x1a8] sm:$0xff]
    %v1788 = vld [vmem:[#allocation6 + $0x1b0] sm:$0xff]
    %v1789 = vld [vmem:[#allocation6 + $0x1b8] sm:$0xff]
    %v1790 = vld [vmem:[#allocation6 + $0x1c0] sm:$0xff]
    %v1791 = vld [vmem:[#allocation6 + $0x1c8] sm:$0xff]
    %v1792 = vld [vmem:[#allocation6 + $0x1d0] sm:$0xff]
    %v1793 = vld [vmem:[#allocation6 + $0x1d8] sm:$0xff]
    %v1794 = vld [vmem:[#allocation6 + $0x1e0] sm:$0xff]
    %v1795 = vld [vmem:[#allocation6 + $0x1e8] sm:$0xff]
    %v1796 = vld [vmem:[#allocation6 + $0x1f0] sm:$0xff]
    %v1797 = vld [vmem:[#allocation6 + $0x1f8] sm:$0xff]
    %1798 = vmatpush.msra.mxu0 %v1794
    %1799 = vmatpush.msra.mxu0 %v1790
    %1800 = vmatpush.msra.mxu0 %v1786
    %1801 = vmatpush.msra.mxu0 %v1782
    %1802 = vmatpush.msra.mxu0 %v1778
    %1803 = vmatpush.msra.mxu0 %v1774
    %1804 = vmatpush.msra.mxu0 %v1770
    %1805 = vmatpush.msra.mxu0 %v1766
    %1806 = vmatpush.msra.mxu0 %v1762
    %1807 = vmatpush.msra.mxu0 %v1758
    %1808 = vmatpush.msra.mxu0 %v1754
    %1809 = vmatpush.msra.mxu0 %v1750
    %1810 = vmatpush.msra.mxu0 %v1746
    %1811 = vmatpush.msra.mxu0 %v1742
    %1812 = vmatpush.msra.mxu0 %v1738
    %1813 = vmatpush.msra.mxu0 %v1734
    %1814 = vmatmul.f32.gmra.mxu0 %v1728
    %v1815 = vpop.f32.mrf.mxu0
    %v1816 = vadd.f32 0.0, %v1815
    %1817 = vdwg.mxu0
    %1818 = vmatpush.msra.mxu0 %v1795
    %1819 = vmatpush.msra.mxu0 %v1791
    %1820 = vmatpush.msra.mxu0 %v1787
    %1821 = vmatpush.msra.mxu0 %v1783
    %1822 = vmatpush.msra.mxu0 %v1779
    %1823 = vmatpush.msra.mxu0 %v1775
    %1824 = vmatpush.msra.mxu0 %v1771
    %1825 = vmatpush.msra.mxu0 %v1767
    %1826 = vmatpush.msra.mxu0 %v1763
    %1827 = vmatpush.msra.mxu0 %v1759
    %1828 = vmatpush.msra.mxu0 %v1755
    %1829 = vmatpush.msra.mxu0 %v1751
    %1830 = vmatpush.msra.mxu0 %v1747
    %1831 = vmatpush.msra.mxu0 %v1743
    %1832 = vmatpush.msra.mxu0 %v1739
    %1833 = vmatpush.msra.mxu0 %v1735
    %1834 = vmatmul.f32.gmra.mxu0 %v1728
    %v1835 = vpop.f32.mrf.mxu0
    %v1836 = vadd.f32 0.0, %v1835
    %1837 = vdwg.mxu0
    %1838 = vmatpush.msra.mxu0 %v1796
    %1839 = vmatpush.msra.mxu0 %v1792
    %1840 = vmatpush.msra.mxu0 %v1788
    %1841 = vmatpush.msra.mxu0 %v1784
    %1842 = vmatpush.msra.mxu0 %v1780
    %1843 = vmatpush.msra.mxu0 %v1776
    %1844 = vmatpush.msra.mxu0 %v1772
    %1845 = vmatpush.msra.mxu0 %v1768
    %1846 = vmatpush.msra.mxu0 %v1764
    %1847 = vmatpush.msra.mxu0 %v1760
    %1848 = vmatpush.msra.mxu0 %v1756
    %1849 = vmatpush.msra.mxu0 %v1752
    %1850 = vmatpush.msra.mxu0 %v1748
    %1851 = vmatpush.msra.mxu0 %v1744
    %1852 = vmatpush.msra.mxu0 %v1740
    %1853 = vmatpush.msra.mxu0 %v1736
    %1854 = vmatmul.f32.gmra.mxu0 %v1728
    %v1855 = vpop.f32.mrf.mxu0
    %v1856 = vadd.f32 0.0, %v1855
    %1857 = vdwg.mxu0
    %1858 = vmatpush.msra.mxu0 %v1797
    %1859 = vmatpush.msra.mxu0 %v1793
    %1860 = vmatpush.msra.mxu0 %v1789
    %1861 = vmatpush.msra.mxu0 %v1785
    %1862 = vmatpush.msra.mxu0 %v1781
    %1863 = vmatpush.msra.mxu0 %v1777
    %1864 = vmatpush.msra.mxu0 %v1773
    %1865 = vmatpush.msra.mxu0 %v1769
    %1866 = vmatpush.msra.mxu0 %v1765
    %1867 = vmatpush.msra.mxu0 %v1761
    %1868 = vmatpush.msra.mxu0 %v1757
    %1869 = vmatpush.msra.mxu0 %v1753
    %1870 = vmatpush.msra.mxu0 %v1749
    %1871 = vmatpush.msra.mxu0 %v1745
    %1872 = vmatpush.msra.mxu0 %v1741
    %1873 = vmatpush.msra.mxu0 %v1737
    %1874 = vmatmul.f32.gmra.mxu0 %v1728
    %v1875 = vpop.f32.mrf.mxu0
    %v1876 = vadd.f32 0.0, %v1875
    %1877 = vdwg.mxu0
    %v1878 = vadd.f32 %v1730, %v1816
    %v1879 = vadd.f32 %v1731, %v1836
    %v1880 = vadd.f32 %v1732, %v1856
    %v1881 = vadd.f32 %v1733, %v1876
    %v1882 = vxor.u32 %v1878, 2147483648
    %v1883 = vmul.f32 %v1882, 1.442695
    %v1884 = vpow.pop %v1883
    %v1885 = vadd.f32 %v1884, 1.0
    %v1886 = vrcp.pop %v1885
    %v1887 = vmul.f32 %v1885, %v1886
    %v1888 = vsub.f32 1.0, %v1887
    %v1889 = vmul.f32 %v1886, %v1888
    %v1890 = vadd.f32 %v1886, %v1889
    %vm1891 = vweird.f32 %v1885
    %vm1892 = vweird.f32 %v1886
    %vm1893 = vmor %vm1891, %vm1892
    %v1894 = vsel %vm1893, %v1886, %v1890
    %v1895 = vand.u32 2147483647, %v1885
    %vm1896 = vcmp.eq.f32.partialorder %v1895, 8.507059e+37
    %v1897 = vand.u32 %v1885, 2147483648
    %v1898 = vor.u32 1.1754944e-38, %v1897
    %v1899 = vsel %vm1896, %v1898, %v1894
    %v1900 = vmul.f32 1.0, %v1899
    %v1901 = vxor.u32 %v1879, 2147483648
    %v1902 = vmul.f32 %v1901, 1.442695
    %v1903 = vpow.pop %v1902
    %v1904 = vadd.f32 %v1903, 1.0
    %v1905 = vrcp.pop %v1904
    %v1906 = vmul.f32 %v1904, %v1905
    %v1907 = vsub.f32 1.0, %v1906
    %v1908 = vmul.f32 %v1905, %v1907
    %v1909 = vadd.f32 %v1905, %v1908
    %vm1910 = vweird.f32 %v1904
    %vm1911 = vweird.f32 %v1905
    %vm1912 = vmor %vm1910, %vm1911
    %v1913 = vsel %vm1912, %v1905, %v1909
    %v1914 = vand.u32 2147483647, %v1904
    %vm1915 = vcmp.eq.f32.partialorder %v1914, 8.507059e+37
    %v1916 = vand.u32 %v1904, 2147483648
    %v1917 = vor.u32 1.1754944e-38, %v1916
    %v1918 = vsel %vm1915, %v1917, %v1913
    %v1919 = vmul.f32 1.0, %v1918
    %v1920 = vtanh.pop %v1880
    %v1921 = vxor.u32 %v1881, 2147483648
    %v1922 = vmul.f32 %v1921, 1.442695
    %v1923 = vpow.pop %v1922
    %v1924 = vadd.f32 %v1923, 1.0
    %v1925 = vrcp.pop %v1924
    %v1926 = vmul.f32 %v1924, %v1925
    %v1927 = vsub.f32 1.0, %v1926
    %v1928 = vmul.f32 %v1925, %v1927
    %v1929 = vadd.f32 %v1925, %v1928
    %vm1930 = vweird.f32 %v1924
    %vm1931 = vweird.f32 %v1925
    %vm1932 = vmor %vm1930, %vm1931
    %v1933 = vsel %vm1932, %v1925, %v1929
    %v1934 = vand.u32 2147483647, %v1924
    %vm1935 = vcmp.eq.f32.partialorder %v1934, 8.507059e+37
    %v1936 = vand.u32 %v1924, 2147483648
    %v1937 = vor.u32 1.1754944e-38, %v1936
    %v1938 = vsel %vm1935, %v1937, %v1933
    %v1939 = vmul.f32 1.0, %v1938
    %v1940 = vmul.f32 %v1919, %v1726
    %v1941 = vmul.f32 %v1900, %v1920
    %v1942 = vadd.f32 %v1940, %v1941
    %v1943 = vtanh.pop %v1942
    %v1944 = vmul.f32 %v1939, %v1943
    %1945 = vst [vmem:[#allocation3 + $0x38] sm:$0xff] %v1944
    %v1946 = vld [vmem:[#allocation3] sm:$0xff]
    %v1947 = vld [vmem:[#allocation3 + $0x8] sm:$0xff]
    %v1948 = vld [vmem:[#allocation3 + $0x10] sm:$0xff]
    %v1949 = vld [vmem:[#allocation3 + $0x18] sm:$0xff]
    %v1950 = vld [vmem:[#allocation3 + $0x20] sm:$0xff]
    %v1951 = vld [vmem:[#allocation3 + $0x28] sm:$0xff]
    %v1952 = vld [vmem:[#allocation3 + $0x30] sm:$0xff]
    %v1953 = vld [vmem:[#allocation3 + $0x38] sm:$0xff]
    %v1954 = vld [vmem:[#allocation8] sm:$0xff]
    %v1955 = vld [vmem:[#allocation8 + $0x8] sm:$0xff]
    %v1956 = vld [vmem:[#allocation8 + $0x10] sm:$0xff]
    %v1957 = vld [vmem:[#allocation8 + $0x18] sm:$0xff]
    %v1958 = vld [vmem:[#allocation8 + $0x20] sm:$0xff]
    %v1959 = vld [vmem:[#allocation8 + $0x28] sm:$0xff]
    %v1960 = vld [vmem:[#allocation8 + $0x30] sm:$0xff]
    %v1961 = vld [vmem:[#allocation8 + $0x38] sm:$0xff]
    %v1962 = vld [vmem:[#allocation8 + $0x40] sm:$0xff]
    %v1963 = vld [vmem:[#allocation8 + $0x48] sm:$0xff]
    %v1964 = vld [vmem:[#allocation8 + $0x50] sm:$0xff]
    %v1965 = vld [vmem:[#allocation8 + $0x58] sm:$0xff]
    %v1966 = vld [vmem:[#allocation8 + $0x60] sm:$0xff]
    %v1967 = vld [vmem:[#allocation8 + $0x68] sm:$0xff]
    %v1968 = vld [vmem:[#allocation8 + $0x70] sm:$0xff]
    %v1969 = vld [vmem:[#allocation8 + $0x78] sm:$0xff]
    %v1970 = vld [vmem:[#allocation8 + $0x80] sm:$0xff]
    %v1971 = vld [vmem:[#allocation8 + $0x88] sm:$0xff]
    %v1972 = vld [vmem:[#allocation8 + $0x90] sm:$0xff]
    %v1973 = vld [vmem:[#allocation8 + $0x98] sm:$0xff]
    %v1974 = vld [vmem:[#allocation8 + $0xa0] sm:$0xff]
    %v1975 = vld [vmem:[#allocation8 + $0xa8] sm:$0xff]
    %v1976 = vld [vmem:[#allocation8 + $0xb0] sm:$0xff]
    %v1977 = vld [vmem:[#allocation8 + $0xb8] sm:$0xff]
    %v1978 = vld [vmem:[#allocation8 + $0xc0] sm:$0xff]
    %v1979 = vld [vmem:[#allocation8 + $0xc8] sm:$0xff]
    %v1980 = vld [vmem:[#allocation8 + $0xd0] sm:$0xff]
    %v1981 = vld [vmem:[#allocation8 + $0xd8] sm:$0xff]
    %v1982 = vld [vmem:[#allocation8 + $0xe0] sm:$0xff]
    %v1983 = vld [vmem:[#allocation8 + $0xe8] sm:$0xff]
    %v1984 = vld [vmem:[#allocation8 + $0xf0] sm:$0xff]
    %v1985 = vld [vmem:[#allocation8 + $0xf8] sm:$0xff]
    %v1986 = vld [vmem:[#allocation8 + $0x100] sm:$0xff]
    %v1987 = vld [vmem:[#allocation8 + $0x108] sm:$0xff]
    %v1988 = vld [vmem:[#allocation8 + $0x110] sm:$0xff]
    %v1989 = vld [vmem:[#allocation8 + $0x118] sm:$0xff]
    %v1990 = vld [vmem:[#allocation8 + $0x120] sm:$0xff]
    %v1991 = vld [vmem:[#allocation8 + $0x128] sm:$0xff]
    %v1992 = vld [vmem:[#allocation8 + $0x130] sm:$0xff]
    %v1993 = vld [vmem:[#allocation8 + $0x138] sm:$0xff]
    %v1994 = vld [vmem:[#allocation8 + $0x140] sm:$0xff]
    %v1995 = vld [vmem:[#allocation8 + $0x148] sm:$0xff]
    %v1996 = vld [vmem:[#allocation8 + $0x150] sm:$0xff]
    %v1997 = vld [vmem:[#allocation8 + $0x158] sm:$0xff]
    %v1998 = vld [vmem:[#allocation8 + $0x160] sm:$0xff]
    %v1999 = vld [vmem:[#allocation8 + $0x168] sm:$0xff]
    %v2000 = vld [vmem:[#allocation8 + $0x170] sm:$0xff]
    %v2001 = vld [vmem:[#allocation8 + $0x178] sm:$0xff]
    %v2002 = vld [vmem:[#allocation8 + $0x180] sm:$0xff]
    %v2003 = vld [vmem:[#allocation8 + $0x188] sm:$0xff]
    %v2004 = vld [vmem:[#allocation8 + $0x190] sm:$0xff]
    %v2005 = vld [vmem:[#allocation8 + $0x198] sm:$0xff]
    %v2006 = vld [vmem:[#allocation8 + $0x1a0] sm:$0xff]
    %v2007 = vld [vmem:[#allocation8 + $0x1a8] sm:$0xff]
    %v2008 = vld [vmem:[#allocation8 + $0x1b0] sm:$0xff]
    %v2009 = vld [vmem:[#allocation8 + $0x1b8] sm:$0xff]
    %v2010 = vld [vmem:[#allocation8 + $0x1c0] sm:$0xff]
    %v2011 = vld [vmem:[#allocation8 + $0x1c8] sm:$0xff]
    %v2012 = vld [vmem:[#allocation8 + $0x1d0] sm:$0xff]
    %v2013 = vld [vmem:[#allocation8 + $0x1d8] sm:$0xff]
    %v2014 = vld [vmem:[#allocation8 + $0x1e0] sm:$0xff]
    %v2015 = vld [vmem:[#allocation8 + $0x1e8] sm:$0xff]
    %v2016 = vld [vmem:[#allocation8 + $0x1f0] sm:$0xff]
    %v2017 = vld [vmem:[#allocation8 + $0x1f8] sm:$0xff]
    %v2018 = vld [vmem:[%s6] sm:$0xf]
    %v2020 = vperm.slane %v2018, 0
    %v2021 = vperm.slane %v2018, 1
    %v2022 = vperm.slane %v2018, 2
    %v2023 = vperm.slane %v2018, 3
    %2028 = vmatpush.msra.mxu0 %v2014
    %2029 = vmatpush.msra.mxu0 %v2010
    %2030 = vmatpush.msra.mxu0 %v2006
    %2031 = vmatpush.msra.mxu0 %v2002
    %2032 = vmatpush.msra.mxu0 %v1998
    %2033 = vmatpush.msra.mxu0 %v1994
    %2034 = vmatpush.msra.mxu0 %v1990
    %2035 = vmatpush.msra.mxu0 %v1986
    %2036 = vmatpush.msra.mxu0 %v1982
    %2037 = vmatpush.msra.mxu0 %v1978
    %2038 = vmatpush.msra.mxu0 %v1974
    %2039 = vmatpush.msra.mxu0 %v1970
    %2040 = vmatpush.msra.mxu0 %v1966
    %2041 = vmatpush.msra.mxu0 %v1962
    %2042 = vmatpush.msra.mxu0 %v1958
    %2043 = vmatpush.msra.mxu0 %v1954
    %2044 = vmatmul.f32.gmra.mxu0 %v1946
    %v2045 = vpop.f32.mrf.mxu0
    %v2046 = vadd.f32 %v2020, %v2045
    %2047 = vmatmul.f32.gmra.mxu0 %v1947
    %v2048 = vpop.f32.mrf.mxu0
    %v2049 = vadd.f32 %v2020, %v2048
    %2050 = vmatmul.f32.gmra.mxu0 %v1948
    %v2051 = vpop.f32.mrf.mxu0
    %v2052 = vadd.f32 %v2020, %v2051
    %2053 = vmatmul.f32.gmra.mxu0 %v1949
    %v2054 = vpop.f32.mrf.mxu0
    %v2055 = vadd.f32 %v2020, %v2054
    %2056 = vmatmul.f32.gmra.mxu0 %v1950
    %v2057 = vpop.f32.mrf.mxu0
    %v2058 = vadd.f32 %v2020, %v2057
    %2059 = vmatmul.f32.gmra.mxu0 %v1951
    %v2060 = vpop.f32.mrf.mxu0
    %v2061 = vadd.f32 %v2020, %v2060
    %2062 = vmatmul.f32.gmra.mxu0 %v1952
    %v2063 = vpop.f32.mrf.mxu0
    %v2064 = vadd.f32 %v2020, %v2063
    %2065 = vmatmul.f32.gmra.mxu0 %v1953
    %v2066 = vpop.f32.mrf.mxu0
    %v2067 = vadd.f32 %v2020, %v2066
    %2068 = vdwg.mxu0
    %2069 = vmatpush.msra.mxu0 %v2015
    %2070 = vmatpush.msra.mxu0 %v2011
    %2071 = vmatpush.msra.mxu0 %v2007
    %2072 = vmatpush.msra.mxu0 %v2003
    %2073 = vmatpush.msra.mxu0 %v1999
    %2074 = vmatpush.msra.mxu0 %v1995
    %2075 = vmatpush.msra.mxu0 %v1991
    %2076 = vmatpush.msra.mxu0 %v1987
    %2077 = vmatpush.msra.mxu0 %v1983
    %2078 = vmatpush.msra.mxu0 %v1979
    %2079 = vmatpush.msra.mxu0 %v1975
    %2080 = vmatpush.msra.mxu0 %v1971
    %2081 = vmatpush.msra.mxu0 %v1967
    %2082 = vmatpush.msra.mxu0 %v1963
    %2083 = vmatpush.msra.mxu0 %v1959
    %2084 = vmatpush.msra.mxu0 %v1955
    %2085 = vmatmul.f32.gmra.mxu0 %v1946
    %v2086 = vpop.f32.mrf.mxu0
    %v2087 = vadd.f32 %v2021, %v2086
    %2088 = vmatmul.f32.gmra.mxu0 %v1947
    %v2089 = vpop.f32.mrf.mxu0
    %v2090 = vadd.f32 %v2021, %v2089
    %2091 = vmatmul.f32.gmra.mxu0 %v1948
    %v2092 = vpop.f32.mrf.mxu0
    %v2093 = vadd.f32 %v2021, %v2092
    %2094 = vmatmul.f32.gmra.mxu0 %v1949
    %v2095 = vpop.f32.mrf.mxu0
    %v2096 = vadd.f32 %v2021, %v2095
    %2097 = vmatmul.f32.gmra.mxu0 %v1950
    %v2098 = vpop.f32.mrf.mxu0
    %v2099 = vadd.f32 %v2021, %v2098
    %2100 = vmatmul.f32.gmra.mxu0 %v1951
    %v2101 = vpop.f32.mrf.mxu0
    %v2102 = vadd.f32 %v2021, %v2101
    %2103 = vmatmul.f32.gmra.mxu0 %v1952
    %v2104 = vpop.f32.mrf.mxu0
    %v2105 = vadd.f32 %v2021, %v2104
    %2106 = vmatmul.f32.gmra.mxu0 %v1953
    %v2107 = vpop.f32.mrf.mxu0
    %v2108 = vadd.f32 %v2021, %v2107
    %2109 = vdwg.mxu0
    %2110 = vmatpush.msra.mxu0 %v2016
    %2111 = vmatpush.msra.mxu0 %v2012
    %2112 = vmatpush.msra.mxu0 %v2008
    %2113 = vmatpush.msra.mxu0 %v2004
    %2114 = vmatpush.msra.mxu0 %v2000
    %2115 = vmatpush.msra.mxu0 %v1996
    %2116 = vmatpush.msra.mxu0 %v1992
    %2117 = vmatpush.msra.mxu0 %v1988
    %2118 = vmatpush.msra.mxu0 %v1984
    %2119 = vmatpush.msra.mxu0 %v1980
    %2120 = vmatpush.msra.mxu0 %v1976
    %2121 = vmatpush.msra.mxu0 %v1972
    %2122 = vmatpush.msra.mxu0 %v1968
    %2123 = vmatpush.msra.mxu0 %v1964
    %2124 = vmatpush.msra.mxu0 %v1960
    %2125 = vmatpush.msra.mxu0 %v1956
    %2126 = vmatmul.f32.gmra.mxu0 %v1946
    %v2127 = vpop.f32.mrf.mxu0
    %v2128 = vadd.f32 %v2022, %v2127
    %2129 = vmatmul.f32.gmra.mxu0 %v1947
    %v2130 = vpop.f32.mrf.mxu0
    %v2131 = vadd.f32 %v2022, %v2130
    %2132 = vmatmul.f32.gmra.mxu0 %v1948
    %v2133 = vpop.f32.mrf.mxu0
    %v2134 = vadd.f32 %v2022, %v2133
    %2135 = vmatmul.f32.gmra.mxu0 %v1949
    %v2136 = vpop.f32.mrf.mxu0
    %v2137 = vadd.f32 %v2022, %v2136
    %2138 = vmatmul.f32.gmra.mxu0 %v1950
    %v2139 = vpop.f32.mrf.mxu0
    %v2140 = vadd.f32 %v2022, %v2139
    %2141 = vmatmul.f32.gmra.mxu0 %v1951
    %v2142 = vpop.f32.mrf.mxu0
    %v2143 = vadd.f32 %v2022, %v2142
    %2144 = vmatmul.f32.gmra.mxu0 %v1952
    %v2145 = vpop.f32.mrf.mxu0
    %v2146 = vadd.f32 %v2022, %v2145
    %2147 = vmatmul.f32.gmra.mxu0 %v1953
    %v2148 = vpop.f32.mrf.mxu0
    %v2149 = vadd.f32 %v2022, %v2148
    %2150 = vdwg.mxu0
    %2151 = vmatpush.msra.mxu0 %v2017
    %2152 = vmatpush.msra.mxu0 %v2013
    %2153 = vmatpush.msra.mxu0 %v2009
    %2154 = vmatpush.msra.mxu0 %v2005
    %2155 = vmatpush.msra.mxu0 %v2001
    %2156 = vmatpush.msra.mxu0 %v1997
    %2157 = vmatpush.msra.mxu0 %v1993
    %2158 = vmatpush.msra.mxu0 %v1989
    %2159 = vmatpush.msra.mxu0 %v1985
    %2160 = vmatpush.msra.mxu0 %v1981
    %2161 = vmatpush.msra.mxu0 %v1977
    %2162 = vmatpush.msra.mxu0 %v1973
    %2163 = vmatpush.msra.mxu0 %v1969
    %2164 = vmatpush.msra.mxu0 %v1965
    %2165 = vmatpush.msra.mxu0 %v1961
    %2166 = vmatpush.msra.mxu0 %v1957
    %2167 = vmatmul.f32.gmra.mxu0 %v1946
    %v2168 = vpop.f32.mrf.mxu0
    %v2169 = vadd.f32 %v2023, %v2168
    %2170 = vmatmul.f32.gmra.mxu0 %v1947
    %v2171 = vpop.f32.mrf.mxu0
    %v2172 = vadd.f32 %v2023, %v2171
    %2173 = vmatmul.f32.gmra.mxu0 %v1948
    %v2174 = vpop.f32.mrf.mxu0
    %v2175 = vadd.f32 %v2023, %v2174
    %2176 = vmatmul.f32.gmra.mxu0 %v1949
    %v2177 = vpop.f32.mrf.mxu0
    %v2178 = vadd.f32 %v2023, %v2177
    %2179 = vmatmul.f32.gmra.mxu0 %v1950
    %v2180 = vpop.f32.mrf.mxu0
    %v2181 = vadd.f32 %v2023, %v2180
    %2182 = vmatmul.f32.gmra.mxu0 %v1951
    %v2183 = vpop.f32.mrf.mxu0
    %v2184 = vadd.f32 %v2023, %v2183
    %2185 = vmatmul.f32.gmra.mxu0 %v1952
    %v2186 = vpop.f32.mrf.mxu0
    %v2187 = vadd.f32 %v2023, %v2186
    %2188 = vmatmul.f32.gmra.mxu0 %v1953
    %v2189 = vpop.f32.mrf.mxu0
    %v2190 = vadd.f32 %v2023, %v2189
    %2191 = vdwg.mxu0
    %2192 = vst [vmem:[#allocation2] sm:$0xff] %v2046
    %2193 = vst [vmem:[#allocation2 + $0x8] sm:$0xff] %v2087
    %2194 = vst [vmem:[#allocation2 + $0x10] sm:$0xff] %v2128
    %2195 = vst [vmem:[#allocation2 + $0x18] sm:$0xff] %v2169
    %2196 = vst [vmem:[#allocation2 + $0x20] sm:$0xff] %v2049
    %2197 = vst [vmem:[#allocation2 + $0x28] sm:$0xff] %v2090
    %2198 = vst [vmem:[#allocation2 + $0x30] sm:$0xff] %v2131
    %2199 = vst [vmem:[#allocation2 + $0x38] sm:$0xff] %v2172
    %2200 = vst [vmem:[#allocation2 + $0x40] sm:$0xff] %v2052
    %2201 = vst [vmem:[#allocation2 + $0x48] sm:$0xff] %v2093
    %2202 = vst [vmem:[#allocation2 + $0x50] sm:$0xff] %v2134
    %2203 = vst [vmem:[#allocation2 + $0x58] sm:$0xff] %v2175
    %2204 = vst [vmem:[#allocation2 + $0x60] sm:$0xff] %v2055
    %2205 = vst [vmem:[#allocation2 + $0x68] sm:$0xff] %v2096
    %2206 = vst [vmem:[#allocation2 + $0x70] sm:$0xff] %v2137
    %2207 = vst [vmem:[#allocation2 + $0x78] sm:$0xff] %v2178
    %2208 = vst [vmem:[#allocation2 + $0x80] sm:$0xff] %v2058
    %2209 = vst [vmem:[#allocation2 + $0x88] sm:$0xff] %v2099
    %2210 = vst [vmem:[#allocation2 + $0x90] sm:$0xff] %v2140
    %2211 = vst [vmem:[#allocation2 + $0x98] sm:$0xff] %v2181
    %2212 = vst [vmem:[#allocation2 + $0xa0] sm:$0xff] %v2061
    %2213 = vst [vmem:[#allocation2 + $0xa8] sm:$0xff] %v2102
    %2214 = vst [vmem:[#allocation2 + $0xb0] sm:$0xff] %v2143
    %2215 = vst [vmem:[#allocation2 + $0xb8] sm:$0xff] %v2184
    %2216 = vst [vmem:[#allocation2 + $0xc0] sm:$0xff] %v2064
    %2217 = vst [vmem:[#allocation2 + $0xc8] sm:$0xff] %v2105
    %2218 = vst [vmem:[#allocation2 + $0xd0] sm:$0xff] %v2146
    %2219 = vst [vmem:[#allocation2 + $0xd8] sm:$0xff] %v2187
    %2220 = vst [vmem:[#allocation2 + $0xe0] sm:$0xff] %v2067
    %2221 = vst [vmem:[#allocation2 + $0xe8] sm:$0xff] %v2108
    %2222 = vst [vmem:[#allocation2 + $0xf0] sm:$0xff] %v2149
    %2223 = vst [vmem:[#allocation2 + $0xf8] sm:$0xff] %v2190
    %v2224 = vld [vmem:[#allocation2] sm:$0xff]
    %v2225 = vld [vmem:[#allocation2 + $0x10] sm:$0xff]
    %v2226 = vld [vmem:[#allocation2 + $0x18] sm:$0xff]
    %v2227 = vxor.u32 %v2224, 2147483648
    %v2228 = vmul.f32 %v2227, 1.442695
    %v2229 = vpow.pop %v2228
    %v2230 = vadd.f32 %v2229, 1.0
    %v2231 = vrcp.pop %v2230
    %v2232 = vmul.f32 %v2230, %v2231
    %v2233 = vsub.f32 1.0, %v2232
    %v2234 = vmul.f32 %v2231, %v2233
    %v2235 = vadd.f32 %v2231, %v2234
    %vm2236 = vweird.f32 %v2230
    %vm2237 = vweird.f32 %v2231
    %vm2238 = vmor %vm2236, %vm2237
    %v2239 = vsel %vm2238, %v2231, %v2235
    %v2240 = vand.u32 2147483647, %v2230
    %vm2241 = vcmp.eq.f32.partialorder %v2240, 8.507059e+37
    %v2242 = vand.u32 %v2230, 2147483648
    %v2243 = vor.u32 1.1754944e-38, %v2242
    %v2244 = vsel %vm2241, %v2243, %v2239
    %v2245 = vmul.f32 1.0, %v2244
    %v2246 = vtanh.pop %v2225
    %v2247 = vxor.u32 %v2226, 2147483648
    %v2248 = vmul.f32 %v2247, 1.442695
    %v2249 = vpow.pop %v2248
    %v2250 = vadd.f32 %v2249, 1.0
    %v2251 = vrcp.pop %v2250
    %v2252 = vmul.f32 %v2250, %v2251
    %v2253 = vsub.f32 1.0, %v2252
    %v2254 = vmul.f32 %v2251, %v2253
    %v2255 = vadd.f32 %v2251, %v2254
    %vm2256 = vweird.f32 %v2250
    %vm2257 = vweird.f32 %v2251
    %vm2258 = vmor %vm2256, %vm2257
    %v2259 = vsel %vm2258, %v2251, %v2255
    %v2260 = vand.u32 2147483647, %v2250
    %vm2261 = vcmp.eq.f32.partialorder %v2260, 8.507059e+37
    %v2262 = vand.u32 %v2250, 2147483648
    %v2263 = vor.u32 1.1754944e-38, %v2262
    %v2264 = vsel %vm2261, %v2263, %v2259
    %v2265 = vmul.f32 1.0, %v2264
    %v2266 = vmul.f32 %v2245, %v2246
    %v2267 = vtanh.pop %v2266
    %v2268 = vmul.f32 %v2265, %v2267
    %v2269 = vld [vmem:[#allocation2 + $0x20] sm:$0xff]
    %v2270 = vld [vmem:[#allocation2 + $0x28] sm:$0xff]
    %v2271 = vld [vmem:[#allocation2 + $0x30] sm:$0xff]
    %v2272 = vld [vmem:[#allocation2 + $0x38] sm:$0xff]
    %v2273 = vld [vmem:[#allocation9] sm:$0xff]
    %v2274 = vld [vmem:[#allocation9 + $0x8] sm:$0xff]
    %v2275 = vld [vmem:[#allocation9 + $0x10] sm:$0xff]
    %v2276 = vld [vmem:[#allocation9 + $0x18] sm:$0xff]
    %v2277 = vld [vmem:[#allocation9 + $0x20] sm:$0xff]
    %v2278 = vld [vmem:[#allocation9 + $0x28] sm:$0xff]
    %v2279 = vld [vmem:[#allocation9 + $0x30] sm:$0xff]
    %v2280 = vld [vmem:[#allocation9 + $0x38] sm:$0xff]
    %v2281 = vld [vmem:[#allocation9 + $0x40] sm:$0xff]
    %v2282 = vld [vmem:[#allocation9 + $0x48] sm:$0xff]
    %v2283 = vld [vmem:[#allocation9 + $0x50] sm:$0xff]
    %v2284 = vld [vmem:[#allocation9 + $0x58] sm:$0xff]
    %v2285 = vld [vmem:[#allocation9 + $0x60] sm:$0xff]
    %v2286 = vld [vmem:[#allocation9 + $0x68] sm:$0xff]
    %v2287 = vld [vmem:[#allocation9 + $0x70] sm:$0xff]
    %v2288 = vld [vmem:[#allocation9 + $0x78] sm:$0xff]
    %v2289 = vld [vmem:[#allocation9 + $0x80] sm:$0xff]
    %v2290 = vld [vmem:[#allocation9 + $0x88] sm:$0xff]
    %v2291 = vld [vmem:[#allocation9 + $0x90] sm:$0xff]
    %v2292 = vld [vmem:[#allocation9 + $0x98] sm:$0xff]
    %v2293 = vld [vmem:[#allocation9 + $0xa0] sm:$0xff]
    %v2294 = vld [vmem:[#allocation9 + $0xa8] sm:$0xff]
    %v2295 = vld [vmem:[#allocation9 + $0xb0] sm:$0xff]
    %v2296 = vld [vmem:[#allocation9 + $0xb8] sm:$0xff]
    %v2297 = vld [vmem:[#allocation9 + $0xc0] sm:$0xff]
    %v2298 = vld [vmem:[#allocation9 + $0xc8] sm:$0xff]
    %v2299 = vld [vmem:[#allocation9 + $0xd0] sm:$0xff]
    %v2300 = vld [vmem:[#allocation9 + $0xd8] sm:$0xff]
    %v2301 = vld [vmem:[#allocation9 + $0xe0] sm:$0xff]
    %v2302 = vld [vmem:[#allocation9 + $0xe8] sm:$0xff]
    %v2303 = vld [vmem:[#allocation9 + $0xf0] sm:$0xff]
    %v2304 = vld [vmem:[#allocation9 + $0xf8] sm:$0xff]
    %v2305 = vld [vmem:[#allocation9 + $0x100] sm:$0xff]
    %v2306 = vld [vmem:[#allocation9 + $0x108] sm:$0xff]
    %v2307 = vld [vmem:[#allocation9 + $0x110] sm:$0xff]
    %v2308 = vld [vmem:[#allocation9 + $0x118] sm:$0xff]
    %v2309 = vld [vmem:[#allocation9 + $0x120] sm:$0xff]
    %v2310 = vld [vmem:[#allocation9 + $0x128] sm:$0xff]
    %v2311 = vld [vmem:[#allocation9 + $0x130] sm:$0xff]
    %v2312 = vld [vmem:[#allocation9 + $0x138] sm:$0xff]
    %v2313 = vld [vmem:[#allocation9 + $0x140] sm:$0xff]
    %v2314 = vld [vmem:[#allocation9 + $0x148] sm:$0xff]
    %v2315 = vld [vmem:[#allocation9 + $0x150] sm:$0xff]
    %v2316 = vld [vmem:[#allocation9 + $0x158] sm:$0xff]
    %v2317 = vld [vmem:[#allocation9 + $0x160] sm:$0xff]
    %v2318 = vld [vmem:[#allocation9 + $0x168] sm:$0xff]
    %v2319 = vld [vmem:[#allocation9 + $0x170] sm:$0xff]
    %v2320 = vld [vmem:[#allocation9 + $0x178] sm:$0xff]
    %v2321 = vld [vmem:[#allocation9 + $0x180] sm:$0xff]
    %v2322 = vld [vmem:[#allocation9 + $0x188] sm:$0xff]
    %v2323 = vld [vmem:[#allocation9 + $0x190] sm:$0xff]
    %v2324 = vld [vmem:[#allocation9 + $0x198] sm:$0xff]
    %v2325 = vld [vmem:[#allocation9 + $0x1a0] sm:$0xff]
    %v2326 = vld [vmem:[#allocation9 + $0x1a8] sm:$0xff]
    %v2327 = vld [vmem:[#allocation9 + $0x1b0] sm:$0xff]
    %v2328 = vld [vmem:[#allocation9 + $0x1b8] sm:$0xff]
    %v2329 = vld [vmem:[#allocation9 + $0x1c0] sm:$0xff]
    %v2330 = vld [vmem:[#allocation9 + $0x1c8] sm:$0xff]
    %v2331 = vld [vmem:[#allocation9 + $0x1d0] sm:$0xff]
    %v2332 = vld [vmem:[#allocation9 + $0x1d8] sm:$0xff]
    %v2333 = vld [vmem:[#allocation9 + $0x1e0] sm:$0xff]
    %v2334 = vld [vmem:[#allocation9 + $0x1e8] sm:$0xff]
    %v2335 = vld [vmem:[#allocation9 + $0x1f0] sm:$0xff]
    %v2336 = vld [vmem:[#allocation9 + $0x1f8] sm:$0xff]
    %2337 = vmatpush.msra.mxu0 %v2333
    %2338 = vmatpush.msra.mxu0 %v2329
    %2339 = vmatpush.msra.mxu0 %v2325
    %2340 = vmatpush.msra.mxu0 %v2321
    %2341 = vmatpush.msra.mxu0 %v2317
    %2342 = vmatpush.msra.mxu0 %v2313
    %2343 = vmatpush.msra.mxu0 %v2309
    %2344 = vmatpush.msra.mxu0 %v2305
    %2345 = vmatpush.msra.mxu0 %v2301
    %2346 = vmatpush.msra.mxu0 %v2297
    %2347 = vmatpush.msra.mxu0 %v2293
    %2348 = vmatpush.msra.mxu0 %v2289
    %2349 = vmatpush.msra.mxu0 %v2285
    %2350 = vmatpush.msra.mxu0 %v2281
    %2351 = vmatpush.msra.mxu0 %v2277
    %2352 = vmatpush.msra.mxu0 %v2273
    %2353 = vmatmul.f32.gmra.mxu0 %v2268
    %v2354 = vpop.f32.mrf.mxu0
    %v2355 = vadd.f32 0.0, %v2354
    %2356 = vdwg.mxu0
    %2357 = vmatpush.msra.mxu0 %v2334
    %2358 = vmatpush.msra.mxu0 %v2330
    %2359 = vmatpush.msra.mxu0 %v2326
    %2360 = vmatpush.msra.mxu0 %v2322
    %2361 = vmatpush.msra.mxu0 %v2318
    %2362 = vmatpush.msra.mxu0 %v2314
    %2363 = vmatpush.msra.mxu0 %v2310
    %2364 = vmatpush.msra.mxu0 %v2306
    %2365 = vmatpush.msra.mxu0 %v2302
    %2366 = vmatpush.msra.mxu0 %v2298
    %2367 = vmatpush.msra.mxu0 %v2294
    %2368 = vmatpush.msra.mxu0 %v2290
    %2369 = vmatpush.msra.mxu0 %v2286
    %2370 = vmatpush.msra.mxu0 %v2282
    %2371 = vmatpush.msra.mxu0 %v2278
    %2372 = vmatpush.msra.mxu0 %v2274
    %2373 = vmatmul.f32.gmra.mxu0 %v2268
    %v2374 = vpop.f32.mrf.mxu0
    %v2375 = vadd.f32 0.0, %v2374
    %2376 = vdwg.mxu0
    %2377 = vmatpush.msra.mxu0 %v2335
    %2378 = vmatpush.msra.mxu0 %v2331
    %2379 = vmatpush.msra.mxu0 %v2327
    %2380 = vmatpush.msra.mxu0 %v2323
    %2381 = vmatpush.msra.mxu0 %v2319
    %2382 = vmatpush.msra.mxu0 %v2315
    %2383 = vmatpush.msra.mxu0 %v2311
    %2384 = vmatpush.msra.mxu0 %v2307
    %2385 = vmatpush.msra.mxu0 %v2303
    %2386 = vmatpush.msra.mxu0 %v2299
    %2387 = vmatpush.msra.mxu0 %v2295
    %2388 = vmatpush.msra.mxu0 %v2291
    %2389 = vmatpush.msra.mxu0 %v2287
    %2390 = vmatpush.msra.mxu0 %v2283
    %2391 = vmatpush.msra.mxu0 %v2279
    %2392 = vmatpush.msra.mxu0 %v2275
    %2393 = vmatmul.f32.gmra.mxu0 %v2268
    %v2394 = vpop.f32.mrf.mxu0
    %v2395 = vadd.f32 0.0, %v2394
    %2396 = vdwg.mxu0
    %2397 = vmatpush.msra.mxu0 %v2336
    %2398 = vmatpush.msra.mxu0 %v2332
    %2399 = vmatpush.msra.mxu0 %v2328
    %2400 = vmatpush.msra.mxu0 %v2324
    %2401 = vmatpush.msra.mxu0 %v2320
    %2402 = vmatpush.msra.mxu0 %v2316
    %2403 = vmatpush.msra.mxu0 %v2312
    %2404 = vmatpush.msra.mxu0 %v2308
    %2405 = vmatpush.msra.mxu0 %v2304
    %2406 = vmatpush.msra.mxu0 %v2300
    %2407 = vmatpush.msra.mxu0 %v2296
    %2408 = vmatpush.msra.mxu0 %v2292
    %2409 = vmatpush.msra.mxu0 %v2288
    %2410 = vmatpush.msra.mxu0 %v2284
    %2411 = vmatpush.msra.mxu0 %v2280
    %2412 = vmatpush.msra.mxu0 %v2276
    %2413 = vmatmul.f32.gmra.mxu0 %v2268
    %v2414 = vpop.f32.mrf.mxu0
    %v2415 = vadd.f32 0.0, %v2414
    %2416 = vdwg.mxu0
    %v2417 = vadd.f32 %v2269, %v2355
    %v2418 = vadd.f32 %v2270, %v2375
    %v2419 = vadd.f32 %v2271, %v2395
    %v2420 = vadd.f32 %v2272, %v2415
    %v2421 = vxor.u32 %v2417, 2147483648
    %v2422 = vmul.f32 %v2421, 1.442695
    %v2423 = vpow.pop %v2422
    %v2424 = vadd.f32 %v2423, 1.0
    %v2425 = vrcp.pop %v2424
    %v2426 = vmul.f32 %v2424, %v2425
    %v2427 = vsub.f32 1.0, %v2426
    %v2428 = vmul.f32 %v2425, %v2427
    %v2429 = vadd.f32 %v2425, %v2428
    %vm2430 = vweird.f32 %v2424
    %vm2431 = vweird.f32 %v2425
    %vm2432 = vmor %vm2430, %vm2431
    %v2433 = vsel %vm2432, %v2425, %v2429
    %v2434 = vand.u32 2147483647, %v2424
    %vm2435 = vcmp.eq.f32.partialorder %v2434, 8.507059e+37
    %v2436 = vand.u32 %v2424, 2147483648
    %v2437 = vor.u32 1.1754944e-38, %v2436
    %v2438 = vsel %vm2435, %v2437, %v2433
    %v2439 = vmul.f32 1.0, %v2438
    %v2440 = vxor.u32 %v2418, 2147483648
    %v2441 = vmul.f32 %v2440, 1.442695
    %v2442 = vpow.pop %v2441
    %v2443 = vadd.f32 %v2442, 1.0
    %v2444 = vrcp.pop %v2443
    %v2445 = vmul.f32 %v2443, %v2444
    %v2446 = vsub.f32 1.0, %v2445
    %v2447 = vmul.f32 %v2444, %v2446
    %v2448 = vadd.f32 %v2444, %v2447
    %vm2449 = vweird.f32 %v2443
    %vm2450 = vweird.f32 %v2444
    %vm2451 = vmor %vm2449, %vm2450
    %v2452 = vsel %vm2451, %v2444, %v2448
    %v2453 = vand.u32 2147483647, %v2443
    %vm2454 = vcmp.eq.f32.partialorder %v2453, 8.507059e+37
    %v2455 = vand.u32 %v2443, 2147483648
    %v2456 = vor.u32 1.1754944e-38, %v2455
    %v2457 = vsel %vm2454, %v2456, %v2452
    %v2458 = vmul.f32 1.0, %v2457
    %v2459 = vtanh.pop %v2419
    %v2460 = vxor.u32 %v2420, 2147483648
    %v2461 = vmul.f32 %v2460, 1.442695
    %v2462 = vpow.pop %v2461
    %v2463 = vadd.f32 %v2462, 1.0
    %v2464 = vrcp.pop %v2463
    %v2465 = vmul.f32 %v2463, %v2464
    %v2466 = vsub.f32 1.0, %v2465
    %v2467 = vmul.f32 %v2464, %v2466
    %v2468 = vadd.f32 %v2464, %v2467
    %vm2469 = vweird.f32 %v2463
    %vm2470 = vweird.f32 %v2464
    %vm2471 = vmor %vm2469, %vm2470
    %v2472 = vsel %vm2471, %v2464, %v2468
    %v2473 = vand.u32 2147483647, %v2463
    %vm2474 = vcmp.eq.f32.partialorder %v2473, 8.507059e+37
    %v2475 = vand.u32 %v2463, 2147483648
    %v2476 = vor.u32 1.1754944e-38, %v2475
    %v2477 = vsel %vm2474, %v2476, %v2472
    %v2478 = vmul.f32 1.0, %v2477
    %v2479 = vmul.f32 %v2458, %v2266
    %v2480 = vmul.f32 %v2439, %v2459
    %v2481 = vadd.f32 %v2479, %v2480
    %v2482 = vtanh.pop %v2481
    %v2483 = vmul.f32 %v2478, %v2482
    %v2484 = vld [vmem:[#allocation2 + $0x40] sm:$0xff]
    %v2485 = vld [vmem:[#allocation2 + $0x48] sm:$0xff]
    %v2486 = vld [vmem:[#allocation2 + $0x50] sm:$0xff]
    %v2487 = vld [vmem:[#allocation2 + $0x58] sm:$0xff]
    %2488 = vmatpush.msra.mxu0 %v2333
    %2489 = vmatpush.msra.mxu0 %v2329
    %2490 = vmatpush.msra.mxu0 %v2325
    %2491 = vmatpush.msra.mxu0 %v2321
    %2492 = vmatpush.msra.mxu0 %v2317
    %2493 = vmatpush.msra.mxu0 %v2313
    %2494 = vmatpush.msra.mxu0 %v2309
    %2495 = vmatpush.msra.mxu0 %v2305
    %2496 = vmatpush.msra.mxu0 %v2301
    %2497 = vmatpush.msra.mxu0 %v2297
    %2498 = vmatpush.msra.mxu0 %v2293
    %2499 = vmatpush.msra.mxu0 %v2289
    %2500 = vmatpush.msra.mxu0 %v2285
    %2501 = vmatpush.msra.mxu0 %v2281
    %2502 = vmatpush.msra.mxu0 %v2277
    %2503 = vmatpush.msra.mxu0 %v2273
    %2504 = vmatmul.f32.gmra.mxu0 %v2483
    %v2505 = vpop.f32.mrf.mxu0
    %v2506 = vadd.f32 0.0, %v2505
    %2507 = vdwg.mxu0
    %2508 = vmatpush.msra.mxu0 %v2334
    %2509 = vmatpush.msra.mxu0 %v2330
    %2510 = vmatpush.msra.mxu0 %v2326
    %2511 = vmatpush.msra.mxu0 %v2322
    %2512 = vmatpush.msra.mxu0 %v2318
    %2513 = vmatpush.msra.mxu0 %v2314
    %2514 = vmatpush.msra.mxu0 %v2310
    %2515 = vmatpush.msra.mxu0 %v2306
    %2516 = vmatpush.msra.mxu0 %v2302
    %2517 = vmatpush.msra.mxu0 %v2298
    %2518 = vmatpush.msra.mxu0 %v2294
    %2519 = vmatpush.msra.mxu0 %v2290
    %2520 = vmatpush.msra.mxu0 %v2286
    %2521 = vmatpush.msra.mxu0 %v2282
    %2522 = vmatpush.msra.mxu0 %v2278
    %2523 = vmatpush.msra.mxu0 %v2274
    %2524 = vmatmul.f32.gmra.mxu0 %v2483
    %v2525 = vpop.f32.mrf.mxu0
    %v2526 = vadd.f32 0.0, %v2525
    %2527 = vdwg.mxu0
    %2528 = vmatpush.msra.mxu0 %v2335
    %2529 = vmatpush.msra.mxu0 %v2331
    %2530 = vmatpush.msra.mxu0 %v2327
    %2531 = vmatpush.msra.mxu0 %v2323
    %2532 = vmatpush.msra.mxu0 %v2319
    %2533 = vmatpush.msra.mxu0 %v2315
    %2534 = vmatpush.msra.mxu0 %v2311
    %2535 = vmatpush.msra.mxu0 %v2307
    %2536 = vmatpush.msra.mxu0 %v2303
    %2537 = vmatpush.msra.mxu0 %v2299
    %2538 = vmatpush.msra.mxu0 %v2295
    %2539 = vmatpush.msra.mxu0 %v2291
    %2540 = vmatpush.msra.mxu0 %v2287
    %2541 = vmatpush.msra.mxu0 %v2283
    %2542 = vmatpush.msra.mxu0 %v2279
    %2543 = vmatpush.msra.mxu0 %v2275
    %2544 = vmatmul.f32.gmra.mxu0 %v2483
    %v2545 = vpop.f32.mrf.mxu0
    %v2546 = vadd.f32 0.0, %v2545
    %2547 = vdwg.mxu0
    %2548 = vmatpush.msra.mxu0 %v2336
    %2549 = vmatpush.msra.mxu0 %v2332
    %2550 = vmatpush.msra.mxu0 %v2328
    %2551 = vmatpush.msra.mxu0 %v2324
    %2552 = vmatpush.msra.mxu0 %v2320
    %2553 = vmatpush.msra.mxu0 %v2316
    %2554 = vmatpush.msra.mxu0 %v2312
    %2555 = vmatpush.msra.mxu0 %v2308
    %2556 = vmatpush.msra.mxu0 %v2304
    %2557 = vmatpush.msra.mxu0 %v2300
    %2558 = vmatpush.msra.mxu0 %v2296
    %2559 = vmatpush.msra.mxu0 %v2292
    %2560 = vmatpush.msra.mxu0 %v2288
    %2561 = vmatpush.msra.mxu0 %v2284
    %2562 = vmatpush.msra.mxu0 %v2280
    %2563 = vmatpush.msra.mxu0 %v2276
    %2564 = vmatmul.f32.gmra.mxu0 %v2483
    %v2565 = vpop.f32.mrf.mxu0
    %v2566 = vadd.f32 0.0, %v2565
    %2567 = vdwg.mxu0
    %v2568 = vadd.f32 %v2484, %v2506
    %v2569 = vadd.f32 %v2485, %v2526
    %v2570 = vadd.f32 %v2486, %v2546
    %v2571 = vadd.f32 %v2487, %v2566
    %v2572 = vxor.u32 %v2568, 2147483648
    %v2573 = vmul.f32 %v2572, 1.442695
    %v2574 = vpow.pop %v2573
    %v2575 = vadd.f32 %v2574, 1.0
    %v2576 = vrcp.pop %v2575
    %v2577 = vmul.f32 %v2575, %v2576
    %v2578 = vsub.f32 1.0, %v2577
    %v2579 = vmul.f32 %v2576, %v2578
    %v2580 = vadd.f32 %v2576, %v2579
    %vm2581 = vweird.f32 %v2575
    %vm2582 = vweird.f32 %v2576
    %vm2583 = vmor %vm2581, %vm2582
    %v2584 = vsel %vm2583, %v2576, %v2580
    %v2585 = vand.u32 2147483647, %v2575
    %vm2586 = vcmp.eq.f32.partialorder %v2585, 8.507059e+37
    %v2587 = vand.u32 %v2575, 2147483648
    %v2588 = vor.u32 1.1754944e-38, %v2587
    %v2589 = vsel %vm2586, %v2588, %v2584
    %v2590 = vmul.f32 1.0, %v2589
    %v2591 = vxor.u32 %v2569, 2147483648
    %v2592 = vmul.f32 %v2591, 1.442695
    %v2593 = vpow.pop %v2592
    %v2594 = vadd.f32 %v2593, 1.0
    %v2595 = vrcp.pop %v2594
    %v2596 = vmul.f32 %v2594, %v2595
    %v2597 = vsub.f32 1.0, %v2596
    %v2598 = vmul.f32 %v2595, %v2597
    %v2599 = vadd.f32 %v2595, %v2598
    %vm2600 = vweird.f32 %v2594
    %vm2601 = vweird.f32 %v2595
    %vm2602 = vmor %vm2600, %vm2601
    %v2603 = vsel %vm2602, %v2595, %v2599
    %v2604 = vand.u32 2147483647, %v2594
    %vm2605 = vcmp.eq.f32.partialorder %v2604, 8.507059e+37
    %v2606 = vand.u32 %v2594, 2147483648
    %v2607 = vor.u32 1.1754944e-38, %v2606
    %v2608 = vsel %vm2605, %v2607, %v2603
    %v2609 = vmul.f32 1.0, %v2608
    %v2610 = vtanh.pop %v2570
    %v2611 = vxor.u32 %v2571, 2147483648
    %v2612 = vmul.f32 %v2611, 1.442695
    %v2613 = vpow.pop %v2612
    %v2614 = vadd.f32 %v2613, 1.0
    %v2615 = vrcp.pop %v2614
    %v2616 = vmul.f32 %v2614, %v2615
    %v2617 = vsub.f32 1.0, %v2616
    %v2618 = vmul.f32 %v2615, %v2617
    %v2619 = vadd.f32 %v2615, %v2618
    %vm2620 = vweird.f32 %v2614
    %vm2621 = vweird.f32 %v2615
    %vm2622 = vmor %vm2620, %vm2621
    %v2623 = vsel %vm2622, %v2615, %v2619
    %v2624 = vand.u32 2147483647, %v2614
    %vm2625 = vcmp.eq.f32.partialorder %v2624, 8.507059e+37
    %v2626 = vand.u32 %v2614, 2147483648
    %v2627 = vor.u32 1.1754944e-38, %v2626
    %v2628 = vsel %vm2625, %v2627, %v2623
    %v2629 = vmul.f32 1.0, %v2628
    %v2630 = vmul.f32 %v2609, %v2481
    %v2631 = vmul.f32 %v2590, %v2610
    %v2632 = vadd.f32 %v2630, %v2631
    %v2633 = vtanh.pop %v2632
    %v2634 = vmul.f32 %v2629, %v2633
    %v2635 = vld [vmem:[#allocation2 + $0x60] sm:$0xff]
    %v2636 = vld [vmem:[#allocation2 + $0x68] sm:$0xff]
    %v2637 = vld [vmem:[#allocation2 + $0x70] sm:$0xff]
    %v2638 = vld [vmem:[#allocation2 + $0x78] sm:$0xff]
    %2639 = vmatpush.msra.mxu0 %v2333
    %2640 = vmatpush.msra.mxu0 %v2329
    %2641 = vmatpush.msra.mxu0 %v2325
    %2642 = vmatpush.msra.mxu0 %v2321
    %2643 = vmatpush.msra.mxu0 %v2317
    %2644 = vmatpush.msra.mxu0 %v2313
    %2645 = vmatpush.msra.mxu0 %v2309
    %2646 = vmatpush.msra.mxu0 %v2305
    %2647 = vmatpush.msra.mxu0 %v2301
    %2648 = vmatpush.msra.mxu0 %v2297
    %2649 = vmatpush.msra.mxu0 %v2293
    %2650 = vmatpush.msra.mxu0 %v2289
    %2651 = vmatpush.msra.mxu0 %v2285
    %2652 = vmatpush.msra.mxu0 %v2281
    %2653 = vmatpush.msra.mxu0 %v2277
    %2654 = vmatpush.msra.mxu0 %v2273
    %2655 = vmatmul.f32.gmra.mxu0 %v2634
    %v2656 = vpop.f32.mrf.mxu0
    %v2657 = vadd.f32 0.0, %v2656
    %2658 = vdwg.mxu0
    %2659 = vmatpush.msra.mxu0 %v2334
    %2660 = vmatpush.msra.mxu0 %v2330
    %2661 = vmatpush.msra.mxu0 %v2326
    %2662 = vmatpush.msra.mxu0 %v2322
    %2663 = vmatpush.msra.mxu0 %v2318
    %2664 = vmatpush.msra.mxu0 %v2314
    %2665 = vmatpush.msra.mxu0 %v2310
    %2666 = vmatpush.msra.mxu0 %v2306
    %2667 = vmatpush.msra.mxu0 %v2302
    %2668 = vmatpush.msra.mxu0 %v2298
    %2669 = vmatpush.msra.mxu0 %v2294
    %2670 = vmatpush.msra.mxu0 %v2290
    %2671 = vmatpush.msra.mxu0 %v2286
    %2672 = vmatpush.msra.mxu0 %v2282
    %2673 = vmatpush.msra.mxu0 %v2278
    %2674 = vmatpush.msra.mxu0 %v2274
    %2675 = vmatmul.f32.gmra.mxu0 %v2634
    %v2676 = vpop.f32.mrf.mxu0
    %v2677 = vadd.f32 0.0, %v2676
    %2678 = vdwg.mxu0
    %2679 = vmatpush.msra.mxu0 %v2335
    %2680 = vmatpush.msra.mxu0 %v2331
    %2681 = vmatpush.msra.mxu0 %v2327
    %2682 = vmatpush.msra.mxu0 %v2323
    %2683 = vmatpush.msra.mxu0 %v2319
    %2684 = vmatpush.msra.mxu0 %v2315
    %2685 = vmatpush.msra.mxu0 %v2311
    %2686 = vmatpush.msra.mxu0 %v2307
    %2687 = vmatpush.msra.mxu0 %v2303
    %2688 = vmatpush.msra.mxu0 %v2299
    %2689 = vmatpush.msra.mxu0 %v2295
    %2690 = vmatpush.msra.mxu0 %v2291
    %2691 = vmatpush.msra.mxu0 %v2287
    %2692 = vmatpush.msra.mxu0 %v2283
    %2693 = vmatpush.msra.mxu0 %v2279
    %2694 = vmatpush.msra.mxu0 %v2275
    %2695 = vmatmul.f32.gmra.mxu0 %v2634
    %v2696 = vpop.f32.mrf.mxu0
    %v2697 = vadd.f32 0.0, %v2696
    %2698 = vdwg.mxu0
    %2699 = vmatpush.msra.mxu0 %v2336
    %2700 = vmatpush.msra.mxu0 %v2332
    %2701 = vmatpush.msra.mxu0 %v2328
    %2702 = vmatpush.msra.mxu0 %v2324
    %2703 = vmatpush.msra.mxu0 %v2320
    %2704 = vmatpush.msra.mxu0 %v2316
    %2705 = vmatpush.msra.mxu0 %v2312
    %2706 = vmatpush.msra.mxu0 %v2308
    %2707 = vmatpush.msra.mxu0 %v2304
    %2708 = vmatpush.msra.mxu0 %v2300
    %2709 = vmatpush.msra.mxu0 %v2296
    %2710 = vmatpush.msra.mxu0 %v2292
    %2711 = vmatpush.msra.mxu0 %v2288
    %2712 = vmatpush.msra.mxu0 %v2284
    %2713 = vmatpush.msra.mxu0 %v2280
    %2714 = vmatpush.msra.mxu0 %v2276
    %2715 = vmatmul.f32.gmra.mxu0 %v2634
    %v2716 = vpop.f32.mrf.mxu0
    %v2717 = vadd.f32 0.0, %v2716
    %2718 = vdwg.mxu0
    %v2719 = vadd.f32 %v2635, %v2657
    %v2720 = vadd.f32 %v2636, %v2677
    %v2721 = vadd.f32 %v2637, %v2697
    %v2722 = vadd.f32 %v2638, %v2717
    %v2723 = vxor.u32 %v2719, 2147483648
    %v2724 = vmul.f32 %v2723, 1.442695
    %v2725 = vpow.pop %v2724
    %v2726 = vadd.f32 %v2725, 1.0
    %v2727 = vrcp.pop %v2726
    %v2728 = vmul.f32 %v2726, %v2727
    %v2729 = vsub.f32 1.0, %v2728
    %v2730 = vmul.f32 %v2727, %v2729
    %v2731 = vadd.f32 %v2727, %v2730
    %vm2732 = vweird.f32 %v2726
    %vm2733 = vweird.f32 %v2727
    %vm2734 = vmor %vm2732, %vm2733
    %v2735 = vsel %vm2734, %v2727, %v2731
    %v2736 = vand.u32 2147483647, %v2726
    %vm2737 = vcmp.eq.f32.partialorder %v2736, 8.507059e+37
    %v2738 = vand.u32 %v2726, 2147483648
    %v2739 = vor.u32 1.1754944e-38, %v2738
    %v2740 = vsel %vm2737, %v2739, %v2735
    %v2741 = vmul.f32 1.0, %v2740
    %v2742 = vxor.u32 %v2720, 2147483648
    %v2743 = vmul.f32 %v2742, 1.442695
    %v2744 = vpow.pop %v2743
    %v2745 = vadd.f32 %v2744, 1.0
    %v2746 = vrcp.pop %v2745
    %v2747 = vmul.f32 %v2745, %v2746
    %v2748 = vsub.f32 1.0, %v2747
    %v2749 = vmul.f32 %v2746, %v2748
    %v2750 = vadd.f32 %v2746, %v2749
    %vm2751 = vweird.f32 %v2745
    %vm2752 = vweird.f32 %v2746
    %vm2753 = vmor %vm2751, %vm2752
    %v2754 = vsel %vm2753, %v2746, %v2750
    %v2755 = vand.u32 2147483647, %v2745
    %vm2756 = vcmp.eq.f32.partialorder %v2755, 8.507059e+37
    %v2757 = vand.u32 %v2745, 2147483648
    %v2758 = vor.u32 1.1754944e-38, %v2757
    %v2759 = vsel %vm2756, %v2758, %v2754
    %v2760 = vmul.f32 1.0, %v2759
    %v2761 = vtanh.pop %v2721
    %v2762 = vxor.u32 %v2722, 2147483648
    %v2763 = vmul.f32 %v2762, 1.442695
    %v2764 = vpow.pop %v2763
    %v2765 = vadd.f32 %v2764, 1.0
    %v2766 = vrcp.pop %v2765
    %v2767 = vmul.f32 %v2765, %v2766
    %v2768 = vsub.f32 1.0, %v2767
    %v2769 = vmul.f32 %v2766, %v2768
    %v2770 = vadd.f32 %v2766, %v2769
    %vm2771 = vweird.f32 %v2765
    %vm2772 = vweird.f32 %v2766
    %vm2773 = vmor %vm2771, %vm2772
    %v2774 = vsel %vm2773, %v2766, %v2770
    %v2775 = vand.u32 2147483647, %v2765
    %vm2776 = vcmp.eq.f32.partialorder %v2775, 8.507059e+37
    %v2777 = vand.u32 %v2765, 2147483648
    %v2778 = vor.u32 1.1754944e-38, %v2777
    %v2779 = vsel %vm2776, %v2778, %v2774
    %v2780 = vmul.f32 1.0, %v2779
    %v2781 = vmul.f32 %v2760, %v2632
    %v2782 = vmul.f32 %v2741, %v2761
    %v2783 = vadd.f32 %v2781, %v2782
    %v2784 = vtanh.pop %v2783
    %v2785 = vmul.f32 %v2780, %v2784
    %v2786 = vld [vmem:[#allocation2 + $0x80] sm:$0xff]
    %v2787 = vld [vmem:[#allocation2 + $0x88] sm:$0xff]
    %v2788 = vld [vmem:[#allocation2 + $0x90] sm:$0xff]
    %v2789 = vld [vmem:[#allocation2 + $0x98] sm:$0xff]
    %2790 = vmatpush.msra.mxu0 %v2333
    %2791 = vmatpush.msra.mxu0 %v2329
    %2792 = vmatpush.msra.mxu0 %v2325
    %2793 = vmatpush.msra.mxu0 %v2321
    %2794 = vmatpush.msra.mxu0 %v2317
    %2795 = vmatpush.msra.mxu0 %v2313
    %2796 = vmatpush.msra.mxu0 %v2309
    %2797 = vmatpush.msra.mxu0 %v2305
    %2798 = vmatpush.msra.mxu0 %v2301
    %2799 = vmatpush.msra.mxu0 %v2297
    %2800 = vmatpush.msra.mxu0 %v2293
    %2801 = vmatpush.msra.mxu0 %v2289
    %2802 = vmatpush.msra.mxu0 %v2285
    %2803 = vmatpush.msra.mxu0 %v2281
    %2804 = vmatpush.msra.mxu0 %v2277
    %2805 = vmatpush.msra.mxu0 %v2273
    %2806 = vmatmul.f32.gmra.mxu0 %v2785
    %v2807 = vpop.f32.mrf.mxu0
    %v2808 = vadd.f32 0.0, %v2807
    %2809 = vdwg.mxu0
    %2810 = vmatpush.msra.mxu0 %v2334
    %2811 = vmatpush.msra.mxu0 %v2330
    %2812 = vmatpush.msra.mxu0 %v2326
    %2813 = vmatpush.msra.mxu0 %v2322
    %2814 = vmatpush.msra.mxu0 %v2318
    %2815 = vmatpush.msra.mxu0 %v2314
    %2816 = vmatpush.msra.mxu0 %v2310
    %2817 = vmatpush.msra.mxu0 %v2306
    %2818 = vmatpush.msra.mxu0 %v2302
    %2819 = vmatpush.msra.mxu0 %v2298
    %2820 = vmatpush.msra.mxu0 %v2294
    %2821 = vmatpush.msra.mxu0 %v2290
    %2822 = vmatpush.msra.mxu0 %v2286
    %2823 = vmatpush.msra.mxu0 %v2282
    %2824 = vmatpush.msra.mxu0 %v2278
    %2825 = vmatpush.msra.mxu0 %v2274
    %2826 = vmatmul.f32.gmra.mxu0 %v2785
    %v2827 = vpop.f32.mrf.mxu0
    %v2828 = vadd.f32 0.0, %v2827
    %2829 = vdwg.mxu0
    %2830 = vmatpush.msra.mxu0 %v2335
    %2831 = vmatpush.msra.mxu0 %v2331
    %2832 = vmatpush.msra.mxu0 %v2327
    %2833 = vmatpush.msra.mxu0 %v2323
    %2834 = vmatpush.msra.mxu0 %v2319
    %2835 = vmatpush.msra.mxu0 %v2315
    %2836 = vmatpush.msra.mxu0 %v2311
    %2837 = vmatpush.msra.mxu0 %v2307
    %2838 = vmatpush.msra.mxu0 %v2303
    %2839 = vmatpush.msra.mxu0 %v2299
    %2840 = vmatpush.msra.mxu0 %v2295
    %2841 = vmatpush.msra.mxu0 %v2291
    %2842 = vmatpush.msra.mxu0 %v2287
    %2843 = vmatpush.msra.mxu0 %v2283
    %2844 = vmatpush.msra.mxu0 %v2279
    %2845 = vmatpush.msra.mxu0 %v2275
    %2846 = vmatmul.f32.gmra.mxu0 %v2785
    %v2847 = vpop.f32.mrf.mxu0
    %v2848 = vadd.f32 0.0, %v2847
    %2849 = vdwg.mxu0
    %2850 = vmatpush.msra.mxu0 %v2336
    %2851 = vmatpush.msra.mxu0 %v2332
    %2852 = vmatpush.msra.mxu0 %v2328
    %2853 = vmatpush.msra.mxu0 %v2324
    %2854 = vmatpush.msra.mxu0 %v2320
    %2855 = vmatpush.msra.mxu0 %v2316
    %2856 = vmatpush.msra.mxu0 %v2312
    %2857 = vmatpush.msra.mxu0 %v2308
    %2858 = vmatpush.msra.mxu0 %v2304
    %2859 = vmatpush.msra.mxu0 %v2300
    %2860 = vmatpush.msra.mxu0 %v2296
    %2861 = vmatpush.msra.mxu0 %v2292
    %2862 = vmatpush.msra.mxu0 %v2288
    %2863 = vmatpush.msra.mxu0 %v2284
    %2864 = vmatpush.msra.mxu0 %v2280
    %2865 = vmatpush.msra.mxu0 %v2276
    %2866 = vmatmul.f32.gmra.mxu0 %v2785
    %v2867 = vpop.f32.mrf.mxu0
    %v2868 = vadd.f32 0.0, %v2867
    %2869 = vdwg.mxu0
    %v2870 = vadd.f32 %v2786, %v2808
    %v2871 = vadd.f32 %v2787, %v2828
    %v2872 = vadd.f32 %v2788, %v2848
    %v2873 = vadd.f32 %v2789, %v2868
    %v2874 = vxor.u32 %v2870, 2147483648
    %v2875 = vmul.f32 %v2874, 1.442695
    %v2876 = vpow.pop %v2875
    %v2877 = vadd.f32 %v2876, 1.0
    %v2878 = vrcp.pop %v2877
    %v2879 = vmul.f32 %v2877, %v2878
    %v2880 = vsub.f32 1.0, %v2879
    %v2881 = vmul.f32 %v2878, %v2880
    %v2882 = vadd.f32 %v2878, %v2881
    %vm2883 = vweird.f32 %v2877
    %vm2884 = vweird.f32 %v2878
    %vm2885 = vmor %vm2883, %vm2884
    %v2886 = vsel %vm2885, %v2878, %v2882
    %v2887 = vand.u32 2147483647, %v2877
    %vm2888 = vcmp.eq.f32.partialorder %v2887, 8.507059e+37
    %v2889 = vand.u32 %v2877, 2147483648
    %v2890 = vor.u32 1.1754944e-38, %v2889
    %v2891 = vsel %vm2888, %v2890, %v2886
    %v2892 = vmul.f32 1.0, %v2891
    %v2893 = vxor.u32 %v2871, 2147483648
    %v2894 = vmul.f32 %v2893, 1.442695
    %v2895 = vpow.pop %v2894
    %v2896 = vadd.f32 %v2895, 1.0
    %v2897 = vrcp.pop %v2896
    %v2898 = vmul.f32 %v2896, %v2897
    %v2899 = vsub.f32 1.0, %v2898
    %v2900 = vmul.f32 %v2897, %v2899
    %v2901 = vadd.f32 %v2897, %v2900
    %vm2902 = vweird.f32 %v2896
    %vm2903 = vweird.f32 %v2897
    %vm2904 = vmor %vm2902, %vm2903
    %v2905 = vsel %vm2904, %v2897, %v2901
    %v2906 = vand.u32 2147483647, %v2896
    %vm2907 = vcmp.eq.f32.partialorder %v2906, 8.507059e+37
    %v2908 = vand.u32 %v2896, 2147483648
    %v2909 = vor.u32 1.1754944e-38, %v2908
    %v2910 = vsel %vm2907, %v2909, %v2905
    %v2911 = vmul.f32 1.0, %v2910
    %v2912 = vtanh.pop %v2872
    %v2913 = vxor.u32 %v2873, 2147483648
    %v2914 = vmul.f32 %v2913, 1.442695
    %v2915 = vpow.pop %v2914
    %v2916 = vadd.f32 %v2915, 1.0
    %v2917 = vrcp.pop %v2916
    %v2918 = vmul.f32 %v2916, %v2917
    %v2919 = vsub.f32 1.0, %v2918
    %v2920 = vmul.f32 %v2917, %v2919
    %v2921 = vadd.f32 %v2917, %v2920
    %vm2922 = vweird.f32 %v2916
    %vm2923 = vweird.f32 %v2917
    %vm2924 = vmor %vm2922, %vm2923
    %v2925 = vsel %vm2924, %v2917, %v2921
    %v2926 = vand.u32 2147483647, %v2916
    %vm2927 = vcmp.eq.f32.partialorder %v2926, 8.507059e+37
    %v2928 = vand.u32 %v2916, 2147483648
    %v2929 = vor.u32 1.1754944e-38, %v2928
    %v2930 = vsel %vm2927, %v2929, %v2925
    %v2931 = vmul.f32 1.0, %v2930
    %v2932 = vmul.f32 %v2911, %v2783
    %v2933 = vmul.f32 %v2892, %v2912
    %v2934 = vadd.f32 %v2932, %v2933
    %v2935 = vtanh.pop %v2934
    %v2936 = vmul.f32 %v2931, %v2935
    %v2937 = vld [vmem:[#allocation2 + $0xa0] sm:$0xff]
    %v2938 = vld [vmem:[#allocation2 + $0xa8] sm:$0xff]
    %v2939 = vld [vmem:[#allocation2 + $0xb0] sm:$0xff]
    %v2940 = vld [vmem:[#allocation2 + $0xb8] sm:$0xff]
    %2941 = vmatpush.msra.mxu0 %v2333
    %2942 = vmatpush.msra.mxu0 %v2329
    %2943 = vmatpush.msra.mxu0 %v2325
    %2944 = vmatpush.msra.mxu0 %v2321
    %2945 = vmatpush.msra.mxu0 %v2317
    %2946 = vmatpush.msra.mxu0 %v2313
    %2947 = vmatpush.msra.mxu0 %v2309
    %2948 = vmatpush.msra.mxu0 %v2305
    %2949 = vmatpush.msra.mxu0 %v2301
    %2950 = vmatpush.msra.mxu0 %v2297
    %2951 = vmatpush.msra.mxu0 %v2293
    %2952 = vmatpush.msra.mxu0 %v2289
    %2953 = vmatpush.msra.mxu0 %v2285
    %2954 = vmatpush.msra.mxu0 %v2281
    %2955 = vmatpush.msra.mxu0 %v2277
    %2956 = vmatpush.msra.mxu0 %v2273
    %2957 = vmatmul.f32.gmra.mxu0 %v2936
    %v2958 = vpop.f32.mrf.mxu0
    %v2959 = vadd.f32 0.0, %v2958
    %2960 = vdwg.mxu0
    %2961 = vmatpush.msra.mxu0 %v2334
    %2962 = vmatpush.msra.mxu0 %v2330
    %2963 = vmatpush.msra.mxu0 %v2326
    %2964 = vmatpush.msra.mxu0 %v2322
    %2965 = vmatpush.msra.mxu0 %v2318
    %2966 = vmatpush.msra.mxu0 %v2314
    %2967 = vmatpush.msra.mxu0 %v2310
    %2968 = vmatpush.msra.mxu0 %v2306
    %2969 = vmatpush.msra.mxu0 %v2302
    %2970 = vmatpush.msra.mxu0 %v2298
    %2971 = vmatpush.msra.mxu0 %v2294
    %2972 = vmatpush.msra.mxu0 %v2290
    %2973 = vmatpush.msra.mxu0 %v2286
    %2974 = vmatpush.msra.mxu0 %v2282
    %2975 = vmatpush.msra.mxu0 %v2278
    %2976 = vmatpush.msra.mxu0 %v2274
    %2977 = vmatmul.f32.gmra.mxu0 %v2936
    %v2978 = vpop.f32.mrf.mxu0
    %v2979 = vadd.f32 0.0, %v2978
    %2980 = vdwg.mxu0
    %2981 = vmatpush.msra.mxu0 %v2335
    %2982 = vmatpush.msra.mxu0 %v2331
    %2983 = vmatpush.msra.mxu0 %v2327
    %2984 = vmatpush.msra.mxu0 %v2323
    %2985 = vmatpush.msra.mxu0 %v2319
    %2986 = vmatpush.msra.mxu0 %v2315
    %2987 = vmatpush.msra.mxu0 %v2311
    %2988 = vmatpush.msra.mxu0 %v2307
    %2989 = vmatpush.msra.mxu0 %v2303
    %2990 = vmatpush.msra.mxu0 %v2299
    %2991 = vmatpush.msra.mxu0 %v2295
    %2992 = vmatpush.msra.mxu0 %v2291
    %2993 = vmatpush.msra.mxu0 %v2287
    %2994 = vmatpush.msra.mxu0 %v2283
    %2995 = vmatpush.msra.mxu0 %v2279
    %2996 = vmatpush.msra.mxu0 %v2275
    %2997 = vmatmul.f32.gmra.mxu0 %v2936
    %v2998 = vpop.f32.mrf.mxu0
    %v2999 = vadd.f32 0.0, %v2998
    %3000 = vdwg.mxu0
    %3001 = vmatpush.msra.mxu0 %v2336
    %3002 = vmatpush.msra.mxu0 %v2332
    %3003 = vmatpush.msra.mxu0 %v2328
    %3004 = vmatpush.msra.mxu0 %v2324
    %3005 = vmatpush.msra.mxu0 %v2320
    %3006 = vmatpush.msra.mxu0 %v2316
    %3007 = vmatpush.msra.mxu0 %v2312
    %3008 = vmatpush.msra.mxu0 %v2308
    %3009 = vmatpush.msra.mxu0 %v2304
    %3010 = vmatpush.msra.mxu0 %v2300
    %3011 = vmatpush.msra.mxu0 %v2296
    %3012 = vmatpush.msra.mxu0 %v2292
    %3013 = vmatpush.msra.mxu0 %v2288
    %3014 = vmatpush.msra.mxu0 %v2284
    %3015 = vmatpush.msra.mxu0 %v2280
    %3016 = vmatpush.msra.mxu0 %v2276
    %3017 = vmatmul.f32.gmra.mxu0 %v2936
    %v3018 = vpop.f32.mrf.mxu0
    %v3019 = vadd.f32 0.0, %v3018
    %3020 = vdwg.mxu0
    %v3021 = vadd.f32 %v2937, %v2959
    %v3022 = vadd.f32 %v2938, %v2979
    %v3023 = vadd.f32 %v2939, %v2999
    %v3024 = vadd.f32 %v2940, %v3019
    %v3025 = vxor.u32 %v3021, 2147483648
    %v3026 = vmul.f32 %v3025, 1.442695
    %v3027 = vpow.pop %v3026
    %v3028 = vadd.f32 %v3027, 1.0
    %v3029 = vrcp.pop %v3028
    %v3030 = vmul.f32 %v3028, %v3029
    %v3031 = vsub.f32 1.0, %v3030
    %v3032 = vmul.f32 %v3029, %v3031
    %v3033 = vadd.f32 %v3029, %v3032
    %vm3034 = vweird.f32 %v3028
    %vm3035 = vweird.f32 %v3029
    %vm3036 = vmor %vm3034, %vm3035
    %v3037 = vsel %vm3036, %v3029, %v3033
    %v3038 = vand.u32 2147483647, %v3028
    %vm3039 = vcmp.eq.f32.partialorder %v3038, 8.507059e+37
    %v3040 = vand.u32 %v3028, 2147483648
    %v3041 = vor.u32 1.1754944e-38, %v3040
    %v3042 = vsel %vm3039, %v3041, %v3037
    %v3043 = vmul.f32 1.0, %v3042
    %v3044 = vxor.u32 %v3022, 2147483648
    %v3045 = vmul.f32 %v3044, 1.442695
    %v3046 = vpow.pop %v3045
    %v3047 = vadd.f32 %v3046, 1.0
    %v3048 = vrcp.pop %v3047
    %v3049 = vmul.f32 %v3047, %v3048
    %v3050 = vsub.f32 1.0, %v3049
    %v3051 = vmul.f32 %v3048, %v3050
    %v3052 = vadd.f32 %v3048, %v3051
    %vm3053 = vweird.f32 %v3047
    %vm3054 = vweird.f32 %v3048
    %vm3055 = vmor %vm3053, %vm3054
    %v3056 = vsel %vm3055, %v3048, %v3052
    %v3057 = vand.u32 2147483647, %v3047
    %vm3058 = vcmp.eq.f32.partialorder %v3057, 8.507059e+37
    %v3059 = vand.u32 %v3047, 2147483648
    %v3060 = vor.u32 1.1754944e-38, %v3059
    %v3061 = vsel %vm3058, %v3060, %v3056
    %v3062 = vmul.f32 1.0, %v3061
    %v3063 = vtanh.pop %v3023
    %v3064 = vxor.u32 %v3024, 2147483648
    %v3065 = vmul.f32 %v3064, 1.442695
    %v3066 = vpow.pop %v3065
    %v3067 = vadd.f32 %v3066, 1.0
    %v3068 = vrcp.pop %v3067
    %v3069 = vmul.f32 %v3067, %v3068
    %v3070 = vsub.f32 1.0, %v3069
    %v3071 = vmul.f32 %v3068, %v3070
    %v3072 = vadd.f32 %v3068, %v3071
    %vm3073 = vweird.f32 %v3067
    %vm3074 = vweird.f32 %v3068
    %vm3075 = vmor %vm3073, %vm3074
    %v3076 = vsel %vm3075, %v3068, %v3072
    %v3077 = vand.u32 2147483647, %v3067
    %vm3078 = vcmp.eq.f32.partialorder %v3077, 8.507059e+37
    %v3079 = vand.u32 %v3067, 2147483648
    %v3080 = vor.u32 1.1754944e-38, %v3079
    %v3081 = vsel %vm3078, %v3080, %v3076
    %v3082 = vmul.f32 1.0, %v3081
    %v3083 = vmul.f32 %v3062, %v2934
    %v3084 = vmul.f32 %v3043, %v3063
    %v3085 = vadd.f32 %v3083, %v3084
    %v3086 = vtanh.pop %v3085
    %v3087 = vmul.f32 %v3082, %v3086
    %v3088 = vld [vmem:[#allocation2 + $0xc0] sm:$0xff]
    %v3089 = vld [vmem:[#allocation2 + $0xc8] sm:$0xff]
    %v3090 = vld [vmem:[#allocation2 + $0xd0] sm:$0xff]
    %v3091 = vld [vmem:[#allocation2 + $0xd8] sm:$0xff]
    %3092 = vmatpush.msra.mxu0 %v2333
    %3093 = vmatpush.msra.mxu0 %v2329
    %3094 = vmatpush.msra.mxu0 %v2325
    %3095 = vmatpush.msra.mxu0 %v2321
    %3096 = vmatpush.msra.mxu0 %v2317
    %3097 = vmatpush.msra.mxu0 %v2313
    %3098 = vmatpush.msra.mxu0 %v2309
    %3099 = vmatpush.msra.mxu0 %v2305
    %3100 = vmatpush.msra.mxu0 %v2301
    %3101 = vmatpush.msra.mxu0 %v2297
    %3102 = vmatpush.msra.mxu0 %v2293
    %3103 = vmatpush.msra.mxu0 %v2289
    %3104 = vmatpush.msra.mxu0 %v2285
    %3105 = vmatpush.msra.mxu0 %v2281
    %3106 = vmatpush.msra.mxu0 %v2277
    %3107 = vmatpush.msra.mxu0 %v2273
    %3108 = vmatmul.f32.gmra.mxu0 %v3087
    %v3109 = vpop.f32.mrf.mxu0
    %v3110 = vadd.f32 0.0, %v3109
    %3111 = vdwg.mxu0
    %3112 = vmatpush.msra.mxu0 %v2334
    %3113 = vmatpush.msra.mxu0 %v2330
    %3114 = vmatpush.msra.mxu0 %v2326
    %3115 = vmatpush.msra.mxu0 %v2322
    %3116 = vmatpush.msra.mxu0 %v2318
    %3117 = vmatpush.msra.mxu0 %v2314
    %3118 = vmatpush.msra.mxu0 %v2310
    %3119 = vmatpush.msra.mxu0 %v2306
    %3120 = vmatpush.msra.mxu0 %v2302
    %3121 = vmatpush.msra.mxu0 %v2298
    %3122 = vmatpush.msra.mxu0 %v2294
    %3123 = vmatpush.msra.mxu0 %v2290
    %3124 = vmatpush.msra.mxu0 %v2286
    %3125 = vmatpush.msra.mxu0 %v2282
    %3126 = vmatpush.msra.mxu0 %v2278
    %3127 = vmatpush.msra.mxu0 %v2274
    %3128 = vmatmul.f32.gmra.mxu0 %v3087
    %v3129 = vpop.f32.mrf.mxu0
    %v3130 = vadd.f32 0.0, %v3129
    %3131 = vdwg.mxu0
    %3132 = vmatpush.msra.mxu0 %v2335
    %3133 = vmatpush.msra.mxu0 %v2331
    %3134 = vmatpush.msra.mxu0 %v2327
    %3135 = vmatpush.msra.mxu0 %v2323
    %3136 = vmatpush.msra.mxu0 %v2319
    %3137 = vmatpush.msra.mxu0 %v2315
    %3138 = vmatpush.msra.mxu0 %v2311
    %3139 = vmatpush.msra.mxu0 %v2307
    %3140 = vmatpush.msra.mxu0 %v2303
    %3141 = vmatpush.msra.mxu0 %v2299
    %3142 = vmatpush.msra.mxu0 %v2295
    %3143 = vmatpush.msra.mxu0 %v2291
    %3144 = vmatpush.msra.mxu0 %v2287
    %3145 = vmatpush.msra.mxu0 %v2283
    %3146 = vmatpush.msra.mxu0 %v2279
    %3147 = vmatpush.msra.mxu0 %v2275
    %3148 = vmatmul.f32.gmra.mxu0 %v3087
    %v3149 = vpop.f32.mrf.mxu0
    %v3150 = vadd.f32 0.0, %v3149
    %3151 = vdwg.mxu0
    %3152 = vmatpush.msra.mxu0 %v2336
    %3153 = vmatpush.msra.mxu0 %v2332
    %3154 = vmatpush.msra.mxu0 %v2328
    %3155 = vmatpush.msra.mxu0 %v2324
    %3156 = vmatpush.msra.mxu0 %v2320
    %3157 = vmatpush.msra.mxu0 %v2316
    %3158 = vmatpush.msra.mxu0 %v2312
    %3159 = vmatpush.msra.mxu0 %v2308
    %3160 = vmatpush.msra.mxu0 %v2304
    %3161 = vmatpush.msra.mxu0 %v2300
    %3162 = vmatpush.msra.mxu0 %v2296
    %3163 = vmatpush.msra.mxu0 %v2292
    %3164 = vmatpush.msra.mxu0 %v2288
    %3165 = vmatpush.msra.mxu0 %v2284
    %3166 = vmatpush.msra.mxu0 %v2280
    %3167 = vmatpush.msra.mxu0 %v2276
    %3168 = vmatmul.f32.gmra.mxu0 %v3087
    %v3169 = vpop.f32.mrf.mxu0
    %v3170 = vadd.f32 0.0, %v3169
    %3171 = vdwg.mxu0
    %v3172 = vadd.f32 %v3088, %v3110
    %v3173 = vadd.f32 %v3089, %v3130
    %v3174 = vadd.f32 %v3090, %v3150
    %v3175 = vadd.f32 %v3091, %v3170
    %v3176 = vxor.u32 %v3172, 2147483648
    %v3177 = vmul.f32 %v3176, 1.442695
    %v3178 = vpow.pop %v3177
    %v3179 = vadd.f32 %v3178, 1.0
    %v3180 = vrcp.pop %v3179
    %v3181 = vmul.f32 %v3179, %v3180
    %v3182 = vsub.f32 1.0, %v3181
    %v3183 = vmul.f32 %v3180, %v3182
    %v3184 = vadd.f32 %v3180, %v3183
    %vm3185 = vweird.f32 %v3179
    %vm3186 = vweird.f32 %v3180
    %vm3187 = vmor %vm3185, %vm3186
    %v3188 = vsel %vm3187, %v3180, %v3184
    %v3189 = vand.u32 2147483647, %v3179
    %vm3190 = vcmp.eq.f32.partialorder %v3189, 8.507059e+37
    %v3191 = vand.u32 %v3179, 2147483648
    %v3192 = vor.u32 1.1754944e-38, %v3191
    %v3193 = vsel %vm3190, %v3192, %v3188
    %v3194 = vmul.f32 1.0, %v3193
    %v3195 = vxor.u32 %v3173, 2147483648
    %v3196 = vmul.f32 %v3195, 1.442695
    %v3197 = vpow.pop %v3196
    %v3198 = vadd.f32 %v3197, 1.0
    %v3199 = vrcp.pop %v3198
    %v3200 = vmul.f32 %v3198, %v3199
    %v3201 = vsub.f32 1.0, %v3200
    %v3202 = vmul.f32 %v3199, %v3201
    %v3203 = vadd.f32 %v3199, %v3202
    %vm3204 = vweird.f32 %v3198
    %vm3205 = vweird.f32 %v3199
    %vm3206 = vmor %vm3204, %vm3205
    %v3207 = vsel %vm3206, %v3199, %v3203
    %v3208 = vand.u32 2147483647, %v3198
    %vm3209 = vcmp.eq.f32.partialorder %v3208, 8.507059e+37
    %v3210 = vand.u32 %v3198, 2147483648
    %v3211 = vor.u32 1.1754944e-38, %v3210
    %v3212 = vsel %vm3209, %v3211, %v3207
    %v3213 = vmul.f32 1.0, %v3212
    %v3214 = vtanh.pop %v3174
    %v3215 = vxor.u32 %v3175, 2147483648
    %v3216 = vmul.f32 %v3215, 1.442695
    %v3217 = vpow.pop %v3216
    %v3218 = vadd.f32 %v3217, 1.0
    %v3219 = vrcp.pop %v3218
    %v3220 = vmul.f32 %v3218, %v3219
    %v3221 = vsub.f32 1.0, %v3220
    %v3222 = vmul.f32 %v3219, %v3221
    %v3223 = vadd.f32 %v3219, %v3222
    %vm3224 = vweird.f32 %v3218
    %vm3225 = vweird.f32 %v3219
    %vm3226 = vmor %vm3224, %vm3225
    %v3227 = vsel %vm3226, %v3219, %v3223
    %v3228 = vand.u32 2147483647, %v3218
    %vm3229 = vcmp.eq.f32.partialorder %v3228, 8.507059e+37
    %v3230 = vand.u32 %v3218, 2147483648
    %v3231 = vor.u32 1.1754944e-38, %v3230
    %v3232 = vsel %vm3229, %v3231, %v3227
    %v3233 = vmul.f32 1.0, %v3232
    %v3234 = vmul.f32 %v3213, %v3085
    %v3235 = vmul.f32 %v3194, %v3214
    %v3236 = vadd.f32 %v3234, %v3235
    %v3237 = vtanh.pop %v3236
    %v3238 = vmul.f32 %v3233, %v3237
    %v3239 = vld [vmem:[#allocation2 + $0xe0] sm:$0xff]
    %v3240 = vld [vmem:[#allocation2 + $0xe8] sm:$0xff]
    %v3241 = vld [vmem:[#allocation2 + $0xf0] sm:$0xff]
    %v3242 = vld [vmem:[#allocation2 + $0xf8] sm:$0xff]
    %3243 = vmatpush.msra.mxu0 %v2333
    %3244 = vmatpush.msra.mxu0 %v2329
    %3245 = vmatpush.msra.mxu0 %v2325
    %3246 = vmatpush.msra.mxu0 %v2321
    %3247 = vmatpush.msra.mxu0 %v2317
    %3248 = vmatpush.msra.mxu0 %v2313
    %3249 = vmatpush.msra.mxu0 %v2309
    %3250 = vmatpush.msra.mxu0 %v2305
    %3251 = vmatpush.msra.mxu0 %v2301
    %3252 = vmatpush.msra.mxu0 %v2297
    %3253 = vmatpush.msra.mxu0 %v2293
    %3254 = vmatpush.msra.mxu0 %v2289
    %3255 = vmatpush.msra.mxu0 %v2285
    %3256 = vmatpush.msra.mxu0 %v2281
    %3257 = vmatpush.msra.mxu0 %v2277
    %3258 = vmatpush.msra.mxu0 %v2273
    %3259 = vmatmul.f32.gmra.mxu0 %v3238
    %v3260 = vpop.f32.mrf.mxu0
    %v3261 = vadd.f32 0.0, %v3260
    %3262 = vdwg.mxu0
    %3263 = vmatpush.msra.mxu0 %v2334
    %3264 = vmatpush.msra.mxu0 %v2330
    %3265 = vmatpush.msra.mxu0 %v2326
    %3266 = vmatpush.msra.mxu0 %v2322
    %3267 = vmatpush.msra.mxu0 %v2318
    %3268 = vmatpush.msra.mxu0 %v2314
    %3269 = vmatpush.msra.mxu0 %v2310
    %3270 = vmatpush.msra.mxu0 %v2306
    %3271 = vmatpush.msra.mxu0 %v2302
    %3272 = vmatpush.msra.mxu0 %v2298
    %3273 = vmatpush.msra.mxu0 %v2294
    %3274 = vmatpush.msra.mxu0 %v2290
    %3275 = vmatpush.msra.mxu0 %v2286
    %3276 = vmatpush.msra.mxu0 %v2282
    %3277 = vmatpush.msra.mxu0 %v2278
    %3278 = vmatpush.msra.mxu0 %v2274
    %3279 = vmatmul.f32.gmra.mxu0 %v3238
    %v3280 = vpop.f32.mrf.mxu0
    %v3281 = vadd.f32 0.0, %v3280
    %3282 = vdwg.mxu0
    %3283 = vmatpush.msra.mxu0 %v2335
    %3284 = vmatpush.msra.mxu0 %v2331
    %3285 = vmatpush.msra.mxu0 %v2327
    %3286 = vmatpush.msra.mxu0 %v2323
    %3287 = vmatpush.msra.mxu0 %v2319
    %3288 = vmatpush.msra.mxu0 %v2315
    %3289 = vmatpush.msra.mxu0 %v2311
    %3290 = vmatpush.msra.mxu0 %v2307
    %3291 = vmatpush.msra.mxu0 %v2303
    %3292 = vmatpush.msra.mxu0 %v2299
    %3293 = vmatpush.msra.mxu0 %v2295
    %3294 = vmatpush.msra.mxu0 %v2291
    %3295 = vmatpush.msra.mxu0 %v2287
    %3296 = vmatpush.msra.mxu0 %v2283
    %3297 = vmatpush.msra.mxu0 %v2279
    %3298 = vmatpush.msra.mxu0 %v2275
    %3299 = vmatmul.f32.gmra.mxu0 %v3238
    %v3300 = vpop.f32.mrf.mxu0
    %v3301 = vadd.f32 0.0, %v3300
    %3302 = vdwg.mxu0
    %3303 = vmatpush.msra.mxu0 %v2336
    %3304 = vmatpush.msra.mxu0 %v2332
    %3305 = vmatpush.msra.mxu0 %v2328
    %3306 = vmatpush.msra.mxu0 %v2324
    %3307 = vmatpush.msra.mxu0 %v2320
    %3308 = vmatpush.msra.mxu0 %v2316
    %3309 = vmatpush.msra.mxu0 %v2312
    %3310 = vmatpush.msra.mxu0 %v2308
    %3311 = vmatpush.msra.mxu0 %v2304
    %3312 = vmatpush.msra.mxu0 %v2300
    %3313 = vmatpush.msra.mxu0 %v2296
    %3314 = vmatpush.msra.mxu0 %v2292
    %3315 = vmatpush.msra.mxu0 %v2288
    %3316 = vmatpush.msra.mxu0 %v2284
    %3317 = vmatpush.msra.mxu0 %v2280
    %3318 = vmatpush.msra.mxu0 %v2276
    %3319 = vmatmul.f32.gmra.mxu0 %v3238
    %v3320 = vpop.f32.mrf.mxu0
    %v3321 = vadd.f32 0.0, %v3320
    %3322 = vdwg.mxu0
    %v3323 = vadd.f32 %v3239, %v3261
    %v3324 = vadd.f32 %v3240, %v3281
    %v3325 = vadd.f32 %v3241, %v3301
    %v3326 = vadd.f32 %v3242, %v3321
    %v3327 = vxor.u32 %v3323, 2147483648
    %v3328 = vmul.f32 %v3327, 1.442695
    %v3329 = vpow.pop %v3328
    %v3330 = vadd.f32 %v3329, 1.0
    %v3331 = vrcp.pop %v3330
    %v3332 = vmul.f32 %v3330, %v3331
    %v3333 = vsub.f32 1.0, %v3332
    %v3334 = vmul.f32 %v3331, %v3333
    %v3335 = vadd.f32 %v3331, %v3334
    %vm3336 = vweird.f32 %v3330
    %vm3337 = vweird.f32 %v3331
    %vm3338 = vmor %vm3336, %vm3337
    %v3339 = vsel %vm3338, %v3331, %v3335
    %v3340 = vand.u32 2147483647, %v3330
    %vm3341 = vcmp.eq.f32.partialorder %v3340, 8.507059e+37
    %v3342 = vand.u32 %v3330, 2147483648
    %v3343 = vor.u32 1.1754944e-38, %v3342
    %v3344 = vsel %vm3341, %v3343, %v3339
    %v3345 = vmul.f32 1.0, %v3344
    %v3346 = vxor.u32 %v3324, 2147483648
    %v3347 = vmul.f32 %v3346, 1.442695
    %v3348 = vpow.pop %v3347
    %v3349 = vadd.f32 %v3348, 1.0
    %v3350 = vrcp.pop %v3349
    %v3351 = vmul.f32 %v3349, %v3350
    %v3352 = vsub.f32 1.0, %v3351
    %v3353 = vmul.f32 %v3350, %v3352
    %v3354 = vadd.f32 %v3350, %v3353
    %vm3355 = vweird.f32 %v3349
    %vm3356 = vweird.f32 %v3350
    %vm3357 = vmor %vm3355, %vm3356
    %v3358 = vsel %vm3357, %v3350, %v3354
    %v3359 = vand.u32 2147483647, %v3349
    %vm3360 = vcmp.eq.f32.partialorder %v3359, 8.507059e+37
    %v3361 = vand.u32 %v3349, 2147483648
    %v3362 = vor.u32 1.1754944e-38, %v3361
    %v3363 = vsel %vm3360, %v3362, %v3358
    %v3364 = vmul.f32 1.0, %v3363
    %v3365 = vtanh.pop %v3325
    %v3366 = vxor.u32 %v3326, 2147483648
    %v3367 = vmul.f32 %v3366, 1.442695
    %v3368 = vpow.pop %v3367
    %v3369 = vadd.f32 %v3368, 1.0
    %v3370 = vrcp.pop %v3369
    %v3371 = vmul.f32 %v3369, %v3370
    %v3372 = vsub.f32 1.0, %v3371
    %v3373 = vmul.f32 %v3370, %v3372
    %v3374 = vadd.f32 %v3370, %v3373
    %vm3375 = vweird.f32 %v3369
    %vm3376 = vweird.f32 %v3370
    %vm3377 = vmor %vm3375, %vm3376
    %v3378 = vsel %vm3377, %v3370, %v3374
    %v3379 = vand.u32 2147483647, %v3369
    %vm3380 = vcmp.eq.f32.partialorder %v3379, 8.507059e+37
    %v3381 = vand.u32 %v3369, 2147483648
    %v3382 = vor.u32 1.1754944e-38, %v3381
    %v3383 = vsel %vm3380, %v3382, %v3378
    %v3384 = vmul.f32 1.0, %v3383
    %v3385 = vmul.f32 %v3364, %v3236
    %v3386 = vmul.f32 %v3345, %v3365
    %v3387 = vadd.f32 %v3385, %v3386
    %v3388 = vtanh.pop %v3387
    %v3389 = vmul.f32 %v3384, %v3388
    %v3390 = vld [vmem:[#allocation11] sm:$0xff]
    %v3391 = vld [vmem:[#allocation11 + $0x8] sm:$0xff]
    %v3392 = vld [vmem:[#allocation11 + $0x10] sm:$0xff]
    %v3393 = vld [vmem:[#allocation11 + $0x18] sm:$0xff]
    %v3394 = vld [vmem:[#allocation11 + $0x20] sm:$0xff]
    %v3395 = vld [vmem:[#allocation11 + $0x28] sm:$0xff]
    %v3396 = vld [vmem:[#allocation11 + $0x30] sm:$0xff]
    %v3397 = vld [vmem:[#allocation11 + $0x38] sm:$0xff]
    %v3398 = vld [vmem:[#allocation11 + $0x40] sm:$0xff]
    %v3399 = vld [vmem:[#allocation11 + $0x48] sm:$0xff]
    %v3400 = vld [vmem:[#allocation11 + $0x50] sm:$0xff]
    %v3401 = vld [vmem:[#allocation11 + $0x58] sm:$0xff]
    %v3402 = vld [vmem:[#allocation11 + $0x60] sm:$0xff]
    %v3403 = vld [vmem:[#allocation11 + $0x68] sm:$0xff]
    %v3404 = vld [vmem:[#allocation11 + $0x70] sm:$0xff]
    %v3405 = vld [vmem:[#allocation11 + $0x78] sm:$0xff]
    %v3406 = vld [vmem:[%s8] sm:$0x1]
    %v3408 = vperm.slane %v3406, 0
    %3410 = vmatpush.msra.mxu0 %v3405
    %3411 = vmatpush.msra.mxu0 %v3404
    %3412 = vmatpush.msra.mxu0 %v3403
    %3413 = vmatpush.msra.mxu0 %v3402
    %3414 = vmatpush.msra.mxu0 %v3401
    %3415 = vmatpush.msra.mxu0 %v3400
    %3416 = vmatpush.msra.mxu0 %v3399
    %3417 = vmatpush.msra.mxu0 %v3398
    %3418 = vmatpush.msra.mxu0 %v3397
    %3419 = vmatpush.msra.mxu0 %v3396
    %3420 = vmatpush.msra.mxu0 %v3395
    %3421 = vmatpush.msra.mxu0 %v3394
    %3422 = vmatpush.msra.mxu0 %v3393
    %3423 = vmatpush.msra.mxu0 %v3392
    %3424 = vmatpush.msra.mxu0 %v3391
    %3425 = vmatpush.msra.mxu0 %v3390
    %3426 = vmatmul.f32.gmra.mxu0 %v3389
    %v3427 = vpop.f32.mrf.mxu0
    %v3428 = vadd.f32 %v3408, %v3427
    %3429 = vdwg.mxu0
    %3430 = vst [vmem:[%s9] sm:$0xff] %v3428
    // Predicated region
    $region58: #{deep_lstm_pallas.1} parent=1 // pred_check
      _
    $region59: #{deep_lstm_pallas.1} parent=1 // pred_check_branch
      %3432 = sbr.rel (0) target = $region61
    $region60: #{deep_lstm_pallas.1} parent=1 // pred_region
      _
    $region61: #{deep_lstm_pallas.1} parent=1 // pred_fallthru
      _
    // Predicated region
    $region62: #{deep_lstm_pallas.1} parent=1 // pred_check
      _
    $region63: #{deep_lstm_pallas.1} parent=1 // pred_check_branch
      %3434 = sbr.rel (0) target = $region65
    $region64: #{deep_lstm_pallas.1} parent=1 // pred_region
      _
    $region65: #{deep_lstm_pallas.1} parent=1 // pred_fallthru
      _
    %3435 = vsyncpa [#allocation5], 1
    %3436 = vsyncpa [#allocation7], 1
    %3437 = vsyncpa [#allocation10], 1

</llo_original>
